<compile_context>
chip_gen: v5e
topology: v5e:2x2
jax: 0.10.0
libtpu: 0.0.40
codegen_flags: <defaults>
</compile_context>

<pallas_src>
import functools

import jax
import jax.numpy as jnp
import numpy as np
from jax.experimental import pallas as pl
from jax.experimental.pallas import tpu as pltpu


def _round_up(x, m):
    return ((x + m - 1) // m) * m


# ---------------------------------------------------------------------------
# Fused level-synchronous ChildSum Tree-LSTM kernel.
#   grid = (levels, k-blocks over the child axis)
#   meta_ref (SMEM, scalar prefetch): per level [row offset, node count, last useful kb]
# ---------------------------------------------------------------------------
def tree_lstm_kernel(meta_ref, adj_ref, wemb_ref, c0_ref,
                     w_iou_ref, u_iou_ref, u_f_ref, b_f_ref, b_iou_ref,
                     h_out_ref, c_out_ref, hfc_scr, z_scr, *, tk):
    lvl = pl.program_id(0)
    kb = pl.program_id(1)
    nkb = pl.num_programs(1)
    lw = adj_ref.shape[0]
    hp = c_out_ref.shape[-1]

    off = meta_ref[lvl, 0]          # first compact row of this level (multiple of 16)
    cnt = meta_ref[lvl, 1]          # real node count of this level

    # Zero-mask for this level's pad rows so the compact slab stays clean.
    row_ok = (jax.lax.broadcasted_iota(jnp.int32, (lw, 1), 0)
              < cnt).astype(jnp.float32)

    def gates_and_store(iou, c_pre):
        i_g = jax.nn.sigmoid(iou[:, :hp])
        o_g = jax.nn.sigmoid(iou[:, hp:2 * hp])
        u_g = jnp.tanh(iou[:, 2 * hp:])
        c_new = (i_g * u_g + c_pre) * row_ok
        h_new = o_g * jnp.tanh(c_new)
        # Per-child forget contribution f*c, computed once when the node is finalised.
        f_new = jax.nn.sigmoid(
            jnp.dot(h_new, u_f_ref[...], preferred_element_type=jnp.float32)
            + b_f_ref[...])
        start = pl.multiple_of(off, 16)
        hfc_scr[pl.ds(start, lw), :] = jnp.concatenate(
            [h_new, f_new * c_new], axis=-1).astype(jnp.bfloat16)
        h_out_ref[pl.ds(start, lw), :] = h_new
        c_out_ref[pl.ds(start, lw), :] = c_new

    # ---- level 0: fused leaf initialisation (runs once, at grid step (0, 0)) ----
    @pl.when(jnp.logical_and(lvl == 0, kb == 0))
    def _():
        hfc_scr[...] = jnp.zeros_like(hfc_scr)
        h_out_ref[...] = jnp.zeros_like(h_out_ref)
        c_out_ref[...] = jnp.zeros_like(c_out_ref)
        # wemb already carries the node mask (folded in the wrapper), so this equals
        # W_iou(wemb) * mask + b_iou of the reference module.
        iou = jnp.dot(wemb_ref[...], w_iou_ref[...],
                      preferred_element_type=jnp.float32) + b_iou_ref[...]
        gates_and_store(iou, c0_ref[...])

    # ---- level > 0: block-sparse ChildSum reduce + gates ------------------------
    @pl.when(lvl > 0)
    def _():
        @pl.when(kb == 0)
        def _():
            z_scr[...] = jnp.zeros_like(z_scr)

        # Children of this level live in compact rows < off; skip k-blocks beyond.
        @pl.when(kb * tk < off)
        def _():
            cstart = pl.multiple_of(kb * tk, tk)
            z_scr[...] += jnp.dot(adj_ref[...],
                                  hfc_scr[pl.ds(cstart, tk), :],
                                  preferred_element_type=jnp.float32)

        @pl.when(kb == nkb - 1)
        def _():
            z = z_scr[...]                       # (LW, 2H) = [sum h | sum f*c]
            iou = jnp.dot(z[:, :hp], u_iou_ref[...],
                          preferred_element_type=jnp.float32) + b_iou_ref[...]
            gates_and_store(iou, z[:, hp:])


def tree_lstm_forward(meta, adj, wemb_leaf, c0_leaf,
                      w_iou_t, u_iou_t, u_f_t, b_f, b_iou, *, tk=128):
    num_levels = int(meta.shape[0])
    lw, e = wemb_leaf.shape
    hp = c0_leaf.shape[1]
    nc_pad = adj.shape[1]
    assert nc_pad % tk == 0 and lw % 16 == 0 and adj.shape[0] == num_levels * lw
    kb_total = nc_pad // tk

    def rep(shape):
        return pl.BlockSpec(shape, lambda l, kb, meta_ref: (0, 0))

    # VMEM residency: bf16 state + resident f32 outputs + adjacency double buffer
    # + z accumulator + resident weights / leaf slabs.  Cap well below the v7x 64 MiB
    # physical VMEM (v5e/v6e have 128 MiB).
    resident = (nc_pad * 2 * hp * 2 + 2 * nc_pad * hp * 4
                + 2 * lw * tk * 2 + lw * 2 * hp * 4
                + (lw * e + lw * hp + e * 3 * hp + hp * 3 * hp
                   + hp * hp + hp + 3 * hp) * 4)
    vmem_limit = int(min(48 * 2 ** 20, max(16 * 2 ** 20, 2 * resident)))

    kernel = functools.partial(tree_lstm_kernel, tk=tk)
    return pl.pallas_call(
        kernel,
        out_shape=(jax.ShapeDtypeStruct((nc_pad, hp), jnp.float32),   # h (compact rows)
                   jax.ShapeDtypeStruct((nc_pad, hp), jnp.float32)),  # c (compact rows)
        grid_spec=pltpu.PrefetchScalarGridSpec(
            num_scalar_prefetch=1,
            grid=(num_levels, kb_total),
            in_specs=[
                # Adjacency (LW, TK) lane blocks; k-blocks that cannot hold children
                # are clamped to the last useful block -> same index -> no re-DMA.
                pl.BlockSpec(
                    (lw, tk),
                    lambda l, kb, meta_ref: (l, jnp.minimum(kb, meta_ref[l, 2]))),
                rep((lw, e)),            # masked leaf wemb
                rep((lw, hp)),           # leaf c0 (enc_hidden[1])
                rep((e, 3 * hp)),        # W_iou^T
                rep((hp, 3 * hp)),       # U_iou^T
                rep((hp, hp)),           # U_f^T
                rep((1, hp)),            # U_f bias
                rep((1, 3 * hp)),        # b_iou
            ],
            out_specs=(rep((nc_pad, hp)), rep((nc_pad, hp))),
            scratch_shapes=[pltpu.VMEM((nc_pad, 2 * hp), jnp.bfloat16),  # [h | f*c]
                            pltpu.VMEM((lw, 2 * hp), jnp.float32)],      # k-block acc
        ),
        # Both axes carry state (level recurrence + k-block reduction) -> arbitrary.
        compiler_params=pltpu.CompilerParams(
            dimension_semantics=("arbitrary", "arbitrary"),
            vmem_limit_bytes=vmem_limit),
    )(meta, adj, wemb_leaf, c0_leaf, w_iou_t, u_iou_t, u_f_t, b_f, b_iou)


# ---------------------------------------------------------------------------
# Pure-numpy reference of the exact module semantics (node-by-node topo order)
# ---------------------------------------------------------------------------
def reference_forward(wordid, mask, children, levels, emb_table, W_iou, U_iou,
                      U_f_w, U_f_b, b_iou, c0):
    def sig(x):
        return 1.0 / (1.0 + np.exp(-x))

    wemb = emb_table[wordid * mask[:, None]].sum(1)
    iou_leaf = (wemb @ W_iou.T) * mask[:, None].astype(np.float32)
    hd = U_f_w.shape[0]
    n_nodes = wordid.shape[0]
    h = np.zeros((n_nodes, hd), np.float32)
    c = np.zeros((n_nodes, hd), np.float32)
    for n in np.argsort(levels, kind="stable"):
        ch = children.get(int(n), [])
        if len(ch) > 0:
            h_tild = h[ch].sum(0)
            f = sig(h[ch] @ U_f_w.T + U_f_b)
            c_pre = (f * c[ch]).sum(0)
            iou = h_tild @ U_iou.T
        else:
            iou = iou_leaf[n]
            c_pre = c0[n]
        iou = iou + b_iou[0]
        i, o, u = sig(iou[:hd]), sig(iou[hd:2 * hd]), np.tanh(iou[2 * hd:])
        c[n] = i * u + c_pre
        h[n] = o * np.tanh(c[n])
    return h, c


def build_binary_tree(num_leaves):
    """Bottom-up binary tree with local ids; children always precede parents."""
    children = {}
    frontier = list(range(num_leaves))
    nid = num_leaves
    while len(frontier) > 1:
        nxt = []
        for a, b in zip(frontier[0::2], frontier[1::2]):
            children[nid] = [a, b]
            nxt.append(nid)
            nid += 1
        if len(frontier) % 2 == 1:
            nxt.append(frontier[-1])
        frontier = nxt
    return children, nid, frontier[0]


# ---------------------------------------------------------------------------
if __name__ == "__main__":
    key = jax.random.PRNGKey(0)
    token_num, embed_size, hidden_size, S = 50, 16, 32, 4
    TK = 128
    H_PAD = _round_up(2 * hidden_size, 128) // 2     # 2*H_pad is lane-dense (=64 here)

    # ----- deterministic two-tree batch (children before parents) -----------------
    tree_defs = [build_binary_tree(64), build_binary_tree(33)]
    list_num_node = [t[1] for t in tree_defs]
    list_root_index = [t[2] for t in tree_defs]
    batch_size = len(list_num_node)
    N = sum(list_num_node)

    # TODO(synk): DGL graph bookkeeping (level sort, adjacency build, root gather,
    # per-tree tree_output padding) stays as host/JAX glue — data-dependent tree
    # structure, no clean Pallas equivalent.
    children = {}
    offset = 0
    for ch, n_nodes, _root in tree_defs:
        for p, cs in ch.items():
            children[p + offset] = [c + offset for c in cs]
        offset += n_nodes

    levels_np = np.zeros((N,), np.int32)
    for n in range(N):
        cs = children.get(n, [])
        if cs:
            levels_np[n] = 1 + max(levels_np[c] for c in cs)
    num_levels = int(levels_np.max()) + 1
    mask_np = np.array([0 if n in children else 1 for n in range(N)], np.int32)

    # ----- compact, 16-aligned level-sorted row layout -----------------------------
    order = np.argsort(levels_np, kind="stable")
    counts = np.bincount(levels_np, minlength=num_levels)
    LW = _round_up(int(counts.max()), 16)                    # level-slab height
    cnt_pad = np.array([_round_up(int(c), 16) for c in counts], np.int64)
    off_np = np.zeros((num_levels,), np.int64)
    for l in range(1, num_levels):
        off_np[l] = off_np[l - 1] + cnt_pad[l - 1]
    NC_rows = int(off_np[-1]) + LW
    NC_pad = _round_up(NC_rows, TK)                          # child axis, TK-aligned

    cpos = np.zeros((N,), np.int64)                          # node -> compact row
    arow = np.zeros((N,), np.int64)                          # node -> adjacency row
    idx = 0
    for l in range(num_levels):
        for j in range(int(counts[l])):
            n = int(order[idx]); idx += 1
            cpos[n] = int(off_np[l]) + j
            arow[n] = l * LW + j

    adj_np = np.zeros((num_levels * LW, NC_pad), np.float32)
    for p, cs in children.items():
        lp = int(levels_np[p])
        for c in cs:
            assert cpos[c] < off_np[lp], "child rows must precede the parent's level"
            adj_np[arow[p], cpos[c]] = 1.0

    # per-level scalar table: [row offset, node count, last useful k-block]
    meta_np = np.zeros((num_levels, 3), np.int32)
    meta_np[:, 0] = off_np
    meta_np[:, 1] = counts
    meta_np[:, 2] = np.maximum((off_np + TK - 1) // TK - 1, 0)

    # ----- parameters (shapes from ChildSumTreeLSTMCell.__init__) ------------------
    ks = jax.random.split(key, 8)
    emb_table = 0.1 * jax.random.normal(ks[0], (token_num, embed_size), jnp.float32)
    W_iou = 0.1 * jax.random.normal(ks[1], (3 * hidden_size, embed_size), jnp.float32)
    U_iou = 0.1 * jax.random.normal(ks[2], (3 * hidden_size, hidden_size), jnp.float32)
    U_f_w = 0.1 * jax.random.normal(ks[3], (hidden_size, hidden_size), jnp.float32)
    U_f_b = 0.1 * jax.random.normal(ks[4], (hidden_size,), jnp.float32)
    # b_iou is initialised to zeros in the module; use a small nonzero value here to
    # exercise the bias path.
    b_iou = 0.1 * jax.random.normal(ks[5], (1, 3 * hidden_size), jnp.float32)
    wordid = jax.random.randint(ks[6], (N, S), 0, token_num, dtype=jnp.int32)
    c0 = 0.05 * jax.random.normal(ks[7], (N, hidden_size), jnp.float32)  # enc_hidden[1]
    # enc_hidden[0] (h0) is never read before apply_node_func overwrites it.

    # ----- zero-pad hidden to H_PAD (exactly transparent through the gates) --------
    hp = H_PAD
    W_iou_p = np.zeros((3, hp, embed_size), np.float32)
    W_iou_p[:, :hidden_size, :] = np.asarray(W_iou).reshape(3, hidden_size, embed_size)
    W_iou_p = W_iou_p.reshape(3 * hp, embed_size)
    U_iou_p = np.zeros((3, hp, hp), np.float32)
    U_iou_p[:, :hidden_size, :hidden_size] = np.asarray(U_iou).reshape(
        3, hidden_size, hidden_size)
    U_iou_p = U_iou_p.reshape(3 * hp, hp)
    U_f_p = np.zeros((hp, hp), np.float32)
    U_f_p[:hidden_size, :hidden_size] = np.asarray(U_f_w)
    U_f_b_p = np.zeros((hp,), np.float32)
    U_f_b_p[:hidden_size] = np.asarray(U_f_b)
    b_iou_p = np.zeros((3, hp), np.float32)
    b_iou_p[:, :hidden_size] = np.asarray(b_iou).reshape(3, hidden_size)
    b_iou_p = b_iou_p.reshape(1, 3 * hp)
    c0_p = np.zeros((N, hp), np.float32)
    c0_p[:, :hidden_size] = np.asarray(c0)

    # ----- glue: embedding gather + subtoken sum, leaf-mask folded into the operand -
    mask = jnp.asarray(mask_np)
    wemb_all = jnp.sum(emb_table[wordid * mask[:, None]], axis=1)           # (N, E)
    wemb_masked = wemb_all * mask[:, None].astype(jnp.float32)

    n_leaf = int(counts[0])
    leaf_ids = order[:n_leaf]
    wemb_leaf = np.zeros((LW, embed_size), np.float32)
    wemb_leaf[:n_leaf] = np.asarray(wemb_masked)[leaf_ids]
    c0_leaf = np.zeros((LW, hp), np.float32)
    c0_leaf[:n_leaf] = c0_p[leaf_ids]

    # ----- single fused Pallas call -------------------------------------------------
    h_nc, c_nc = tree_lstm_forward(
        jnp.asarray(meta_np),
        jnp.asarray(adj_np, dtype=jnp.bfloat16),          # 0/1, exact in bf16
        jnp.asarray(wemb_leaf), jnp.asarray(c0_leaf),
        jnp.asarray(W_iou_p.T), jnp.asarray(U_iou_p.T),
        jnp.asarray(U_f_p.T), jnp.asarray(U_f_b_p[None, :]),
        jnp.asarray(b_iou_p), tk=TK)

    h_all = h_nc[jnp.asarray(cpos)][:, :hidden_size]       # back to original order
    c_all = c_nc[jnp.asarray(cpos)][:, :hidden_size]

    # ----- root gathering + padded per-tree output (host glue) ----------------------
    root_idx = []
    add_up = 0
    for i in range(batch_size):
        if i > 0:
            add_up += list_num_node[i - 1]
        root_idx.append(list_root_index[i] + add_up)
    root_node_h = h_all[jnp.asarray(root_idx)].reshape(batch_size, -1)
    root_node_c = c_all[jnp.asarray(root_idx)].reshape(batch_size, -1)

    tree_output = jnp.zeros((batch_size, max(list_num_node), hidden_size), jnp.float32)
    add_up = 0
    for i in range(batch_size):
        nn_ = list_num_node[i]
        tree_output = tree_output.at[i, :nn_, :].set(h_all[add_up:add_up + nn_])
        add_up += nn_

    jax.block_until_ready((tree_output, root_node_h, root_node_c))

    # ----- reference check (tolerance reflects the documented bf16 child-sum path) ---
    h_ref, c_ref = reference_forward(
        np.asarray(wordid), mask_np, children, levels_np,
        np.asarray(emb_table), np.asarray(W_iou), np.asarray(U_iou),
        np.asarray(U_f_w), np.asarray(U_f_b), np.asarray(b_iou), np.asarray(c0))

    np.testing.assert_allclose(np.asarray(h_all), h_ref, rtol=2e-2, atol=1e-2)
    np.testing.assert_allclose(np.asarray(c_all), c_ref, rtol=2e-2, atol=1e-2)

    print("KERNEL_OK")
</pallas_src>

<mosaic_0001>
module attributes {stable_mosaic.version = 11 : i64} {
  func.func @tree_lstm_kernel(%arg0: i32, %arg1: i32, %arg2: memref<7x3xi32, #tpu.memory_space<smem>>, %arg3: memref<112x128xbf16, #tpu.memory_space<vmem>>, %arg4: memref<112x16xf32, #tpu.memory_space<vmem>>, %arg5: memref<112x64xf32, #tpu.memory_space<vmem>>, %arg6: memref<16x192xf32, #tpu.memory_space<vmem>>, %arg7: memref<64x192xf32, #tpu.memory_space<vmem>>, %arg8: memref<64x64xf32, #tpu.memory_space<vmem>>, %arg9: memref<1x64xf32, #tpu.memory_space<vmem>>, %arg10: memref<1x192xf32, #tpu.memory_space<vmem>>, %arg11: memref<384x64xf32, #tpu.memory_space<vmem>>, %arg12: memref<384x64xf32, #tpu.memory_space<vmem>>, %arg13: memref<384x128xbf16, #tpu.memory_space<vmem>>, %arg14: memref<112x128xf32, #tpu.memory_space<vmem>>) attributes {dimension_semantics = [#tpu.dimension_semantics<arbitrary>, #tpu.dimension_semantics<arbitrary>], iteration_bounds = array<i64: 7, 3>, scalar_prefetch = 1 : i64, scratch_operands = 2 : i64, tpu.core_type = #tpu.core_type<tc>, window_params = [{transform_indices = @transform_0, window_bounds = array<i64: 112, 128>}, {pipeline_mode = #tpu.pipeline_mode<synchronous>, transform_indices = @transform_1, window_bounds = array<i64: 112, 16>}, {pipeline_mode = #tpu.pipeline_mode<synchronous>, transform_indices = @transform_2, window_bounds = array<i64: 112, 64>}, {pipeline_mode = #tpu.pipeline_mode<synchronous>, transform_indices = @transform_3, window_bounds = array<i64: 16, 192>}, {pipeline_mode = #tpu.pipeline_mode<synchronous>, transform_indices = @transform_4, window_bounds = array<i64: 64, 192>}, {pipeline_mode = #tpu.pipeline_mode<synchronous>, transform_indices = @transform_5, window_bounds = array<i64: 64, 64>}, {pipeline_mode = #tpu.pipeline_mode<synchronous>, transform_indices = @transform_6, window_bounds = array<i64: 1, 64>}, {pipeline_mode = #tpu.pipeline_mode<synchronous>, transform_indices = @transform_7, window_bounds = array<i64: 1, 192>}, {pipeline_mode = #tpu.pipeline_mode<synchronous>, transform_indices = @transform_8, window_bounds = array<i64: 384, 64>}, {pipeline_mode = #tpu.pipeline_mode<synchronous>, transform_indices = @transform_9, window_bounds = array<i64: 384, 64>}]} {
    %0 = arith.index_cast %arg0 : i32 to index
    %c0 = arith.constant 0 : index
    %1 = memref.load %arg2[%0, %c0] : memref<7x3xi32, #tpu.memory_space<smem>>
    %2 = arith.index_cast %arg0 : i32 to index
    %c1 = arith.constant 1 : index
    %3 = memref.load %arg2[%2, %c1] : memref<7x3xi32, #tpu.memory_space<smem>>
    %4 = tpu.iota {dimensions = array<i32: 0>} : vector<112x1xi32>
    %5 = vector.broadcast %3 : i32 to vector<112x1xi32>
    %6 = arith.cmpi slt, %4, %5 : vector<112x1xi32>
    %7 = arith.extui %6 : vector<112x1xi1> to vector<112x1xi32>
    %8 = arith.sitofp %7 : vector<112x1xi32> to vector<112x1xf32>
    %c0_i32 = arith.constant 0 : i32
    %9 = arith.cmpi eq, %arg0, %c0_i32 : i32
    %c0_i32_0 = arith.constant 0 : i32
    %10 = arith.cmpi eq, %arg1, %c0_i32_0 : i32
    %11 = arith.andi %9, %10 : i1
    %12 = arith.extui %11 : i1 to i32
    %c0_i32_1 = arith.constant 0 : i32
    %13 = arith.cmpi ne, %12, %c0_i32_1 : i32
    scf.if %13 {
      %cst = arith.constant 0.000000e+00 : bf16
      %17 = vector.broadcast %cst : bf16 to vector<384x128xbf16>
      %c0_4 = arith.constant 0 : index
      %c0_5 = arith.constant 0 : index
      %18 = vector.load %arg13[%c0_4, %c0_5] : memref<384x128xbf16, #tpu.memory_space<vmem>>, vector<384x128xbf16>
      tpu.vector_store %arg13[%c0_4, %c0_5], %17 {strides = array<i32>} : memref<384x128xbf16, #tpu.memory_space<vmem>>, vector<384x128xbf16>,
      %cst_6 = arith.constant 0.000000e+00 : f32
      %19 = vector.broadcast %cst_6 : f32 to vector<384x64xf32>
      %c0_7 = arith.constant 0 : index
      %c0_8 = arith.constant 0 : index
      %20 = vector.load %arg11[%c0_7, %c0_8] : memref<384x64xf32, #tpu.memory_space<vmem>>, vector<384x64xf32>
      tpu.vector_store %arg11[%c0_7, %c0_8], %19 {strides = array<i32>} : memref<384x64xf32, #tpu.memory_space<vmem>>, vector<384x64xf32>,
      %cst_9 = arith.constant 0.000000e+00 : f32
      %21 = vector.broadcast %cst_9 : f32 to vector<384x64xf32>
      %c0_10 = arith.constant 0 : index
      %c0_11 = arith.constant 0 : index
      %22 = vector.load %arg12[%c0_10, %c0_11] : memref<384x64xf32, #tpu.memory_space<vmem>>, vector<384x64xf32>
      tpu.vector_store %arg12[%c0_10, %c0_11], %21 {strides = array<i32>} : memref<384x64xf32, #tpu.memory_space<vmem>>, vector<384x64xf32>,
      %c0_12 = arith.constant 0 : index
      %c0_13 = arith.constant 0 : index
      %23 = vector.load %arg4[%c0_12, %c0_13] : memref<112x16xf32, #tpu.memory_space<vmem>>, vector<112x16xf32>
      %c0_14 = arith.constant 0 : index
      %c0_15 = arith.constant 0 : index
      %24 = vector.load %arg6[%c0_14, %c0_15] : memref<16x192xf32, #tpu.memory_space<vmem>>, vector<16x192xf32>
      %cst_16 = arith.constant dense<0.000000e+00> : vector<112x192xf32>
      %25 = tpu.matmul %23, %24, %cst_16 {dimension_numbers = #tpu.dot_dimension_numbers<[1], [0], [0], [1], [0, 0, 1, 1], [], []>} : vector<112x16xf32>, vector<16x192xf32>, vector<112x192xf32> -> vector<112x192xf32>
      %c0_17 = arith.constant 0 : index
      %c0_18 = arith.constant 0 : index
      %26 = vector.load %arg10[%c0_17, %c0_18] : memref<1x192xf32, #tpu.memory_space<vmem>>, vector<1x192xf32>
      %27 = vector.broadcast %26 : vector<1x192xf32> to vector<112x192xf32>
      %28 = arith.addf %25, %27 : vector<112x192xf32>
      %c0_19 = arith.constant 0 : index
      %c0_20 = arith.constant 0 : index
      %29 = vector.load %arg5[%c0_19, %c0_20] : memref<112x64xf32, #tpu.memory_space<vmem>>, vector<112x64xf32>
      %30 = vector.extract_strided_slice %28 {offsets = [0, 0], sizes = [112, 64], strides = [1, 1]} : vector<112x192xf32> to vector<112x64xf32>
      %31 = arith.negf %30 : vector<112x64xf32>
      %32 = math.exp %31 : vector<112x64xf32>
      %cst_21 = arith.constant 1.000000e+00 : f32
      %33 = vector.broadcast %cst_21 : f32 to vector<112x64xf32>
      %34 = arith.addf %33, %32 : vector<112x64xf32>
      %35 = arith.divf %33, %34 : vector<112x64xf32>
      %36 = vector.extract_strided_slice %28 {offsets = [0, 64], sizes = [112, 64], strides = [1, 1]} : vector<112x192xf32> to vector<112x64xf32>
      %37 = arith.negf %36 : vector<112x64xf32>
      %38 = math.exp %37 : vector<112x64xf32>
      %cst_22 = arith.constant 1.000000e+00 : f32
      %39 = vector.broadcast %cst_22 : f32 to vector<112x64xf32>
      %40 = arith.addf %39, %38 : vector<112x64xf32>
      %41 = arith.divf %39, %40 : vector<112x64xf32>
      %42 = vector.extract_strided_slice %28 {offsets = [0, 128], sizes = [112, 64], strides = [1, 1]} : vector<112x192xf32> to vector<112x64xf32>
      %43 = math.tanh %42 : vector<112x64xf32>
      %44 = arith.mulf %35, %43 : vector<112x64xf32>
      %45 = arith.addf %44, %29 : vector<112x64xf32>
      %46 = vector.broadcast %8 : vector<112x1xf32> to vector<112x64xf32>
      %47 = arith.mulf %45, %46 : vector<112x64xf32>
      %48 = math.tanh %47 : vector<112x64xf32>
      %49 = arith.mulf %41, %48 : vector<112x64xf32>
      %c0_23 = arith.constant 0 : index
      %c0_24 = arith.constant 0 : index
      %50 = vector.load %arg8[%c0_23, %c0_24] : memref<64x64xf32, #tpu.memory_space<vmem>>, vector<64x64xf32>
      %cst_25 = arith.constant dense<0.000000e+00> : vector<112x64xf32>
      %51 = tpu.matmul %49, %50, %cst_25 {dimension_numbers = #tpu.dot_dimension_numbers<[1], [0], [0], [1], [0, 0, 1, 1], [], []>} : vector<112x64xf32>, vector<64x64xf32>, vector<112x64xf32> -> vector<112x64xf32>
      %c0_26 = arith.constant 0 : index
      %c0_27 = arith.constant 0 : index
      %52 = vector.load %arg9[%c0_26, %c0_27] : memref<1x64xf32, #tpu.memory_space<vmem>>, vector<1x64xf32>
      %53 = vector.broadcast %52 : vector<1x64xf32> to vector<112x64xf32>
      %54 = arith.addf %51, %53 : vector<112x64xf32>
      %55 = arith.negf %54 : vector<112x64xf32>
      %56 = math.exp %55 : vector<112x64xf32>
      %cst_28 = arith.constant 1.000000e+00 : f32
      %57 = vector.broadcast %cst_28 : f32 to vector<112x64xf32>
      %58 = arith.addf %57, %56 : vector<112x64xf32>
      %59 = arith.divf %57, %58 : vector<112x64xf32>
      %60 = tpu.assume_multiple %1, 16 : i32
      %61 = arith.mulf %59, %47 : vector<112x64xf32>
      %62 = tpu.concatenate %49, %61 in 1 : vector<112x64xf32>, vector<112x64xf32> -> vector<112x128xf32>
      %63 = arith.truncf %62 : vector<112x128xf32> to vector<112x128xbf16>
      %64 = arith.index_cast %60 : i32 to index
      %c0_29 = arith.constant 0 : index
      %65 = vector.load %arg13[%64, %c0_29] : memref<384x128xbf16, #tpu.memory_space<vmem>>, vector<112x128xbf16>
      tpu.vector_store %arg13[%64, %c0_29], %63 {strides = array<i32>} : memref<384x128xbf16, #tpu.memory_space<vmem>>, vector<112x128xbf16>,
      %66 = arith.index_cast %60 : i32 to index
      %c0_30 = arith.constant 0 : index
      %67 = vector.load %arg11[%66, %c0_30] : memref<384x64xf32, #tpu.memory_space<vmem>>, vector<112x64xf32>
      tpu.vector_store %arg11[%66, %c0_30], %49 {strides = array<i32>} : memref<384x64xf32, #tpu.memory_space<vmem>>, vector<112x64xf32>,
      %68 = arith.index_cast %60 : i32 to index
      %c0_31 = arith.constant 0 : index
      %69 = vector.load %arg12[%68, %c0_31] : memref<384x64xf32, #tpu.memory_space<vmem>>, vector<112x64xf32>
      tpu.vector_store %arg12[%68, %c0_31], %47 {strides = array<i32>} : memref<384x64xf32, #tpu.memory_space<vmem>>, vector<112x64xf32>,
    } else {
    }
    %c0_i32_2 = arith.constant 0 : i32
    %14 = arith.cmpi sgt, %arg0, %c0_i32_2 : i32
    %15 = arith.extui %14 : i1 to i32
    %c0_i32_3 = arith.constant 0 : i32
    %16 = arith.cmpi ne, %15, %c0_i32_3 : i32
    scf.if %16 {
      %c0_i32_4 = arith.constant 0 : i32
      %17 = arith.cmpi eq, %arg1, %c0_i32_4 : i32
      %18 = arith.extui %17 : i1 to i32
      %c0_i32_5 = arith.constant 0 : i32
      %19 = arith.cmpi ne, %18, %c0_i32_5 : i32
      scf.if %19 {
        %cst = arith.constant 0.000000e+00 : f32
        %27 = vector.broadcast %cst : f32 to vector<112x128xf32>
        %c0_8 = arith.constant 0 : index
        %c0_9 = arith.constant 0 : index
        %28 = vector.load %arg14[%c0_8, %c0_9] : memref<112x128xf32, #tpu.memory_space<vmem>>, vector<112x128xf32>
        tpu.vector_store %arg14[%c0_8, %c0_9], %27 {strides = array<i32>} : memref<112x128xf32, #tpu.memory_space<vmem>>, vector<112x128xf32>,
      } else {
      }
      %c128_i32 = arith.constant 128 : i32
      %20 = arith.muli %arg1, %c128_i32 : i32
      %21 = arith.cmpi slt, %20, %1 : i32
      %22 = arith.extui %21 : i1 to i32
      %c0_i32_6 = arith.constant 0 : i32
      %23 = arith.cmpi ne, %22, %c0_i32_6 : i32
      scf.if %23 {
        %c128_i32_8 = arith.constant 128 : i32
        %27 = arith.muli %arg1, %c128_i32_8 : i32
        %28 = tpu.assume_multiple %27, 128 : i32
        %c0_9 = arith.constant 0 : index
        %c0_10 = arith.constant 0 : index
        %29 = vector.load %arg14[%c0_9, %c0_10] : memref<112x128xf32, #tpu.memory_space<vmem>>, vector<112x128xf32>
        %c0_11 = arith.constant 0 : index
        %c0_12 = arith.constant 0 : index
        %30 = vector.load %arg3[%c0_11, %c0_12] : memref<112x128xbf16, #tpu.memory_space<vmem>>, vector<112x128xbf16>
        %31 = arith.index_cast %28 : i32 to index
        %c0_13 = arith.constant 0 : index
        %32 = vector.load %arg13[%31, %c0_13] : memref<384x128xbf16, #tpu.memory_space<vmem>>, vector<128x128xbf16>
        %cst = arith.constant dense<0.000000e+00> : vector<112x128xf32>
        %33 = tpu.matmul %30, %32, %cst {dimension_numbers = #tpu.dot_dimension_numbers<[1], [0], [0], [1], [0, 0, 1, 1], [], []>} : vector<112x128xbf16>, vector<128x128xbf16>, vector<112x128xf32> -> vector<112x128xf32>
        %34 = arith.addf %29, %33 : vector<112x128xf32>
        %c0_14 = arith.constant 0 : index
        %c0_15 = arith.constant 0 : index
        %35 = vector.load %arg14[%c0_14, %c0_15] : memref<112x128xf32, #tpu.memory_space<vmem>>, vector<112x128xf32>
        tpu.vector_store %arg14[%c0_14, %c0_15], %34 {strides = array<i32>} : memref<112x128xf32, #tpu.memory_space<vmem>>, vector<112x128xf32>,
      } else {
      }
      %c2_i32 = arith.constant 2 : i32
      %24 = arith.cmpi eq, %arg1, %c2_i32 : i32
      %25 = arith.extui %24 : i1 to i32
      %c0_i32_7 = arith.constant 0 : i32
      %26 = arith.cmpi ne, %25, %c0_i32_7 : i32
      scf.if %26 {
        %c0_8 = arith.constant 0 : index
        %c0_9 = arith.constant 0 : index
        %27 = vector.load %arg14[%c0_8, %c0_9] : memref<112x128xf32, #tpu.memory_space<vmem>>, vector<112x128xf32>
        %28 = vector.extract_strided_slice %27 {offsets = [0, 0], sizes = [112, 64], strides = [1, 1]} : vector<112x128xf32> to vector<112x64xf32>
        %c0_10 = arith.constant 0 : index
        %c0_11 = arith.constant 0 : index
        %29 = vector.load %arg7[%c0_10, %c0_11] : memref<64x192xf32, #tpu.memory_space<vmem>>, vector<64x192xf32>
        %cst = arith.constant dense<0.000000e+00> : vector<112x192xf32>
        %30 = tpu.matmul %28, %29, %cst {dimension_numbers = #tpu.dot_dimension_numbers<[1], [0], [0], [1], [0, 0, 1, 1], [], []>} : vector<112x64xf32>, vector<64x192xf32>, vector<112x192xf32> -> vector<112x192xf32>
        %c0_12 = arith.constant 0 : index
        %c0_13 = arith.constant 0 : index
        %31 = vector.load %arg10[%c0_12, %c0_13] : memref<1x192xf32, #tpu.memory_space<vmem>>, vector<1x192xf32>
        %32 = vector.broadcast %31 : vector<1x192xf32> to vector<112x192xf32>
        %33 = arith.addf %30, %32 : vector<112x192xf32>
        %34 = vector.extract_strided_slice %27 {offsets = [0, 64], sizes = [112, 64], strides = [1, 1]} : vector<112x128xf32> to vector<112x64xf32>
        %35 = vector.extract_strided_slice %33 {offsets = [0, 0], sizes = [112, 64], strides = [1, 1]} : vector<112x192xf32> to vector<112x64xf32>
        %36 = arith.negf %35 : vector<112x64xf32>
        %37 = math.exp %36 : vector<112x64xf32>
        %cst_14 = arith.constant 1.000000e+00 : f32
        %38 = vector.broadcast %cst_14 : f32 to vector<112x64xf32>
        %39 = arith.addf %38, %37 : vector<112x64xf32>
        %40 = arith.divf %38, %39 : vector<112x64xf32>
        %41 = vector.extract_strided_slice %33 {offsets = [0, 64], sizes = [112, 64], strides = [1, 1]} : vector<112x192xf32> to vector<112x64xf32>
        %42 = arith.negf %41 : vector<112x64xf32>
        %43 = math.exp %42 : vector<112x64xf32>
        %cst_15 = arith.constant 1.000000e+00 : f32
        %44 = vector.broadcast %cst_15 : f32 to vector<112x64xf32>
        %45 = arith.addf %44, %43 : vector<112x64xf32>
        %46 = arith.divf %44, %45 : vector<112x64xf32>
        %47 = vector.extract_strided_slice %33 {offsets = [0, 128], sizes = [112, 64], strides = [1, 1]} : vector<112x192xf32> to vector<112x64xf32>
        %48 = math.tanh %47 : vector<112x64xf32>
        %49 = arith.mulf %40, %48 : vector<112x64xf32>
        %50 = arith.addf %49, %34 : vector<112x64xf32>
        %51 = vector.broadcast %8 : vector<112x1xf32> to vector<112x64xf32>
        %52 = arith.mulf %50, %51 : vector<112x64xf32>
        %53 = math.tanh %52 : vector<112x64xf32>
        %54 = arith.mulf %46, %53 : vector<112x64xf32>
        %c0_16 = arith.constant 0 : index
        %c0_17 = arith.constant 0 : index
        %55 = vector.load %arg8[%c0_16, %c0_17] : memref<64x64xf32, #tpu.memory_space<vmem>>, vector<64x64xf32>
        %cst_18 = arith.constant dense<0.000000e+00> : vector<112x64xf32>
        %56 = tpu.matmul %54, %55, %cst_18 {dimension_numbers = #tpu.dot_dimension_numbers<[1], [0], [0], [1], [0, 0, 1, 1], [], []>} : vector<112x64xf32>, vector<64x64xf32>, vector<112x64xf32> -> vector<112x64xf32>
        %c0_19 = arith.constant 0 : index
        %c0_20 = arith.constant 0 : index
        %57 = vector.load %arg9[%c0_19, %c0_20] : memref<1x64xf32, #tpu.memory_space<vmem>>, vector<1x64xf32>
        %58 = vector.broadcast %57 : vector<1x64xf32> to vector<112x64xf32>
        %59 = arith.addf %56, %58 : vector<112x64xf32>
        %60 = arith.negf %59 : vector<112x64xf32>
        %61 = math.exp %60 : vector<112x64xf32>
        %cst_21 = arith.constant 1.000000e+00 : f32
        %62 = vector.broadcast %cst_21 : f32 to vector<112x64xf32>
        %63 = arith.addf %62, %61 : vector<112x64xf32>
        %64 = arith.divf %62, %63 : vector<112x64xf32>
        %65 = tpu.assume_multiple %1, 16 : i32
        %66 = arith.mulf %64, %52 : vector<112x64xf32>
        %67 = tpu.concatenate %54, %66 in 1 : vector<112x64xf32>, vector<112x64xf32> -> vector<112x128xf32>
        %68 = arith.truncf %67 : vector<112x128xf32> to vector<112x128xbf16>
        %69 = arith.index_cast %65 : i32 to index
        %c0_22 = arith.constant 0 : index
        %70 = vector.load %arg13[%69, %c0_22] : memref<384x128xbf16, #tpu.memory_space<vmem>>, vector<112x128xbf16>
        tpu.vector_store %arg13[%69, %c0_22], %68 {strides = array<i32>} : memref<384x128xbf16, #tpu.memory_space<vmem>>, vector<112x128xbf16>,
        %71 = arith.index_cast %65 : i32 to index
        %c0_23 = arith.constant 0 : index
        %72 = vector.load %arg11[%71, %c0_23] : memref<384x64xf32, #tpu.memory_space<vmem>>, vector<112x64xf32>
        tpu.vector_store %arg11[%71, %c0_23], %54 {strides = array<i32>} : memref<384x64xf32, #tpu.memory_space<vmem>>, vector<112x64xf32>,
        %73 = arith.index_cast %65 : i32 to index
        %c0_24 = arith.constant 0 : index
        %74 = vector.load %arg12[%73, %c0_24] : memref<384x64xf32, #tpu.memory_space<vmem>>, vector<112x64xf32>
        tpu.vector_store %arg12[%73, %c0_24], %52 {strides = array<i32>} : memref<384x64xf32, #tpu.memory_space<vmem>>, vector<112x64xf32>,
      } else {
      }
    } else {
    }
    return
  }
  func.func @transform_0(%arg0: i32, %arg1: i32, %arg2: memref<7x3xi32, #tpu.memory_space<smem>>) -> (i32, i32) {
    %0 = arith.index_cast %arg0 : i32 to index
    %c2 = arith.constant 2 : index
    %1 = memref.load %arg2[%0, %c2] : memref<7x3xi32, #tpu.memory_space<smem>>
    %2 = arith.minsi %arg1, %1 : i32
    %c0_i32 = arith.constant 0 : i32
    return %arg0, %2 : i32, i32
  }
  func.func @transform_1(%arg0: i32, %arg1: i32, %arg2: memref<7x3xi32, #tpu.memory_space<smem>>) -> (i32, i32) {
    %c0_i32 = arith.constant 0 : i32
    %c0_i32_0 = arith.constant 0 : i32
    %c0_i32_1 = arith.constant 0 : i32
    return %c0_i32, %c0_i32_0 : i32, i32
  }
  func.func @transform_2(%arg0: i32, %arg1: i32, %arg2: memref<7x3xi32, #tpu.memory_space<smem>>) -> (i32, i32) {
    %c0_i32 = arith.constant 0 : i32
    %c0_i32_0 = arith.constant 0 : i32
    %c0_i32_1 = arith.constant 0 : i32
    return %c0_i32, %c0_i32_0 : i32, i32
  }
  func.func @transform_3(%arg0: i32, %arg1: i32, %arg2: memref<7x3xi32, #tpu.memory_space<smem>>) -> (i32, i32) {
    %c0_i32 = arith.constant 0 : i32
    %c0_i32_0 = arith.constant 0 : i32
    %c0_i32_1 = arith.constant 0 : i32
    return %c0_i32, %c0_i32_0 : i32, i32
  }
  func.func @transform_4(%arg0: i32, %arg1: i32, %arg2: memref<7x3xi32, #tpu.memory_space<smem>>) -> (i32, i32) {
    %c0_i32 = arith.constant 0 : i32
    %c0_i32_0 = arith.constant 0 : i32
    %c0_i32_1 = arith.constant 0 : i32
    return %c0_i32, %c0_i32_0 : i32, i32
  }
  func.func @transform_5(%arg0: i32, %arg1: i32, %arg2: memref<7x3xi32, #tpu.memory_space<smem>>) -> (i32, i32) {
    %c0_i32 = arith.constant 0 : i32
    %c0_i32_0 = arith.constant 0 : i32
    %c0_i32_1 = arith.constant 0 : i32
    return %c0_i32, %c0_i32_0 : i32, i32
  }
  func.func @transform_6(%arg0: i32, %arg1: i32, %arg2: memref<7x3xi32, #tpu.memory_space<smem>>) -> (i32, i32) {
    %c0_i32 = arith.constant 0 : i32
    %c0_i32_0 = arith.constant 0 : i32
    %c0_i32_1 = arith.constant 0 : i32
    return %c0_i32, %c0_i32_0 : i32, i32
  }
  func.func @transform_7(%arg0: i32, %arg1: i32, %arg2: memref<7x3xi32, #tpu.memory_space<smem>>) -> (i32, i32) {
    %c0_i32 = arith.constant 0 : i32
    %c0_i32_0 = arith.constant 0 : i32
    %c0_i32_1 = arith.constant 0 : i32
    return %c0_i32, %c0_i32_0 : i32, i32
  }
  func.func @transform_8(%arg0: i32, %arg1: i32, %arg2: memref<7x3xi32, #tpu.memory_space<smem>>) -> (i32, i32) {
    %c0_i32 = arith.constant 0 : i32
    %c0_i32_0 = arith.constant 0 : i32
    %c0_i32_1 = arith.constant 0 : i32
    return %c0_i32, %c0_i32_0 : i32, i32
  }
  func.func @transform_9(%arg0: i32, %arg1: i32, %arg2: memref<7x3xi32, #tpu.memory_space<smem>>) -> (i32, i32) {
    %c0_i32 = arith.constant 0 : i32
    %c0_i32_0 = arith.constant 0 : i32
    %c0_i32_1 = arith.constant 0 : i32
    return %c0_i32, %c0_i32_0 : i32, i32
  }
}

</mosaic_0001>

<llo_original>
// kernel: tpu_custom_call.1
$region0: #{tpu_custom_call.1}
  #allocation0 [shape = 'u32[]', space=smem, size = 0x4, offset = 0x4, fixed_abs, tag = 'smem constant byte address 0x4 - core index']
  #allocation1 [shape = 'u32[72,128]{1,0:T(1,128)}', space=vmem, size = 0x9000, scoped, tag = 'internal scratch']
  #allocation2 [shape = 'bf16[384,128]{1,0:T(8,128)(2,1)}', space=vmem, size = 0x18000, scoped, tag = 'scratch operand']
  #allocation3 [shape = 'f32[112,128]{1,0:T(8,128)}', space=vmem, size = 0xe000, scoped, tag = 'scratch operand']
  #allocation4 [shape = 's32[1]{0}', space=sflag, size = 0x4, scoped, tag = 'scoped memory for tpu_custom_call.1']
  #allocation5 [shape = 'u8[4096]{0}', space=smem, size = 0x1000, scoped, tag = 'prefetched SMEM operand 0']
  %s0 = inlined_call_operand.vmem [shape: s32[7,3], index: 0, kind: input, shape index: {}]
  %s1 = inlined_call_operand.hbm [shape: bf16[784,384], index: 1, kind: input, shape index: {}]
  %s2 = inlined_call_operand.vmem [shape: f32[112,16], index: 2, kind: input, shape index: {}]
  %s3 = inlined_call_operand.vmem [shape: f32[112,64], index: 3, kind: input, shape index: {}]
  %s4 = inlined_call_operand.vmem [shape: f32[16,192], index: 4, kind: input, shape index: {}]
  %s5 = inlined_call_operand.vmem [shape: f32[64,192], index: 5, kind: input, shape index: {}]
  %s6 = inlined_call_operand.vmem [shape: f32[64,64], index: 6, kind: input, shape index: {}]
  %s7 = inlined_call_operand.vmem [shape: f32[1,64], index: 7, kind: input, shape index: {}]
  %s8 = inlined_call_operand.vmem [shape: f32[1,192], index: 8, kind: input, shape index: {}]
  %s9 = inlined_call_operand.vmem [shape: f32[384,64], index: 9, kind: output, shape index: {0}]
  %s10 = inlined_call_operand.vmem [shape: f32[384,64], index: 10, kind: output, shape index: {1}]
  %11 = xla_tuple %s9, %s10
  %s12 = sld [smem:[#allocation0]]
  $region97: #{tpu_custom_call.1} parent=0
    _
  %s14 = ssub.s32 1, %s12
  %s15 = scalar_select 0, %s14, %s12
  %s17 = sshll.u32 %s0, 4
  %s18 = int_to_ptr.vmem [resolvable:$true] %s17
  %20 = dma.vmem_to_smem %s18, 128, [#allocation5], [#allocation4]
  %22 = dma.done [#allocation4], 128
  %23 = sfence
  $region1: #{tpu_custom_call.1} parent=0
    #allocation6 [shape = 'u8[57344]{0}', space=vmem, size = 0xe000, scoped, tag = 'input window, operand 1']
    #allocation7 [shape = 's32[2]{0}', space=sflag, size = 0x8, scoped, tag = 'scoped memory for tpu_custom_call.1']
    %24 = vsyncpa [#allocation7], 0
    %s25 = scalar_lea.sflag [#allocation7], 1
    %26 = vsyncpa %s25, 0
    loop: start=0, step=1, limit=23
    $region2: #{tpu_custom_call.1} parent=1 // loop_pre_header
      _
    $region3: #{tpu_custom_call.1} parent=1 // loop_header
      %s28 = sphi 0, %s32
      %p29 = scmp.ge.s32.totalorder %s28, 23
      %s35 = sphi 0, %s47
      %s36 = sphi 0, %s43
      %s37 = sphi 0, %s35
      %s38 = sphi 0, %s36
      %s39 = sphi 0, %s37
      %s40 = sphi 0, %s38
      %s62 = sphi 0, %s64
      %s65 = sphi 0, %s62
      %s66 = sphi 0, %s65
      %s82 = sphi 0, %s66
      %s86 = sphi 0, %s86
      %s88 = sphi 0, %s86
      %s89 = sphi 0, %s88
      %s103 = sphi 0, %s89
      %s107 = sphi 0, %s107
      %s109 = sphi 0, %s107
      %s110 = sphi 0, %s109
      %s124 = sphi 0, %s110
      %s128 = sphi 0, %s128
      %s130 = sphi 0, %s128
      %s131 = sphi 0, %s130
      %s145 = sphi 0, %s131
      %s149 = sphi 0, %s149
      %s151 = sphi 0, %s149
      %s152 = sphi 0, %s151
      %s166 = sphi 0, %s152
      %s170 = sphi 0, %s170
      %s172 = sphi 0, %s170
      %s173 = sphi 0, %s172
      %s187 = sphi 0, %s173
      %s191 = sphi 0, %s191
      %s193 = sphi 0, %s191
      %s194 = sphi 0, %s193
      %s208 = sphi 0, %s194
      %s212 = sphi 0, %s212
      %s214 = sphi 0, %s212
      %s215 = sphi 0, %s214
      %s229 = sphi 0, %s215
      %s233 = sphi 0, %s233
      %s235 = sphi 0, %s233
      %s236 = sphi 0, %s235
      %s250 = sphi 0, %s236
      %s254 = sphi 0, %s254
      %s256 = sphi 0, %s254
      %s257 = sphi 0, %s256
      %s271 = sphi 0, %s257
    $region4: #{tpu_custom_call.1} parent=1 // loop_header_branch
      %31 = sbr.rel (%p29) target = $region8
    $region5: #{tpu_custom_call.1} parent=1 // loop_body
      %s33 = ssub.s32 %s28, 1
      %s34 = ssub.s32 %s28, 2
      %s41 = sadd.s32 1, %s36
      %p42 = scmp.ge.s32.totalorder %s41, 3
      %s43 = scalar_select %p42, 0, %s41
      %s44 = sadd.s32 1, %s35
      %s45 = scalar_select %p42, %s44, %s35
      %p46 = scmp.ge.s32.totalorder %s45, 7
      %s47 = scalar_select %p46, 0, %s45
      %s48 = smul.u32 %s35, 128
      %s49 = sadd.s32 %s48, 2
      %s50 = sld [smem:[#allocation5 + %s49]]
      %p51 = scmp.lt.s32.totalorder %s36, %s50
      %s52 = scalar_select %p51, %s36, %s50
      %s53 = smul.u32 %s47, 128
      %s54 = sadd.s32 %s53, 2
      %s55 = sld [smem:[#allocation5 + %s54]]
      %p56 = scmp.lt.s32.totalorder %s43, %s55
      %s57 = scalar_select %p56, %s43, %s55
      %s58 = ssub.s32 %s35, %s47
      %s59 = ssub.s32 %s52, %s57
      %s60 = sor.u32 %s58, %s59
      %p61 = scmp.eq.s32.totalorder %s60, 0
      %s63 = sadd.s32 %s62, 1
      %s64 = scalar_select %p61, %s62, %s63
      %p67 = pneg %p61
      %p68 = scmp.eq.s32.totalorder %s28, 20
      %p69 = por %p67, %p68
      %p70 = scmp.ne.s32.totalorder %s62, %s65
      %p71 = scmp.eq.s32.totalorder %s28, 0
      %p72 = por %p70, %p71
      %p73 = scmp.ne.s32.totalorder %s62, %s65
      %p74 = scmp.eq.s32.totalorder %s33, 20
      %p75 = por %p73, %p74
      %p76 = scmp.ne.s32.totalorder %s65, %s66
      %p77 = scmp.eq.s32.totalorder %s33, 0
      %p78 = por %p76, %p77
      %p79 = scmp.ne.s32.totalorder %s65, %s66
      %p80 = scmp.eq.s32.totalorder %s34, 20
      %p81 = por %p79, %p80
      %p83 = scmp.ne.s32.totalorder %s66, %s82
      %p84 = scmp.eq.s32.totalorder %s34, 0
      %p85 = por %p83, %p84
      %s87 = sadd.s32 %s86, 1
      %p90 = scmp.eq.s32.totalorder %s28, 20
      %p91 = scmp.ne.s32.totalorder %s86, %s88
      %p92 = scmp.eq.s32.totalorder %s28, 0
      %p93 = por %p91, %p92
      %p94 = scmp.ne.s32.totalorder %s86, %s88
      %p95 = scmp.eq.s32.totalorder %s33, 20
      %p96 = por %p94, %p95
      %p97 = scmp.ne.s32.totalorder %s88, %s89
      %p98 = scmp.eq.s32.totalorder %s33, 0
      %p99 = por %p97, %p98
      %p100 = scmp.ne.s32.totalorder %s88, %s89
      %p101 = scmp.eq.s32.totalorder %s34, 20
      %p102 = por %p100, %p101
      %p104 = scmp.ne.s32.totalorder %s89, %s103
      %p105 = scmp.eq.s32.totalorder %s34, 0
      %p106 = por %p104, %p105
      %s108 = sadd.s32 %s107, 1
      %p111 = scmp.eq.s32.totalorder %s28, 20
      %p112 = scmp.ne.s32.totalorder %s107, %s109
      %p113 = scmp.eq.s32.totalorder %s28, 0
      %p114 = por %p112, %p113
      %p115 = scmp.ne.s32.totalorder %s107, %s109
      %p116 = scmp.eq.s32.totalorder %s33, 20
      %p117 = por %p115, %p116
      %p118 = scmp.ne.s32.totalorder %s109, %s110
      %p119 = scmp.eq.s32.totalorder %s33, 0
      %p120 = por %p118, %p119
      %p121 = scmp.ne.s32.totalorder %s109, %s110
      %p122 = scmp.eq.s32.totalorder %s34, 20
      %p123 = por %p121, %p122
      %p125 = scmp.ne.s32.totalorder %s110, %s124
      %p126 = scmp.eq.s32.totalorder %s34, 0
      %p127 = por %p125, %p126
      %s129 = sadd.s32 %s128, 1
      %p132 = scmp.eq.s32.totalorder %s28, 20
      %p133 = scmp.ne.s32.totalorder %s128, %s130
      %p134 = scmp.eq.s32.totalorder %s28, 0
      %p135 = por %p133, %p134
      %p136 = scmp.ne.s32.totalorder %s128, %s130
      %p137 = scmp.eq.s32.totalorder %s33, 20
      %p138 = por %p136, %p137
      %p139 = scmp.ne.s32.totalorder %s130, %s131
      %p140 = scmp.eq.s32.totalorder %s33, 0
      %p141 = por %p139, %p140
      %p142 = scmp.ne.s32.totalorder %s130, %s131
      %p143 = scmp.eq.s32.totalorder %s34, 20
      %p144 = por %p142, %p143
      %p146 = scmp.ne.s32.totalorder %s131, %s145
      %p147 = scmp.eq.s32.totalorder %s34, 0
      %p148 = por %p146, %p147
      %s150 = sadd.s32 %s149, 1
      %p153 = scmp.eq.s32.totalorder %s28, 20
      %p154 = scmp.ne.s32.totalorder %s149, %s151
      %p155 = scmp.eq.s32.totalorder %s28, 0
      %p156 = por %p154, %p155
      %p157 = scmp.ne.s32.totalorder %s149, %s151
      %p158 = scmp.eq.s32.totalorder %s33, 20
      %p159 = por %p157, %p158
      %p160 = scmp.ne.s32.totalorder %s151, %s152
      %p161 = scmp.eq.s32.totalorder %s33, 0
      %p162 = por %p160, %p161
      %p163 = scmp.ne.s32.totalorder %s151, %s152
      %p164 = scmp.eq.s32.totalorder %s34, 20
      %p165 = por %p163, %p164
      %p167 = scmp.ne.s32.totalorder %s152, %s166
      %p168 = scmp.eq.s32.totalorder %s34, 0
      %p169 = por %p167, %p168
      %s171 = sadd.s32 %s170, 1
      %p174 = scmp.eq.s32.totalorder %s28, 20
      %p175 = scmp.ne.s32.totalorder %s170, %s172
      %p176 = scmp.eq.s32.totalorder %s28, 0
      %p177 = por %p175, %p176
      %p178 = scmp.ne.s32.totalorder %s170, %s172
      %p179 = scmp.eq.s32.totalorder %s33, 20
      %p180 = por %p178, %p179
      %p181 = scmp.ne.s32.totalorder %s172, %s173
      %p182 = scmp.eq.s32.totalorder %s33, 0
      %p183 = por %p181, %p182
      %p184 = scmp.ne.s32.totalorder %s172, %s173
      %p185 = scmp.eq.s32.totalorder %s34, 20
      %p186 = por %p184, %p185
      %p188 = scmp.ne.s32.totalorder %s173, %s187
      %p189 = scmp.eq.s32.totalorder %s34, 0
      %p190 = por %p188, %p189
      %s192 = sadd.s32 %s191, 1
      %p195 = scmp.eq.s32.totalorder %s28, 20
      %p196 = scmp.ne.s32.totalorder %s191, %s193
      %p197 = scmp.eq.s32.totalorder %s28, 0
      %p198 = por %p196, %p197
      %p199 = scmp.ne.s32.totalorder %s191, %s193
      %p200 = scmp.eq.s32.totalorder %s33, 20
      %p201 = por %p199, %p200
      %p202 = scmp.ne.s32.totalorder %s193, %s194
      %p203 = scmp.eq.s32.totalorder %s33, 0
      %p204 = por %p202, %p203
      %p205 = scmp.ne.s32.totalorder %s193, %s194
      %p206 = scmp.eq.s32.totalorder %s34, 20
      %p207 = por %p205, %p206
      %p209 = scmp.ne.s32.totalorder %s194, %s208
      %p210 = scmp.eq.s32.totalorder %s34, 0
      %p211 = por %p209, %p210
      %s213 = sadd.s32 %s212, 1
      %p216 = scmp.eq.s32.totalorder %s28, 20
      %p217 = scmp.ne.s32.totalorder %s212, %s214
      %p218 = scmp.eq.s32.totalorder %s28, 0
      %p219 = por %p217, %p218
      %p220 = scmp.ne.s32.totalorder %s212, %s214
      %p221 = scmp.eq.s32.totalorder %s33, 20
      %p222 = por %p220, %p221
      %p223 = scmp.ne.s32.totalorder %s214, %s215
      %p224 = scmp.eq.s32.totalorder %s33, 0
      %p225 = por %p223, %p224
      %p226 = scmp.ne.s32.totalorder %s214, %s215
      %p227 = scmp.eq.s32.totalorder %s34, 20
      %p228 = por %p226, %p227
      %p230 = scmp.ne.s32.totalorder %s215, %s229
      %p231 = scmp.eq.s32.totalorder %s34, 0
      %p232 = por %p230, %p231
      %s234 = sadd.s32 %s233, 1
      %p237 = scmp.eq.s32.totalorder %s28, 20
      %p238 = scmp.ne.s32.totalorder %s233, %s235
      %p239 = scmp.eq.s32.totalorder %s28, 0
      %p240 = por %p238, %p239
      %p241 = scmp.ne.s32.totalorder %s233, %s235
      %p242 = scmp.eq.s32.totalorder %s33, 20
      %p243 = por %p241, %p242
      %p244 = scmp.ne.s32.totalorder %s235, %s236
      %p245 = scmp.eq.s32.totalorder %s33, 0
      %p246 = por %p244, %p245
      %p247 = scmp.ne.s32.totalorder %s235, %s236
      %p248 = scmp.eq.s32.totalorder %s34, 20
      %p249 = por %p247, %p248
      %p251 = scmp.ne.s32.totalorder %s236, %s250
      %p252 = scmp.eq.s32.totalorder %s34, 0
      %p253 = por %p251, %p252
      %s255 = sadd.s32 %s254, 1
      %p258 = scmp.eq.s32.totalorder %s28, 20
      %p259 = scmp.ne.s32.totalorder %s254, %s256
      %p260 = scmp.eq.s32.totalorder %s28, 0
      %p261 = por %p259, %p260
      %p262 = scmp.ne.s32.totalorder %s254, %s256
      %p263 = scmp.eq.s32.totalorder %s33, 20
      %p264 = por %p262, %p263
      %p265 = scmp.ne.s32.totalorder %s256, %s257
      %p266 = scmp.eq.s32.totalorder %s33, 0
      %p267 = por %p265, %p266
      %p268 = scmp.ne.s32.totalorder %s256, %s257
      %p269 = scmp.eq.s32.totalorder %s34, 20
      %p270 = por %p268, %p269
      %p272 = scmp.ne.s32.totalorder %s257, %s271
      %p273 = scmp.eq.s32.totalorder %s34, 0
      %p274 = por %p272, %p273
      %p275 = scmp.le.s32.totalorder 1, %s28
      %p276 = scmp.lt.s32.totalorder %s28, 22
      %p277 = pnand %p275, %p276
      %p278 = pneg %p277
      // Predicated region
      $region9: #{tpu_custom_call.1} parent=5 // pred_check
        _
      $region10: #{tpu_custom_call.1} parent=5 // pred_check_branch
        %280 = sbr.rel (%p277) target = $region12
      $region11: #{tpu_custom_call.1} parent=5 // pred_region
        %s281 = ssub.s32 %s28, 1
        // Predicated region
        $region13: #{tpu_custom_call.1} parent=11 // pred_check
          %p282 = pneg %p99
        $region14: #{tpu_custom_call.1} parent=11 // pred_check_branch
          %284 = sbr.rel (%p282) target = $region16
        $region15: #{tpu_custom_call.1} parent=11 // pred_region
          _
        $region16: #{tpu_custom_call.1} parent=11 // pred_fallthru
          _
        // Predicated region
        $region17: #{tpu_custom_call.1} parent=11 // pred_check
          %p285 = pneg %p120
        $region18: #{tpu_custom_call.1} parent=11 // pred_check_branch
          %287 = sbr.rel (%p285) target = $region20
        $region19: #{tpu_custom_call.1} parent=11 // pred_region
          _
        $region20: #{tpu_custom_call.1} parent=11 // pred_fallthru
          _
        // Predicated region
        $region21: #{tpu_custom_call.1} parent=11 // pred_check
          %p288 = pneg %p141
        $region22: #{tpu_custom_call.1} parent=11 // pred_check_branch
          %290 = sbr.rel (%p288) target = $region24
        $region23: #{tpu_custom_call.1} parent=11 // pred_region
          _
        $region24: #{tpu_custom_call.1} parent=11 // pred_fallthru
          _
        // Predicated region
        $region25: #{tpu_custom_call.1} parent=11 // pred_check
          %p291 = pneg %p162
        $region26: #{tpu_custom_call.1} parent=11 // pred_check_branch
          %293 = sbr.rel (%p291) target = $region28
        $region27: #{tpu_custom_call.1} parent=11 // pred_region
          _
        $region28: #{tpu_custom_call.1} parent=11 // pred_fallthru
          _
        // Predicated region
        $region29: #{tpu_custom_call.1} parent=11 // pred_check
          %p294 = pneg %p183
        $region30: #{tpu_custom_call.1} parent=11 // pred_check_branch
          %296 = sbr.rel (%p294) target = $region32
        $region31: #{tpu_custom_call.1} parent=11 // pred_region
          _
        $region32: #{tpu_custom_call.1} parent=11 // pred_fallthru
          _
        // Predicated region
        $region33: #{tpu_custom_call.1} parent=11 // pred_check
          %p297 = pneg %p204
        $region34: #{tpu_custom_call.1} parent=11 // pred_check_branch
          %299 = sbr.rel (%p297) target = $region36
        $region35: #{tpu_custom_call.1} parent=11 // pred_region
          _
        $region36: #{tpu_custom_call.1} parent=11 // pred_fallthru
          _
        // Predicated region
        $region37: #{tpu_custom_call.1} parent=11 // pred_check
          %p300 = pneg %p225
        $region38: #{tpu_custom_call.1} parent=11 // pred_check_branch
          %302 = sbr.rel (%p300) target = $region40
        $region39: #{tpu_custom_call.1} parent=11 // pred_region
          _
        $region40: #{tpu_custom_call.1} parent=11 // pred_fallthru
          _
      $region12: #{tpu_custom_call.1} parent=5 // pred_fallthru
        _
      %p303 = scmp.lt.s32.totalorder %s28, 21
      // Predicated region
      $region41: #{tpu_custom_call.1} parent=5 // pred_check
        %p304 = pneg %p303
      $region42: #{tpu_custom_call.1} parent=5 // pred_check_branch
        %306 = sbr.rel (%p304) target = $region44
      $region43: #{tpu_custom_call.1} parent=5 // pred_region
        // Predicated region
        $region45: #{tpu_custom_call.1} parent=43 // pred_check
          %p307 = pneg %p72
        $region46: #{tpu_custom_call.1} parent=43 // pred_check_branch
          %309 = sbr.rel (%p307) target = $region48
        $region47: #{tpu_custom_call.1} parent=43 // pred_region
          %s310 = sand.u32 %s62, 1
          %s311 = scalar_lea.sflag [#allocation7], %s310
          %s312 = sand.u32 %s62, 1
          %s313 = smul.addr %s312, 56
          %s314 = scalar_lea.vmem [#allocation6], %s313
          %s315 = smul.u32 %s35, 128
          %s316 = sadd.s32 %s315, 2
          %s317 = sld [smem:[#allocation5 + %s316]]
          %p318 = scmp.lt.s32.totalorder %s36, %s317
          %s319 = scalar_select %p318, %s36, %s317
          %s320 = smul.u32 14, %s35
          %322 = vsyncadd %s311, 0
          %s323 = smul.addr %s320, 3
          %s324 = sadd.s32 %s319, %s323
          %s325 = smul.addr %s324, 4
          %s326 = scalar_lea.hbm %s1, %s325
          %s327 = sshll.u32 %s326, 4
          %s328 = int_to_ptr.hbm [resolvable:$true] %s327
          %s329 = sshll.u32 %s314, 4
          %s330 = int_to_ptr.vmem [resolvable:$true] %s329
          %335 = dma.hbm_to_vmem [thread:$0]  %s328, 896, %s330, %s311, 192, 64, 4
        $region48: #{tpu_custom_call.1} parent=43 // pred_fallthru
          _
      $region44: #{tpu_custom_call.1} parent=5 // pred_fallthru
        _
      %p336 = scmp.le.s32.totalorder 1, %s28
      %p337 = scmp.lt.s32.totalorder %s28, 22
      %p338 = pnand %p336, %p337
      %p339 = pneg %p338
      // Predicated region
      $region49: #{tpu_custom_call.1} parent=5 // pred_check
        _
      $region50: #{tpu_custom_call.1} parent=5 // pred_check_branch
        %341 = sbr.rel (%p338) target = $region52
      $region51: #{tpu_custom_call.1} parent=5 // pred_region
        %s342 = ssub.s32 %s28, 1
        %s343 = sand.u32 %s65, 1
        %s344 = scalar_lea.sflag [#allocation7], %s343
        %s345 = sand.u32 %s65, 1
        %s346 = smul.addr %s345, 56
        %s347 = scalar_lea.vmem [#allocation6], %s346
        // Predicated region
        $region53: #{tpu_custom_call.1} parent=51 // pred_check
          %p348 = pneg %p78
        $region54: #{tpu_custom_call.1} parent=51 // pred_check_branch
          %350 = sbr.rel (%p348) target = $region56
        $region55: #{tpu_custom_call.1} parent=51 // pred_region
          %352 = dma.done %s344, 896
        $region56: #{tpu_custom_call.1} parent=51 // pred_fallthru
          _
        %s353 = sand.u32 %s65, 1
        %s354 = scalar_lea.sflag [#allocation7], %s353
        %s355 = sand.u32 %s65, 1
        %s356 = smul.addr %s355, 56
        %s357 = scalar_lea.vmem [#allocation6], %s356
        %p358 = pneg %p78
        %p359 = pneg %p75
        %p360 = pneg %p99
        %p361 = pneg %p96
        %p362 = pneg %p120
        %p363 = pneg %p117
        %p364 = pneg %p141
        %p365 = pneg %p138
        %p366 = pneg %p162
        %p367 = pneg %p159
        %p368 = pneg %p183
        %p369 = pneg %p180
        %p370 = pneg %p204
        %p371 = pneg %p201
        %p372 = pneg %p225
        %p373 = pneg %p222
        %p374 = pneg %p246
        %p375 = pneg %p243
        %p376 = pneg %p267
        %p377 = pneg %p264
        %s378 = smul.u32 %s37, 128
        %s379 = sadd.s32 %s378, 2
        %s380 = sld [smem:[#allocation5 + %s379]]
        %p381 = scmp.lt.s32.totalorder %s38, %s380
        %s382 = scalar_select %p381, %s38, %s380
        %s383 = smul.u32 14, %s37
        %s385 = smul.u32 %s37, 128
        %s386 = sld [smem:[#allocation5 + %s385]]
        %s387 = sadd.s32 %s385, 1
        %s388 = sld [smem:[#allocation5 + %s387]]
        %v389 = vlaneseq
        %v390 = vshrl.u32 %v389, 7
        %v391 = vadd.s32 %v390, 8
        %v392 = vadd.s32 %v390, 16
        %v393 = vadd.s32 %v390, 24
        %v394 = vadd.s32 %v390, 32
        %v395 = vadd.s32 %v390, 40
        %v396 = vadd.s32 %v390, 48
        %v397 = vadd.s32 %v390, 56
        %v398 = vadd.s32 %v390, 64
        %v399 = vadd.s32 %v390, 72
        %v400 = vadd.s32 %v390, 80
        %v401 = vadd.s32 %v390, 88
        %v402 = vadd.s32 %v390, 96
        %v403 = vadd.s32 %v390, 104
        %v404 = vstv %s388
        %vm405 = vcmp.lt.s32.totalorder %v390, %v404
        %vm406 = vcmp.lt.s32.totalorder %v391, %v404
        %vm407 = vcmp.lt.s32.totalorder %v392, %v404
        %vm408 = vcmp.lt.s32.totalorder %v393, %v404
        %vm409 = vcmp.lt.s32.totalorder %v394, %v404
        %vm410 = vcmp.lt.s32.totalorder %v395, %v404
        %vm411 = vcmp.lt.s32.totalorder %v396, %v404
        %vm412 = vcmp.lt.s32.totalorder %v397, %v404
        %vm413 = vcmp.lt.s32.totalorder %v398, %v404
        %vm414 = vcmp.lt.s32.totalorder %v399, %v404
        %vm415 = vcmp.lt.s32.totalorder %v400, %v404
        %vm416 = vcmp.lt.s32.totalorder %v401, %v404
        %vm417 = vcmp.lt.s32.totalorder %v402, %v404
        %vm418 = vcmp.lt.s32.totalorder %v403, %v404
        %v419 = vsel %vm405, 1, 0
        %v420 = vsel %vm406, 1, 0
        %v421 = vsel %vm407, 1, 0
        %v422 = vsel %vm408, 1, 0
        %v423 = vsel %vm409, 1, 0
        %v424 = vsel %vm410, 1, 0
        %v425 = vsel %vm411, 1, 0
        %v426 = vsel %vm412, 1, 0
        %v427 = vsel %vm413, 1, 0
        %v428 = vsel %vm414, 1, 0
        %v429 = vsel %vm415, 1, 0
        %v430 = vsel %vm416, 1, 0
        %v431 = vsel %vm417, 1, 0
        %v432 = vsel %vm418, 1, 0
        %v433 = vcvt.s32.f32 %v419
        %v434 = vcvt.s32.f32 %v420
        %v435 = vcvt.s32.f32 %v421
        %v436 = vcvt.s32.f32 %v422
        %v437 = vcvt.s32.f32 %v423
        %v438 = vcvt.s32.f32 %v424
        %v439 = vcvt.s32.f32 %v425
        %v440 = vcvt.s32.f32 %v426
        %v441 = vcvt.s32.f32 %v427
        %v442 = vcvt.s32.f32 %v428
        %v443 = vcvt.s32.f32 %v429
        %v444 = vcvt.s32.f32 %v430
        %v445 = vcvt.s32.f32 %v431
        %v446 = vcvt.s32.f32 %v432
        %p447 = scmp.eq.s32.totalorder %s37, 0
        %p448 = scmp.eq.s32.totalorder %s38, 0
        %p449 = pnand %p447, %p448
        %p450 = pneg %p449
        // Predicated region
        $region57: #{tpu_custom_call.1} parent=51 // pred_check
          _
        $region58: #{tpu_custom_call.1} parent=51 // pred_check_branch
          %452 = sbr.rel (%p449) target = $region60
        $region59: #{tpu_custom_call.1} parent=51 // pred_region
          %453 = vst [vmem:[#allocation2] sm:$0xf] 0
          %454 = vst [vmem:[#allocation2 + $0x4] sm:$0xf] 0
          %455 = vst [vmem:[#allocation2 + $0x8] sm:$0xf] 0
          %456 = vst [vmem:[#allocation2 + $0xc] sm:$0xf] 0
          %457 = vst [vmem:[#allocation2 + $0x10] sm:$0xf] 0
          %458 = vst [vmem:[#allocation2 + $0x14] sm:$0xf] 0
          %459 = vst [vmem:[#allocation2 + $0x18] sm:$0xf] 0
          %460 = vst [vmem:[#allocation2 + $0x1c] sm:$0xf] 0
          %461 = vst [vmem:[#allocation2 + $0x20] sm:$0xf] 0
          %462 = vst [vmem:[#allocation2 + $0x24] sm:$0xf] 0
          %463 = vst [vmem:[#allocation2 + $0x28] sm:$0xf] 0
          %464 = vst [vmem:[#allocation2 + $0x2c] sm:$0xf] 0
          %465 = vst [vmem:[#allocation2 + $0x30] sm:$0xf] 0
          %466 = vst [vmem:[#allocation2 + $0x34] sm:$0xf] 0
          %467 = vst [vmem:[#allocation2 + $0x38] sm:$0xf] 0
          %468 = vst [vmem:[#allocation2 + $0x3c] sm:$0xf] 0
          %469 = vst [vmem:[#allocation2 + $0x40] sm:$0xf] 0
          %470 = vst [vmem:[#allocation2 + $0x44] sm:$0xf] 0
          %471 = vst [vmem:[#allocation2 + $0x48] sm:$0xf] 0
          %472 = vst [vmem:[#allocation2 + $0x4c] sm:$0xf] 0
          %473 = vst [vmem:[#allocation2 + $0x50] sm:$0xf] 0
          %474 = vst [vmem:[#allocation2 + $0x54] sm:$0xf] 0
          %475 = vst [vmem:[#allocation2 + $0x58] sm:$0xf] 0
          %476 = vst [vmem:[#allocation2 + $0x5c] sm:$0xf] 0
          %477 = vst [vmem:[#allocation2 + $0x60] sm:$0xf] 0
          %478 = vst [vmem:[#allocation2 + $0x64] sm:$0xf] 0
          %479 = vst [vmem:[#allocation2 + $0x68] sm:$0xf] 0
          %480 = vst [vmem:[#allocation2 + $0x6c] sm:$0xf] 0
          %481 = vst [vmem:[#allocation2 + $0x70] sm:$0xf] 0
          %482 = vst [vmem:[#allocation2 + $0x74] sm:$0xf] 0
          %483 = vst [vmem:[#allocation2 + $0x78] sm:$0xf] 0
          %484 = vst [vmem:[#allocation2 + $0x7c] sm:$0xf] 0
          %485 = vst [vmem:[#allocation2 + $0x80] sm:$0xf] 0
          %486 = vst [vmem:[#allocation2 + $0x84] sm:$0xf] 0
          %487 = vst [vmem:[#allocation2 + $0x88] sm:$0xf] 0
          %488 = vst [vmem:[#allocation2 + $0x8c] sm:$0xf] 0
          %489 = vst [vmem:[#allocation2 + $0x90] sm:$0xf] 0
          %490 = vst [vmem:[#allocation2 + $0x94] sm:$0xf] 0
          %491 = vst [vmem:[#allocation2 + $0x98] sm:$0xf] 0
          %492 = vst [vmem:[#allocation2 + $0x9c] sm:$0xf] 0
          %493 = vst [vmem:[#allocation2 + $0xa0] sm:$0xf] 0
          %494 = vst [vmem:[#allocation2 + $0xa4] sm:$0xf] 0
          %495 = vst [vmem:[#allocation2 + $0xa8] sm:$0xf] 0
          %496 = vst [vmem:[#allocation2 + $0xac] sm:$0xf] 0
          %497 = vst [vmem:[#allocation2 + $0xb0] sm:$0xf] 0
          %498 = vst [vmem:[#allocation2 + $0xb4] sm:$0xf] 0
          %499 = vst [vmem:[#allocation2 + $0xb8] sm:$0xf] 0
          %500 = vst [vmem:[#allocation2 + $0xbc] sm:$0xf] 0
          %vm501 = vcmask 523264
          %502 = vst.msk [vmem:[%s9] sm:$0xff] %vm501, 0.0
          %503 = vst.msk [vmem:[%s9 + $0x8] sm:$0xff] %vm501, 0.0
          %504 = vst.msk [vmem:[%s9 + $0x10] sm:$0xff] %vm501, 0.0
          %505 = vst.msk [vmem:[%s9 + $0x18] sm:$0xff] %vm501, 0.0
          %506 = vst.msk [vmem:[%s9 + $0x20] sm:$0xff] %vm501, 0.0
          %507 = vst.msk [vmem:[%s9 + $0x28] sm:$0xff] %vm501, 0.0
          %508 = vst.msk [vmem:[%s9 + $0x30] sm:$0xff] %vm501, 0.0
          %509 = vst.msk [vmem:[%s9 + $0x38] sm:$0xff] %vm501, 0.0
          %510 = vst.msk [vmem:[%s9 + $0x40] sm:$0xff] %vm501, 0.0
          %511 = vst.msk [vmem:[%s9 + $0x48] sm:$0xff] %vm501, 0.0
          %512 = vst.msk [vmem:[%s9 + $0x50] sm:$0xff] %vm501, 0.0
          %513 = vst.msk [vmem:[%s9 + $0x58] sm:$0xff] %vm501, 0.0
          %514 = vst.msk [vmem:[%s9 + $0x60] sm:$0xff] %vm501, 0.0
          %515 = vst.msk [vmem:[%s9 + $0x68] sm:$0xff] %vm501, 0.0
          %516 = vst.msk [vmem:[%s9 + $0x70] sm:$0xff] %vm501, 0.0
          %517 = vst.msk [vmem:[%s9 + $0x78] sm:$0xff] %vm501, 0.0
          %518 = vst.msk [vmem:[%s9 + $0x80] sm:$0xff] %vm501, 0.0
          %519 = vst.msk [vmem:[%s9 + $0x88] sm:$0xff] %vm501, 0.0
          %520 = vst.msk [vmem:[%s9 + $0x90] sm:$0xff] %vm501, 0.0
          %521 = vst.msk [vmem:[%s9 + $0x98] sm:$0xff] %vm501, 0.0
          %522 = vst.msk [vmem:[%s9 + $0xa0] sm:$0xff] %vm501, 0.0
          %523 = vst.msk [vmem:[%s9 + $0xa8] sm:$0xff] %vm501, 0.0
          %524 = vst.msk [vmem:[%s9 + $0xb0] sm:$0xff] %vm501, 0.0
          %525 = vst.msk [vmem:[%s9 + $0xb8] sm:$0xff] %vm501, 0.0
          %526 = vst.msk [vmem:[%s9 + $0xc0] sm:$0xff] %vm501, 0.0
          %527 = vst.msk [vmem:[%s9 + $0xc8] sm:$0xff] %vm501, 0.0
          %528 = vst.msk [vmem:[%s9 + $0xd0] sm:$0xff] %vm501, 0.0
          %529 = vst.msk [vmem:[%s9 + $0xd8] sm:$0xff] %vm501, 0.0
          %530 = vst.msk [vmem:[%s9 + $0xe0] sm:$0xff] %vm501, 0.0
          %531 = vst.msk [vmem:[%s9 + $0xe8] sm:$0xff] %vm501, 0.0
          %532 = vst.msk [vmem:[%s9 + $0xf0] sm:$0xff] %vm501, 0.0
          %533 = vst.msk [vmem:[%s9 + $0xf8] sm:$0xff] %vm501, 0.0
          %534 = vst.msk [vmem:[%s9 + $0x100] sm:$0xff] %vm501, 0.0
          %535 = vst.msk [vmem:[%s9 + $0x108] sm:$0xff] %vm501, 0.0
          %536 = vst.msk [vmem:[%s9 + $0x110] sm:$0xff] %vm501, 0.0
          %537 = vst.msk [vmem:[%s9 + $0x118] sm:$0xff] %vm501, 0.0
          %538 = vst.msk [vmem:[%s9 + $0x120] sm:$0xff] %vm501, 0.0
          %539 = vst.msk [vmem:[%s9 + $0x128] sm:$0xff] %vm501, 0.0
          %540 = vst.msk [vmem:[%s9 + $0x130] sm:$0xff] %vm501, 0.0
          %541 = vst.msk [vmem:[%s9 + $0x138] sm:$0xff] %vm501, 0.0
          %542 = vst.msk [vmem:[%s9 + $0x140] sm:$0xff] %vm501, 0.0
          %543 = vst.msk [vmem:[%s9 + $0x148] sm:$0xff] %vm501, 0.0
          %544 = vst.msk [vmem:[%s9 + $0x150] sm:$0xff] %vm501, 0.0
          %545 = vst.msk [vmem:[%s9 + $0x158] sm:$0xff] %vm501, 0.0
          %546 = vst.msk [vmem:[%s9 + $0x160] sm:$0xff] %vm501, 0.0
          %547 = vst.msk [vmem:[%s9 + $0x168] sm:$0xff] %vm501, 0.0
          %548 = vst.msk [vmem:[%s9 + $0x170] sm:$0xff] %vm501, 0.0
          %549 = vst.msk [vmem:[%s9 + $0x178] sm:$0xff] %vm501, 0.0
          %550 = vst.msk [vmem:[%s10] sm:$0xff] %vm501, 0.0
          %551 = vst.msk [vmem:[%s10 + $0x8] sm:$0xff] %vm501, 0.0
          %552 = vst.msk [vmem:[%s10 + $0x10] sm:$0xff] %vm501, 0.0
          %553 = vst.msk [vmem:[%s10 + $0x18] sm:$0xff] %vm501, 0.0
          %554 = vst.msk [vmem:[%s10 + $0x20] sm:$0xff] %vm501, 0.0
          %555 = vst.msk [vmem:[%s10 + $0x28] sm:$0xff] %vm501, 0.0
          %556 = vst.msk [vmem:[%s10 + $0x30] sm:$0xff] %vm501, 0.0
          %557 = vst.msk [vmem:[%s10 + $0x38] sm:$0xff] %vm501, 0.0
          %558 = vst.msk [vmem:[%s10 + $0x40] sm:$0xff] %vm501, 0.0
          %559 = vst.msk [vmem:[%s10 + $0x48] sm:$0xff] %vm501, 0.0
          %560 = vst.msk [vmem:[%s10 + $0x50] sm:$0xff] %vm501, 0.0
          %561 = vst.msk [vmem:[%s10 + $0x58] sm:$0xff] %vm501, 0.0
          %562 = vst.msk [vmem:[%s10 + $0x60] sm:$0xff] %vm501, 0.0
          %563 = vst.msk [vmem:[%s10 + $0x68] sm:$0xff] %vm501, 0.0
          %564 = vst.msk [vmem:[%s10 + $0x70] sm:$0xff] %vm501, 0.0
          %565 = vst.msk [vmem:[%s10 + $0x78] sm:$0xff] %vm501, 0.0
          %566 = vst.msk [vmem:[%s10 + $0x80] sm:$0xff] %vm501, 0.0
          %567 = vst.msk [vmem:[%s10 + $0x88] sm:$0xff] %vm501, 0.0
          %568 = vst.msk [vmem:[%s10 + $0x90] sm:$0xff] %vm501, 0.0
          %569 = vst.msk [vmem:[%s10 + $0x98] sm:$0xff] %vm501, 0.0
          %570 = vst.msk [vmem:[%s10 + $0xa0] sm:$0xff] %vm501, 0.0
          %571 = vst.msk [vmem:[%s10 + $0xa8] sm:$0xff] %vm501, 0.0
          %572 = vst.msk [vmem:[%s10 + $0xb0] sm:$0xff] %vm501, 0.0
          %573 = vst.msk [vmem:[%s10 + $0xb8] sm:$0xff] %vm501, 0.0
          %574 = vst.msk [vmem:[%s10 + $0xc0] sm:$0xff] %vm501, 0.0
          %575 = vst.msk [vmem:[%s10 + $0xc8] sm:$0xff] %vm501, 0.0
          %576 = vst.msk [vmem:[%s10 + $0xd0] sm:$0xff] %vm501, 0.0
          %577 = vst.msk [vmem:[%s10 + $0xd8] sm:$0xff] %vm501, 0.0
          %578 = vst.msk [vmem:[%s10 + $0xe0] sm:$0xff] %vm501, 0.0
          %579 = vst.msk [vmem:[%s10 + $0xe8] sm:$0xff] %vm501, 0.0
          %580 = vst.msk [vmem:[%s10 + $0xf0] sm:$0xff] %vm501, 0.0
          %581 = vst.msk [vmem:[%s10 + $0xf8] sm:$0xff] %vm501, 0.0
          %582 = vst.msk [vmem:[%s10 + $0x100] sm:$0xff] %vm501, 0.0
          %583 = vst.msk [vmem:[%s10 + $0x108] sm:$0xff] %vm501, 0.0
          %584 = vst.msk [vmem:[%s10 + $0x110] sm:$0xff] %vm501, 0.0
          %585 = vst.msk [vmem:[%s10 + $0x118] sm:$0xff] %vm501, 0.0
          %586 = vst.msk [vmem:[%s10 + $0x120] sm:$0xff] %vm501, 0.0
          %587 = vst.msk [vmem:[%s10 + $0x128] sm:$0xff] %vm501, 0.0
          %588 = vst.msk [vmem:[%s10 + $0x130] sm:$0xff] %vm501, 0.0
          %589 = vst.msk [vmem:[%s10 + $0x138] sm:$0xff] %vm501, 0.0
          %590 = vst.msk [vmem:[%s10 + $0x140] sm:$0xff] %vm501, 0.0
          %591 = vst.msk [vmem:[%s10 + $0x148] sm:$0xff] %vm501, 0.0
          %592 = vst.msk [vmem:[%s10 + $0x150] sm:$0xff] %vm501, 0.0
          %593 = vst.msk [vmem:[%s10 + $0x158] sm:$0xff] %vm501, 0.0
          %594 = vst.msk [vmem:[%s10 + $0x160] sm:$0xff] %vm501, 0.0
          %595 = vst.msk [vmem:[%s10 + $0x168] sm:$0xff] %vm501, 0.0
          %596 = vst.msk [vmem:[%s10 + $0x170] sm:$0xff] %vm501, 0.0
          %597 = vst.msk [vmem:[%s10 + $0x178] sm:$0xff] %vm501, 0.0
          %v598 = vld [vmem:[%s2] sm:$0xff]
          %v599 = vld [vmem:[%s2 + $0x8] sm:$0xff]
          %v600 = vld [vmem:[%s2 + $0x10] sm:$0xff]
          %v601 = vld [vmem:[%s2 + $0x18] sm:$0xff]
          %v602 = vld [vmem:[%s2 + $0x20] sm:$0xff]
          %v603 = vld [vmem:[%s2 + $0x28] sm:$0xff]
          %v604 = vld [vmem:[%s2 + $0x30] sm:$0xff]
          %v605 = vld [vmem:[%s2 + $0x38] sm:$0xff]
          %v606 = vld [vmem:[%s2 + $0x40] sm:$0xff]
          %v607 = vld [vmem:[%s2 + $0x48] sm:$0xff]
          %v608 = vld [vmem:[%s2 + $0x50] sm:$0xff]
          %v609 = vld [vmem:[%s2 + $0x58] sm:$0xff]
          %v610 = vld [vmem:[%s2 + $0x60] sm:$0xff]
          %v611 = vld [vmem:[%s2 + $0x68] sm:$0xff]
          %v612 = vld [vmem:[%s4] sm:$0xff]
          %v613 = vld [vmem:[%s4 + $0x8] sm:$0xff]
          %v614 = vld [vmem:[%s4 + $0x10] sm:$0xff]
          %v615 = vld [vmem:[%s4 + $0x18] sm:$0xff]
          %v616 = vld [vmem:[%s8] sm:$0x3]
          %v618 = vperm.slane %v616, 0
          %v619 = vperm.slane %v616, 1
          %vm622 = vcmask 130048
          %v624 = vsel %vm622, %v598, 0
          %v627 = vsel %vm622, %v599, 0
          %v630 = vsel %vm622, %v600, 0
          %v633 = vsel %vm622, %v601, 0
          %v636 = vsel %vm622, %v602, 0
          %v639 = vsel %vm622, %v603, 0
          %v642 = vsel %vm622, %v604, 0
          %v645 = vsel %vm622, %v605, 0
          %v648 = vsel %vm622, %v606, 0
          %v651 = vsel %vm622, %v607, 0
          %v654 = vsel %vm622, %v608, 0
          %v657 = vsel %vm622, %v609, 0
          %v660 = vsel %vm622, %v610, 0
          %v663 = vsel %vm622, %v611, 0
          %665 = vmatpush.msra.mxu0 0.0
          %666 = vmatpush.msra.mxu0 0.0
          %667 = vmatpush.msra.mxu0 0.0
          %668 = vmatpush.msra.mxu0 0.0
          %669 = vmatpush.msra.mxu0 0.0
          %670 = vmatpush.msra.mxu0 0.0
          %671 = vmatpush.msra.mxu0 0.0
          %672 = vmatpush.msra.mxu0 0.0
          %673 = vmatpush.msra.mxu0 0.0
          %674 = vmatpush.msra.mxu0 0.0
          %675 = vmatpush.msra.mxu0 0.0
          %676 = vmatpush.msra.mxu0 0.0
          %677 = vmatpush.msra.mxu0 0.0
          %678 = vmatpush.msra.mxu0 0.0
          %679 = vmatpush.msra.mxu0 %v614
          %680 = vmatpush.msra.mxu0 %v612
          %681 = vmatmul.f32.gmra.mxu0 %v624
          %v682 = vpop.f32.mrf.mxu0
          %v683 = vadd.f32 %v618, %v682
          %684 = vmatmul.f32.gmra.mxu0 %v627
          %v685 = vpop.f32.mrf.mxu0
          %v686 = vadd.f32 %v618, %v685
          %687 = vmatmul.f32.gmra.mxu0 %v630
          %v688 = vpop.f32.mrf.mxu0
          %v689 = vadd.f32 %v618, %v688
          %690 = vmatmul.f32.gmra.mxu0 %v633
          %v691 = vpop.f32.mrf.mxu0
          %v692 = vadd.f32 %v618, %v691
          %693 = vmatmul.f32.gmra.mxu0 %v636
          %v694 = vpop.f32.mrf.mxu0
          %v695 = vadd.f32 %v618, %v694
          %696 = vmatmul.f32.gmra.mxu0 %v639
          %v697 = vpop.f32.mrf.mxu0
          %v698 = vadd.f32 %v618, %v697
          %699 = vmatmul.f32.gmra.mxu0 %v642
          %v700 = vpop.f32.mrf.mxu0
          %v701 = vadd.f32 %v618, %v700
          %702 = vmatmul.f32.gmra.mxu0 %v645
          %v703 = vpop.f32.mrf.mxu0
          %v704 = vadd.f32 %v618, %v703
          %705 = vmatmul.f32.gmra.mxu0 %v648
          %v706 = vpop.f32.mrf.mxu0
          %v707 = vadd.f32 %v618, %v706
          %708 = vmatmul.f32.gmra.mxu0 %v651
          %v709 = vpop.f32.mrf.mxu0
          %v710 = vadd.f32 %v618, %v709
          %711 = vmatmul.f32.gmra.mxu0 %v654
          %v712 = vpop.f32.mrf.mxu0
          %v713 = vadd.f32 %v618, %v712
          %714 = vmatmul.f32.gmra.mxu0 %v657
          %v715 = vpop.f32.mrf.mxu0
          %v716 = vadd.f32 %v618, %v715
          %717 = vmatmul.f32.gmra.mxu0 %v660
          %v718 = vpop.f32.mrf.mxu0
          %v719 = vadd.f32 %v618, %v718
          %720 = vmatmul.f32.gmra.mxu0 %v663
          %v721 = vpop.f32.mrf.mxu0
          %v722 = vadd.f32 %v618, %v721
          %723 = vdwg.mxu0
          %724 = vmatpush.msra.mxu0 0.0
          %725 = vmatpush.msra.mxu0 0.0
          %726 = vmatpush.msra.mxu0 0.0
          %727 = vmatpush.msra.mxu0 0.0
          %728 = vmatpush.msra.mxu0 0.0
          %729 = vmatpush.msra.mxu0 0.0
          %730 = vmatpush.msra.mxu0 0.0
          %731 = vmatpush.msra.mxu0 0.0
          %732 = vmatpush.msra.mxu0 0.0
          %733 = vmatpush.msra.mxu0 0.0
          %734 = vmatpush.msra.mxu0 0.0
          %735 = vmatpush.msra.mxu0 0.0
          %736 = vmatpush.msra.mxu0 0.0
          %737 = vmatpush.msra.mxu0 0.0
          %738 = vmatpush.msra.mxu0 %v615
          %739 = vmatpush.msra.mxu0 %v613
          %740 = vmatmul.f32.gmra.mxu0 %v624
          %v741 = vpop.f32.mrf.mxu0
          %v742 = vadd.f32 %v619, %v741
          %743 = vmatmul.f32.gmra.mxu0 %v627
          %v744 = vpop.f32.mrf.mxu0
          %v745 = vadd.f32 %v619, %v744
          %746 = vmatmul.f32.gmra.mxu0 %v630
          %v747 = vpop.f32.mrf.mxu0
          %v748 = vadd.f32 %v619, %v747
          %749 = vmatmul.f32.gmra.mxu0 %v633
          %v750 = vpop.f32.mrf.mxu0
          %v751 = vadd.f32 %v619, %v750
          %752 = vmatmul.f32.gmra.mxu0 %v636
          %v753 = vpop.f32.mrf.mxu0
          %v754 = vadd.f32 %v619, %v753
          %755 = vmatmul.f32.gmra.mxu0 %v639
          %v756 = vpop.f32.mrf.mxu0
          %v757 = vadd.f32 %v619, %v756
          %758 = vmatmul.f32.gmra.mxu0 %v642
          %v759 = vpop.f32.mrf.mxu0
          %v760 = vadd.f32 %v619, %v759
          %761 = vmatmul.f32.gmra.mxu0 %v645
          %v762 = vpop.f32.mrf.mxu0
          %v763 = vadd.f32 %v619, %v762
          %764 = vmatmul.f32.gmra.mxu0 %v648
          %v765 = vpop.f32.mrf.mxu0
          %v766 = vadd.f32 %v619, %v765
          %767 = vmatmul.f32.gmra.mxu0 %v651
          %v768 = vpop.f32.mrf.mxu0
          %v769 = vadd.f32 %v619, %v768
          %770 = vmatmul.f32.gmra.mxu0 %v654
          %v771 = vpop.f32.mrf.mxu0
          %v772 = vadd.f32 %v619, %v771
          %773 = vmatmul.f32.gmra.mxu0 %v657
          %v774 = vpop.f32.mrf.mxu0
          %v775 = vadd.f32 %v619, %v774
          %776 = vmatmul.f32.gmra.mxu0 %v660
          %v777 = vpop.f32.mrf.mxu0
          %v778 = vadd.f32 %v619, %v777
          %779 = vmatmul.f32.gmra.mxu0 %v663
          %v780 = vpop.f32.mrf.mxu0
          %v781 = vadd.f32 %v619, %v780
          %782 = vdwg.mxu0
          %v783 = vld [vmem:[%s3] sm:$0xff]
          %v784 = vld [vmem:[%s3 + $0x8] sm:$0xff]
          %v785 = vld [vmem:[%s3 + $0x10] sm:$0xff]
          %v786 = vld [vmem:[%s3 + $0x18] sm:$0xff]
          %v787 = vld [vmem:[%s3 + $0x20] sm:$0xff]
          %v788 = vld [vmem:[%s3 + $0x28] sm:$0xff]
          %v789 = vld [vmem:[%s3 + $0x30] sm:$0xff]
          %v790 = vld [vmem:[%s3 + $0x38] sm:$0xff]
          %v791 = vld [vmem:[%s3 + $0x40] sm:$0xff]
          %v792 = vld [vmem:[%s3 + $0x48] sm:$0xff]
          %v793 = vld [vmem:[%s3 + $0x50] sm:$0xff]
          %v794 = vld [vmem:[%s3 + $0x58] sm:$0xff]
          %v795 = vld [vmem:[%s3 + $0x60] sm:$0xff]
          %v796 = vld [vmem:[%s3 + $0x68] sm:$0xff]
          %v797 = vxor.u32 %v683, 2147483648
          %v798 = vxor.u32 %v686, 2147483648
          %v799 = vxor.u32 %v689, 2147483648
          %v800 = vxor.u32 %v692, 2147483648
          %v801 = vxor.u32 %v695, 2147483648
          %v802 = vxor.u32 %v698, 2147483648
          %v803 = vxor.u32 %v701, 2147483648
          %v804 = vxor.u32 %v704, 2147483648
          %v805 = vxor.u32 %v707, 2147483648
          %v806 = vxor.u32 %v710, 2147483648
          %v807 = vxor.u32 %v713, 2147483648
          %v808 = vxor.u32 %v716, 2147483648
          %v809 = vxor.u32 %v719, 2147483648
          %v810 = vxor.u32 %v722, 2147483648
          %v811 = vmul.f32 %v797, 1.442695
          %v812 = vpow.pop %v811
          %v813 = vmul.f32 %v798, 1.442695
          %v814 = vpow.pop %v813
          %v815 = vmul.f32 %v799, 1.442695
          %v816 = vpow.pop %v815
          %v817 = vmul.f32 %v800, 1.442695
          %v818 = vpow.pop %v817
          %v819 = vmul.f32 %v801, 1.442695
          %v820 = vpow.pop %v819
          %v821 = vmul.f32 %v802, 1.442695
          %v822 = vpow.pop %v821
          %v823 = vmul.f32 %v803, 1.442695
          %v824 = vpow.pop %v823
          %v825 = vmul.f32 %v804, 1.442695
          %v826 = vpow.pop %v825
          %v827 = vmul.f32 %v805, 1.442695
          %v828 = vpow.pop %v827
          %v829 = vmul.f32 %v806, 1.442695
          %v830 = vpow.pop %v829
          %v831 = vmul.f32 %v807, 1.442695
          %v832 = vpow.pop %v831
          %v833 = vmul.f32 %v808, 1.442695
          %v834 = vpow.pop %v833
          %v835 = vmul.f32 %v809, 1.442695
          %v836 = vpow.pop %v835
          %v837 = vmul.f32 %v810, 1.442695
          %v838 = vpow.pop %v837
          %v839 = vadd.f32 %v812, 1.0
          %v840 = vadd.f32 %v814, 1.0
          %v841 = vadd.f32 %v816, 1.0
          %v842 = vadd.f32 %v818, 1.0
          %v843 = vadd.f32 %v820, 1.0
          %v844 = vadd.f32 %v822, 1.0
          %v845 = vadd.f32 %v824, 1.0
          %v846 = vadd.f32 %v826, 1.0
          %v847 = vadd.f32 %v828, 1.0
          %v848 = vadd.f32 %v830, 1.0
          %v849 = vadd.f32 %v832, 1.0
          %v850 = vadd.f32 %v834, 1.0
          %v851 = vadd.f32 %v836, 1.0
          %v852 = vadd.f32 %v838, 1.0
          %v853 = vrcp.pop %v839
          %v854 = vmul.f32 %v839, %v853
          %v855 = vsub.f32 1.0, %v854
          %v856 = vmul.f32 %v853, %v855
          %v857 = vadd.f32 %v853, %v856
          %vm858 = vweird.f32 %v839
          %vm859 = vweird.f32 %v853
          %vm860 = vmor %vm858, %vm859
          %v861 = vsel %vm860, %v853, %v857
          %v862 = vand.u32 2147483647, %v839
          %vm863 = vcmp.eq.f32.partialorder %v862, 8.507059e+37
          %v864 = vand.u32 %v839, 2147483648
          %v865 = vor.u32 1.1754944e-38, %v864
          %v866 = vsel %vm863, %v865, %v861
          %v867 = vmul.f32 1.0, %v866
          %v868 = vrcp.pop %v840
          %v869 = vmul.f32 %v840, %v868
          %v870 = vsub.f32 1.0, %v869
          %v871 = vmul.f32 %v868, %v870
          %v872 = vadd.f32 %v868, %v871
          %vm873 = vweird.f32 %v840
          %vm874 = vweird.f32 %v868
          %vm875 = vmor %vm873, %vm874
          %v876 = vsel %vm875, %v868, %v872
          %v877 = vand.u32 2147483647, %v840
          %vm878 = vcmp.eq.f32.partialorder %v877, 8.507059e+37
          %v879 = vand.u32 %v840, 2147483648
          %v880 = vor.u32 1.1754944e-38, %v879
          %v881 = vsel %vm878, %v880, %v876
          %v882 = vmul.f32 1.0, %v881
          %v883 = vrcp.pop %v841
          %v884 = vmul.f32 %v841, %v883
          %v885 = vsub.f32 1.0, %v884
          %v886 = vmul.f32 %v883, %v885
          %v887 = vadd.f32 %v883, %v886
          %vm888 = vweird.f32 %v841
          %vm889 = vweird.f32 %v883
          %vm890 = vmor %vm888, %vm889
          %v891 = vsel %vm890, %v883, %v887
          %v892 = vand.u32 2147483647, %v841
          %vm893 = vcmp.eq.f32.partialorder %v892, 8.507059e+37
          %v894 = vand.u32 %v841, 2147483648
          %v895 = vor.u32 1.1754944e-38, %v894
          %v896 = vsel %vm893, %v895, %v891
          %v897 = vmul.f32 1.0, %v896
          %v898 = vrcp.pop %v842
          %v899 = vmul.f32 %v842, %v898
          %v900 = vsub.f32 1.0, %v899
          %v901 = vmul.f32 %v898, %v900
          %v902 = vadd.f32 %v898, %v901
          %vm903 = vweird.f32 %v842
          %vm904 = vweird.f32 %v898
          %vm905 = vmor %vm903, %vm904
          %v906 = vsel %vm905, %v898, %v902
          %v907 = vand.u32 2147483647, %v842
          %vm908 = vcmp.eq.f32.partialorder %v907, 8.507059e+37
          %v909 = vand.u32 %v842, 2147483648
          %v910 = vor.u32 1.1754944e-38, %v909
          %v911 = vsel %vm908, %v910, %v906
          %v912 = vmul.f32 1.0, %v911
          %v913 = vrcp.pop %v843
          %v914 = vmul.f32 %v843, %v913
          %v915 = vsub.f32 1.0, %v914
          %v916 = vmul.f32 %v913, %v915
          %v917 = vadd.f32 %v913, %v916
          %vm918 = vweird.f32 %v843
          %vm919 = vweird.f32 %v913
          %vm920 = vmor %vm918, %vm919
          %v921 = vsel %vm920, %v913, %v917
          %v922 = vand.u32 2147483647, %v843
          %vm923 = vcmp.eq.f32.partialorder %v922, 8.507059e+37
          %v924 = vand.u32 %v843, 2147483648
          %v925 = vor.u32 1.1754944e-38, %v924
          %v926 = vsel %vm923, %v925, %v921
          %v927 = vmul.f32 1.0, %v926
          %v928 = vrcp.pop %v844
          %v929 = vmul.f32 %v844, %v928
          %v930 = vsub.f32 1.0, %v929
          %v931 = vmul.f32 %v928, %v930
          %v932 = vadd.f32 %v928, %v931
          %vm933 = vweird.f32 %v844
          %vm934 = vweird.f32 %v928
          %vm935 = vmor %vm933, %vm934
          %v936 = vsel %vm935, %v928, %v932
          %v937 = vand.u32 2147483647, %v844
          %vm938 = vcmp.eq.f32.partialorder %v937, 8.507059e+37
          %v939 = vand.u32 %v844, 2147483648
          %v940 = vor.u32 1.1754944e-38, %v939
          %v941 = vsel %vm938, %v940, %v936
          %v942 = vmul.f32 1.0, %v941
          %v943 = vrcp.pop %v845
          %v944 = vmul.f32 %v845, %v943
          %v945 = vsub.f32 1.0, %v944
          %v946 = vmul.f32 %v943, %v945
          %v947 = vadd.f32 %v943, %v946
          %vm948 = vweird.f32 %v845
          %vm949 = vweird.f32 %v943
          %vm950 = vmor %vm948, %vm949
          %v951 = vsel %vm950, %v943, %v947
          %v952 = vand.u32 2147483647, %v845
          %vm953 = vcmp.eq.f32.partialorder %v952, 8.507059e+37
          %v954 = vand.u32 %v845, 2147483648
          %v955 = vor.u32 1.1754944e-38, %v954
          %v956 = vsel %vm953, %v955, %v951
          %v957 = vmul.f32 1.0, %v956
          %v958 = vrcp.pop %v846
          %v959 = vmul.f32 %v846, %v958
          %v960 = vsub.f32 1.0, %v959
          %v961 = vmul.f32 %v958, %v960
          %v962 = vadd.f32 %v958, %v961
          %vm963 = vweird.f32 %v846
          %vm964 = vweird.f32 %v958
          %vm965 = vmor %vm963, %vm964
          %v966 = vsel %vm965, %v958, %v962
          %v967 = vand.u32 2147483647, %v846
          %vm968 = vcmp.eq.f32.partialorder %v967, 8.507059e+37
          %v969 = vand.u32 %v846, 2147483648
          %v970 = vor.u32 1.1754944e-38, %v969
          %v971 = vsel %vm968, %v970, %v966
          %v972 = vmul.f32 1.0, %v971
          %v973 = vrcp.pop %v847
          %v974 = vmul.f32 %v847, %v973
          %v975 = vsub.f32 1.0, %v974
          %v976 = vmul.f32 %v973, %v975
          %v977 = vadd.f32 %v973, %v976
          %vm978 = vweird.f32 %v847
          %vm979 = vweird.f32 %v973
          %vm980 = vmor %vm978, %vm979
          %v981 = vsel %vm980, %v973, %v977
          %v982 = vand.u32 2147483647, %v847
          %vm983 = vcmp.eq.f32.partialorder %v982, 8.507059e+37
          %v984 = vand.u32 %v847, 2147483648
          %v985 = vor.u32 1.1754944e-38, %v984
          %v986 = vsel %vm983, %v985, %v981
          %v987 = vmul.f32 1.0, %v986
          %v988 = vrcp.pop %v848
          %v989 = vmul.f32 %v848, %v988
          %v990 = vsub.f32 1.0, %v989
          %v991 = vmul.f32 %v988, %v990
          %v992 = vadd.f32 %v988, %v991
          %vm993 = vweird.f32 %v848
          %vm994 = vweird.f32 %v988
          %vm995 = vmor %vm993, %vm994
          %v996 = vsel %vm995, %v988, %v992
          %v997 = vand.u32 2147483647, %v848
          %vm998 = vcmp.eq.f32.partialorder %v997, 8.507059e+37
          %v999 = vand.u32 %v848, 2147483648
          %v1000 = vor.u32 1.1754944e-38, %v999
          %v1001 = vsel %vm998, %v1000, %v996
          %v1002 = vmul.f32 1.0, %v1001
          %v1003 = vrcp.pop %v849
          %v1004 = vmul.f32 %v849, %v1003
          %v1005 = vsub.f32 1.0, %v1004
          %v1006 = vmul.f32 %v1003, %v1005
          %v1007 = vadd.f32 %v1003, %v1006
          %vm1008 = vweird.f32 %v849
          %vm1009 = vweird.f32 %v1003
          %vm1010 = vmor %vm1008, %vm1009
          %v1011 = vsel %vm1010, %v1003, %v1007
          %v1012 = vand.u32 2147483647, %v849
          %vm1013 = vcmp.eq.f32.partialorder %v1012, 8.507059e+37
          %v1014 = vand.u32 %v849, 2147483648
          %v1015 = vor.u32 1.1754944e-38, %v1014
          %v1016 = vsel %vm1013, %v1015, %v1011
          %v1017 = vmul.f32 1.0, %v1016
          %v1018 = vrcp.pop %v850
          %v1019 = vmul.f32 %v850, %v1018
          %v1020 = vsub.f32 1.0, %v1019
          %v1021 = vmul.f32 %v1018, %v1020
          %v1022 = vadd.f32 %v1018, %v1021
          %vm1023 = vweird.f32 %v850
          %vm1024 = vweird.f32 %v1018
          %vm1025 = vmor %vm1023, %vm1024
          %v1026 = vsel %vm1025, %v1018, %v1022
          %v1027 = vand.u32 2147483647, %v850
          %vm1028 = vcmp.eq.f32.partialorder %v1027, 8.507059e+37
          %v1029 = vand.u32 %v850, 2147483648
          %v1030 = vor.u32 1.1754944e-38, %v1029
          %v1031 = vsel %vm1028, %v1030, %v1026
          %v1032 = vmul.f32 1.0, %v1031
          %v1033 = vrcp.pop %v851
          %v1034 = vmul.f32 %v851, %v1033
          %v1035 = vsub.f32 1.0, %v1034
          %v1036 = vmul.f32 %v1033, %v1035
          %v1037 = vadd.f32 %v1033, %v1036
          %vm1038 = vweird.f32 %v851
          %vm1039 = vweird.f32 %v1033
          %vm1040 = vmor %vm1038, %vm1039
          %v1041 = vsel %vm1040, %v1033, %v1037
          %v1042 = vand.u32 2147483647, %v851
          %vm1043 = vcmp.eq.f32.partialorder %v1042, 8.507059e+37
          %v1044 = vand.u32 %v851, 2147483648
          %v1045 = vor.u32 1.1754944e-38, %v1044
          %v1046 = vsel %vm1043, %v1045, %v1041
          %v1047 = vmul.f32 1.0, %v1046
          %v1048 = vrcp.pop %v852
          %v1049 = vmul.f32 %v852, %v1048
          %v1050 = vsub.f32 1.0, %v1049
          %v1051 = vmul.f32 %v1048, %v1050
          %v1052 = vadd.f32 %v1048, %v1051
          %vm1053 = vweird.f32 %v852
          %vm1054 = vweird.f32 %v1048
          %vm1055 = vmor %vm1053, %vm1054
          %v1056 = vsel %vm1055, %v1048, %v1052
          %v1057 = vand.u32 2147483647, %v852
          %vm1058 = vcmp.eq.f32.partialorder %v1057, 8.507059e+37
          %v1059 = vand.u32 %v852, 2147483648
          %v1060 = vor.u32 1.1754944e-38, %v1059
          %v1061 = vsel %vm1058, %v1060, %v1056
          %v1062 = vmul.f32 1.0, %v1061
          %v1063 = vtanh.pop %v742
          %v1064 = vtanh.pop %v745
          %v1065 = vtanh.pop %v748
          %v1066 = vtanh.pop %v751
          %v1067 = vtanh.pop %v754
          %v1068 = vtanh.pop %v757
          %v1069 = vtanh.pop %v760
          %v1070 = vtanh.pop %v763
          %v1071 = vtanh.pop %v766
          %v1072 = vtanh.pop %v769
          %v1073 = vtanh.pop %v772
          %v1074 = vtanh.pop %v775
          %v1075 = vtanh.pop %v778
          %v1076 = vtanh.pop %v781
          %v1077 = vmul.f32 %v867, %v1063
          %v1078 = vmul.f32 %v882, %v1064
          %v1079 = vmul.f32 %v897, %v1065
          %v1080 = vmul.f32 %v912, %v1066
          %v1081 = vmul.f32 %v927, %v1067
          %v1082 = vmul.f32 %v942, %v1068
          %v1083 = vmul.f32 %v957, %v1069
          %v1084 = vmul.f32 %v972, %v1070
          %v1085 = vmul.f32 %v987, %v1071
          %v1086 = vmul.f32 %v1002, %v1072
          %v1087 = vmul.f32 %v1017, %v1073
          %v1088 = vmul.f32 %v1032, %v1074
          %v1089 = vmul.f32 %v1047, %v1075
          %v1090 = vmul.f32 %v1062, %v1076
          %v1091 = vadd.f32 %v1077, %v783
          %v1092 = vadd.f32 %v1078, %v784
          %v1093 = vadd.f32 %v1079, %v785
          %v1094 = vadd.f32 %v1080, %v786
          %v1095 = vadd.f32 %v1081, %v787
          %v1096 = vadd.f32 %v1082, %v788
          %v1097 = vadd.f32 %v1083, %v789
          %v1098 = vadd.f32 %v1084, %v790
          %v1099 = vadd.f32 %v1085, %v791
          %v1100 = vadd.f32 %v1086, %v792
          %v1101 = vadd.f32 %v1087, %v793
          %v1102 = vadd.f32 %v1088, %v794
          %v1103 = vadd.f32 %v1089, %v795
          %v1104 = vadd.f32 %v1090, %v796
          %v1105 = vmul.f32 %v1091, %v433
          %v1106 = vmul.f32 %v1092, %v434
          %v1107 = vmul.f32 %v1093, %v435
          %v1108 = vmul.f32 %v1094, %v436
          %v1109 = vmul.f32 %v1095, %v437
          %v1110 = vmul.f32 %v1096, %v438
          %v1111 = vmul.f32 %v1097, %v439
          %v1112 = vmul.f32 %v1098, %v440
          %v1113 = vmul.f32 %v1099, %v441
          %v1114 = vmul.f32 %v1100, %v442
          %v1115 = vmul.f32 %v1101, %v443
          %v1116 = vmul.f32 %v1102, %v444
          %v1117 = vmul.f32 %v1103, %v445
          %v1118 = vmul.f32 %v1104, %v446
          %v1119 = vtanh.pop %v1105
          %v1120 = vtanh.pop %v1106
          %v1121 = vtanh.pop %v1107
          %v1122 = vtanh.pop %v1108
          %v1123 = vtanh.pop %v1109
          %v1124 = vtanh.pop %v1110
          %v1125 = vtanh.pop %v1111
          %v1126 = vtanh.pop %v1112
          %v1127 = vtanh.pop %v1113
          %v1128 = vtanh.pop %v1114
          %v1129 = vtanh.pop %v1115
          %v1130 = vtanh.pop %v1116
          %v1131 = vtanh.pop %v1117
          %v1132 = vtanh.pop %v1118
          %1147 = vrot.lane.b32.xlu0 %v1119, 64
          %v1148 = vpop.permute.xlu0 %1147
          %1149 = vrot.lane.b32.xlu0 %v1120, 64
          %v1150 = vpop.permute.xlu0 %1149
          %1151 = vrot.lane.b32.xlu0 %v1121, 64
          %v1152 = vpop.permute.xlu0 %1151
          %1153 = vrot.lane.b32.xlu0 %v1122, 64
          %v1154 = vpop.permute.xlu0 %1153
          %1155 = vrot.lane.b32.xlu0 %v1123, 64
          %v1156 = vpop.permute.xlu0 %1155
          %1157 = vrot.lane.b32.xlu0 %v1124, 64
          %v1158 = vpop.permute.xlu0 %1157
          %1159 = vrot.lane.b32.xlu0 %v1125, 64
          %v1160 = vpop.permute.xlu0 %1159
          %1161 = vrot.lane.b32.xlu0 %v1126, 64
          %v1162 = vpop.permute.xlu0 %1161
          %1163 = vrot.lane.b32.xlu0 %v1127, 64
          %v1164 = vpop.permute.xlu0 %1163
          %1165 = vrot.lane.b32.xlu0 %v1128, 64
          %v1166 = vpop.permute.xlu0 %1165
          %1167 = vrot.lane.b32.xlu0 %v1129, 64
          %v1168 = vpop.permute.xlu0 %1167
          %1169 = vrot.lane.b32.xlu0 %v1130, 64
          %v1170 = vpop.permute.xlu0 %1169
          %1171 = vrot.lane.b32.xlu0 %v1131, 64
          %v1172 = vpop.permute.xlu0 %1171
          %1173 = vrot.lane.b32.xlu0 %v1132, 64
          %v1174 = vpop.permute.xlu0 %1173
          %v1189 = vmul.f32 %v867, %v1148
          %v1190 = vmul.f32 %v882, %v1150
          %v1191 = vmul.f32 %v897, %v1152
          %v1192 = vmul.f32 %v912, %v1154
          %v1193 = vmul.f32 %v927, %v1156
          %v1194 = vmul.f32 %v942, %v1158
          %v1195 = vmul.f32 %v957, %v1160
          %v1196 = vmul.f32 %v972, %v1162
          %v1197 = vmul.f32 %v987, %v1164
          %v1198 = vmul.f32 %v1002, %v1166
          %v1199 = vmul.f32 %v1017, %v1168
          %v1200 = vmul.f32 %v1032, %v1170
          %v1201 = vmul.f32 %v1047, %v1172
          %v1202 = vmul.f32 %v1062, %v1174
          %v1203 = vld [vmem:[%s6] sm:$0xff]
          %v1204 = vld [vmem:[%s6 + $0x8] sm:$0xff]
          %v1205 = vld [vmem:[%s6 + $0x10] sm:$0xff]
          %v1206 = vld [vmem:[%s6 + $0x18] sm:$0xff]
          %v1207 = vld [vmem:[%s6 + $0x20] sm:$0xff]
          %v1208 = vld [vmem:[%s6 + $0x28] sm:$0xff]
          %v1209 = vld [vmem:[%s6 + $0x30] sm:$0xff]
          %v1210 = vld [vmem:[%s6 + $0x38] sm:$0xff]
          %v1211 = vld [vmem:[%s7] sm:$0x1]
          %v1213 = vperm.slane %v1211, 0
          %1229 = vrot.lane.b32.xlu0 %v1189, 64
          %v1230 = vpop.permute.xlu0 %1229
          %1231 = vrot.lane.b32.xlu0 %v1190, 64
          %v1232 = vpop.permute.xlu0 %1231
          %1233 = vrot.lane.b32.xlu0 %v1191, 64
          %v1234 = vpop.permute.xlu0 %1233
          %1235 = vrot.lane.b32.xlu0 %v1192, 64
          %v1236 = vpop.permute.xlu0 %1235
          %1237 = vrot.lane.b32.xlu0 %v1193, 64
          %v1238 = vpop.permute.xlu0 %1237
          %1239 = vrot.lane.b32.xlu0 %v1194, 64
          %v1240 = vpop.permute.xlu0 %1239
          %1241 = vrot.lane.b32.xlu0 %v1195, 64
          %v1242 = vpop.permute.xlu0 %1241
          %1243 = vrot.lane.b32.xlu0 %v1196, 64
          %v1244 = vpop.permute.xlu0 %1243
          %1245 = vrot.lane.b32.xlu0 %v1197, 64
          %v1246 = vpop.permute.xlu0 %1245
          %1247 = vrot.lane.b32.xlu0 %v1198, 64
          %v1248 = vpop.permute.xlu0 %1247
          %1249 = vrot.lane.b32.xlu0 %v1199, 64
          %v1250 = vpop.permute.xlu0 %1249
          %1251 = vrot.lane.b32.xlu0 %v1200, 64
          %v1252 = vpop.permute.xlu0 %1251
          %1253 = vrot.lane.b32.xlu0 %v1201, 64
          %v1254 = vpop.permute.xlu0 %1253
          %1255 = vrot.lane.b32.xlu0 %v1202, 64
          %v1256 = vpop.permute.xlu0 %1255
          %v1257 = vsel %vm501, %v1230, 0
          %v1259 = vsel %vm501, %v1232, 0
          %v1261 = vsel %vm501, %v1234, 0
          %v1263 = vsel %vm501, %v1236, 0
          %v1265 = vsel %vm501, %v1238, 0
          %v1267 = vsel %vm501, %v1240, 0
          %v1269 = vsel %vm501, %v1242, 0
          %v1271 = vsel %vm501, %v1244, 0
          %v1273 = vsel %vm501, %v1246, 0
          %v1275 = vsel %vm501, %v1248, 0
          %v1277 = vsel %vm501, %v1250, 0
          %v1279 = vsel %vm501, %v1252, 0
          %v1281 = vsel %vm501, %v1254, 0
          %v1283 = vsel %vm501, %v1256, 0
          %1285 = vmatpush.msra.mxu0 0.0
          %1286 = vmatpush.msra.mxu0 0.0
          %1287 = vmatpush.msra.mxu0 0.0
          %1288 = vmatpush.msra.mxu0 0.0
          %1289 = vmatpush.msra.mxu0 0.0
          %1290 = vmatpush.msra.mxu0 0.0
          %1291 = vmatpush.msra.mxu0 0.0
          %1292 = vmatpush.msra.mxu0 0.0
          %1293 = vmatpush.msra.mxu0 %v1210
          %1294 = vmatpush.msra.mxu0 %v1209
          %1295 = vmatpush.msra.mxu0 %v1208
          %1296 = vmatpush.msra.mxu0 %v1207
          %1297 = vmatpush.msra.mxu0 %v1206
          %1298 = vmatpush.msra.mxu0 %v1205
          %1299 = vmatpush.msra.mxu0 %v1204
          %1300 = vmatpush.msra.mxu0 %v1203
          %1301 = vmatmul.f32.gmra.mxu0 %v1257
          %v1302 = vpop.f32.mrf.mxu0
          %v1303 = vadd.f32 %v1213, %v1302
          %1304 = vmatmul.f32.gmra.mxu0 %v1259
          %v1305 = vpop.f32.mrf.mxu0
          %v1306 = vadd.f32 %v1213, %v1305
          %1307 = vmatmul.f32.gmra.mxu0 %v1261
          %v1308 = vpop.f32.mrf.mxu0
          %v1309 = vadd.f32 %v1213, %v1308
          %1310 = vmatmul.f32.gmra.mxu0 %v1263
          %v1311 = vpop.f32.mrf.mxu0
          %v1312 = vadd.f32 %v1213, %v1311
          %1313 = vmatmul.f32.gmra.mxu0 %v1265
          %v1314 = vpop.f32.mrf.mxu0
          %v1315 = vadd.f32 %v1213, %v1314
          %1316 = vmatmul.f32.gmra.mxu0 %v1267
          %v1317 = vpop.f32.mrf.mxu0
          %v1318 = vadd.f32 %v1213, %v1317
          %1319 = vmatmul.f32.gmra.mxu0 %v1269
          %v1320 = vpop.f32.mrf.mxu0
          %v1321 = vadd.f32 %v1213, %v1320
          %1322 = vmatmul.f32.gmra.mxu0 %v1271
          %v1323 = vpop.f32.mrf.mxu0
          %v1324 = vadd.f32 %v1213, %v1323
          %1325 = vmatmul.f32.gmra.mxu0 %v1273
          %v1326 = vpop.f32.mrf.mxu0
          %v1327 = vadd.f32 %v1213, %v1326
          %1328 = vmatmul.f32.gmra.mxu0 %v1275
          %v1329 = vpop.f32.mrf.mxu0
          %v1330 = vadd.f32 %v1213, %v1329
          %1331 = vmatmul.f32.gmra.mxu0 %v1277
          %v1332 = vpop.f32.mrf.mxu0
          %v1333 = vadd.f32 %v1213, %v1332
          %1334 = vmatmul.f32.gmra.mxu0 %v1279
          %v1335 = vpop.f32.mrf.mxu0
          %v1336 = vadd.f32 %v1213, %v1335
          %1337 = vmatmul.f32.gmra.mxu0 %v1281
          %v1338 = vpop.f32.mrf.mxu0
          %v1339 = vadd.f32 %v1213, %v1338
          %1340 = vmatmul.f32.gmra.mxu0 %v1283
          %v1341 = vpop.f32.mrf.mxu0
          %v1342 = vadd.f32 %v1213, %v1341
          %1343 = vdwg.mxu0
          %v1344 = vxor.u32 %v1303, 2147483648
          %v1345 = vxor.u32 %v1306, 2147483648
          %v1346 = vxor.u32 %v1309, 2147483648
          %v1347 = vxor.u32 %v1312, 2147483648
          %v1348 = vxor.u32 %v1315, 2147483648
          %v1349 = vxor.u32 %v1318, 2147483648
          %v1350 = vxor.u32 %v1321, 2147483648
          %v1351 = vxor.u32 %v1324, 2147483648
          %v1352 = vxor.u32 %v1327, 2147483648
          %v1353 = vxor.u32 %v1330, 2147483648
          %v1354 = vxor.u32 %v1333, 2147483648
          %v1355 = vxor.u32 %v1336, 2147483648
          %v1356 = vxor.u32 %v1339, 2147483648
          %v1357 = vxor.u32 %v1342, 2147483648
          %v1358 = vmul.f32 %v1344, 1.442695
          %v1359 = vpow.pop %v1358
          %v1360 = vmul.f32 %v1345, 1.442695
          %v1361 = vpow.pop %v1360
          %v1362 = vmul.f32 %v1346, 1.442695
          %v1363 = vpow.pop %v1362
          %v1364 = vmul.f32 %v1347, 1.442695
          %v1365 = vpow.pop %v1364
          %v1366 = vmul.f32 %v1348, 1.442695
          %v1367 = vpow.pop %v1366
          %v1368 = vmul.f32 %v1349, 1.442695
          %v1369 = vpow.pop %v1368
          %v1370 = vmul.f32 %v1350, 1.442695
          %v1371 = vpow.pop %v1370
          %v1372 = vmul.f32 %v1351, 1.442695
          %v1373 = vpow.pop %v1372
          %v1374 = vmul.f32 %v1352, 1.442695
          %v1375 = vpow.pop %v1374
          %v1376 = vmul.f32 %v1353, 1.442695
          %v1377 = vpow.pop %v1376
          %v1378 = vmul.f32 %v1354, 1.442695
          %v1379 = vpow.pop %v1378
          %v1380 = vmul.f32 %v1355, 1.442695
          %v1381 = vpow.pop %v1380
          %v1382 = vmul.f32 %v1356, 1.442695
          %v1383 = vpow.pop %v1382
          %v1384 = vmul.f32 %v1357, 1.442695
          %v1385 = vpow.pop %v1384
          %v1386 = vadd.f32 %v1359, 1.0
          %v1387 = vadd.f32 %v1361, 1.0
          %v1388 = vadd.f32 %v1363, 1.0
          %v1389 = vadd.f32 %v1365, 1.0
          %v1390 = vadd.f32 %v1367, 1.0
          %v1391 = vadd.f32 %v1369, 1.0
          %v1392 = vadd.f32 %v1371, 1.0
          %v1393 = vadd.f32 %v1373, 1.0
          %v1394 = vadd.f32 %v1375, 1.0
          %v1395 = vadd.f32 %v1377, 1.0
          %v1396 = vadd.f32 %v1379, 1.0
          %v1397 = vadd.f32 %v1381, 1.0
          %v1398 = vadd.f32 %v1383, 1.0
          %v1399 = vadd.f32 %v1385, 1.0
          %v1400 = vrcp.pop %v1386
          %v1401 = vmul.f32 %v1386, %v1400
          %v1402 = vsub.f32 1.0, %v1401
          %v1403 = vmul.f32 %v1400, %v1402
          %v1404 = vadd.f32 %v1400, %v1403
          %vm1405 = vweird.f32 %v1386
          %vm1406 = vweird.f32 %v1400
          %vm1407 = vmor %vm1405, %vm1406
          %v1408 = vsel %vm1407, %v1400, %v1404
          %v1409 = vand.u32 2147483647, %v1386
          %vm1410 = vcmp.eq.f32.partialorder %v1409, 8.507059e+37
          %v1411 = vand.u32 %v1386, 2147483648
          %v1412 = vor.u32 1.1754944e-38, %v1411
          %v1413 = vsel %vm1410, %v1412, %v1408
          %v1414 = vmul.f32 1.0, %v1413
          %v1415 = vrcp.pop %v1387
          %v1416 = vmul.f32 %v1387, %v1415
          %v1417 = vsub.f32 1.0, %v1416
          %v1418 = vmul.f32 %v1415, %v1417
          %v1419 = vadd.f32 %v1415, %v1418
          %vm1420 = vweird.f32 %v1387
          %vm1421 = vweird.f32 %v1415
          %vm1422 = vmor %vm1420, %vm1421
          %v1423 = vsel %vm1422, %v1415, %v1419
          %v1424 = vand.u32 2147483647, %v1387
          %vm1425 = vcmp.eq.f32.partialorder %v1424, 8.507059e+37
          %v1426 = vand.u32 %v1387, 2147483648
          %v1427 = vor.u32 1.1754944e-38, %v1426
          %v1428 = vsel %vm1425, %v1427, %v1423
          %v1429 = vmul.f32 1.0, %v1428
          %v1430 = vrcp.pop %v1388
          %v1431 = vmul.f32 %v1388, %v1430
          %v1432 = vsub.f32 1.0, %v1431
          %v1433 = vmul.f32 %v1430, %v1432
          %v1434 = vadd.f32 %v1430, %v1433
          %vm1435 = vweird.f32 %v1388
          %vm1436 = vweird.f32 %v1430
          %vm1437 = vmor %vm1435, %vm1436
          %v1438 = vsel %vm1437, %v1430, %v1434
          %v1439 = vand.u32 2147483647, %v1388
          %vm1440 = vcmp.eq.f32.partialorder %v1439, 8.507059e+37
          %v1441 = vand.u32 %v1388, 2147483648
          %v1442 = vor.u32 1.1754944e-38, %v1441
          %v1443 = vsel %vm1440, %v1442, %v1438
          %v1444 = vmul.f32 1.0, %v1443
          %v1445 = vrcp.pop %v1389
          %v1446 = vmul.f32 %v1389, %v1445
          %v1447 = vsub.f32 1.0, %v1446
          %v1448 = vmul.f32 %v1445, %v1447
          %v1449 = vadd.f32 %v1445, %v1448
          %vm1450 = vweird.f32 %v1389
          %vm1451 = vweird.f32 %v1445
          %vm1452 = vmor %vm1450, %vm1451
          %v1453 = vsel %vm1452, %v1445, %v1449
          %v1454 = vand.u32 2147483647, %v1389
          %vm1455 = vcmp.eq.f32.partialorder %v1454, 8.507059e+37
          %v1456 = vand.u32 %v1389, 2147483648
          %v1457 = vor.u32 1.1754944e-38, %v1456
          %v1458 = vsel %vm1455, %v1457, %v1453
          %v1459 = vmul.f32 1.0, %v1458
          %v1460 = vrcp.pop %v1390
          %v1461 = vmul.f32 %v1390, %v1460
          %v1462 = vsub.f32 1.0, %v1461
          %v1463 = vmul.f32 %v1460, %v1462
          %v1464 = vadd.f32 %v1460, %v1463
          %vm1465 = vweird.f32 %v1390
          %vm1466 = vweird.f32 %v1460
          %vm1467 = vmor %vm1465, %vm1466
          %v1468 = vsel %vm1467, %v1460, %v1464
          %v1469 = vand.u32 2147483647, %v1390
          %vm1470 = vcmp.eq.f32.partialorder %v1469, 8.507059e+37
          %v1471 = vand.u32 %v1390, 2147483648
          %v1472 = vor.u32 1.1754944e-38, %v1471
          %v1473 = vsel %vm1470, %v1472, %v1468
          %v1474 = vmul.f32 1.0, %v1473
          %v1475 = vrcp.pop %v1391
          %v1476 = vmul.f32 %v1391, %v1475
          %v1477 = vsub.f32 1.0, %v1476
          %v1478 = vmul.f32 %v1475, %v1477
          %v1479 = vadd.f32 %v1475, %v1478
          %vm1480 = vweird.f32 %v1391
          %vm1481 = vweird.f32 %v1475
          %vm1482 = vmor %vm1480, %vm1481
          %v1483 = vsel %vm1482, %v1475, %v1479
          %v1484 = vand.u32 2147483647, %v1391
          %vm1485 = vcmp.eq.f32.partialorder %v1484, 8.507059e+37
          %v1486 = vand.u32 %v1391, 2147483648
          %v1487 = vor.u32 1.1754944e-38, %v1486
          %v1488 = vsel %vm1485, %v1487, %v1483
          %v1489 = vmul.f32 1.0, %v1488
          %v1490 = vrcp.pop %v1392
          %v1491 = vmul.f32 %v1392, %v1490
          %v1492 = vsub.f32 1.0, %v1491
          %v1493 = vmul.f32 %v1490, %v1492
          %v1494 = vadd.f32 %v1490, %v1493
          %vm1495 = vweird.f32 %v1392
          %vm1496 = vweird.f32 %v1490
          %vm1497 = vmor %vm1495, %vm1496
          %v1498 = vsel %vm1497, %v1490, %v1494
          %v1499 = vand.u32 2147483647, %v1392
          %vm1500 = vcmp.eq.f32.partialorder %v1499, 8.507059e+37
          %v1501 = vand.u32 %v1392, 2147483648
          %v1502 = vor.u32 1.1754944e-38, %v1501
          %v1503 = vsel %vm1500, %v1502, %v1498
          %v1504 = vmul.f32 1.0, %v1503
          %v1505 = vrcp.pop %v1393
          %v1506 = vmul.f32 %v1393, %v1505
          %v1507 = vsub.f32 1.0, %v1506
          %v1508 = vmul.f32 %v1505, %v1507
          %v1509 = vadd.f32 %v1505, %v1508
          %vm1510 = vweird.f32 %v1393
          %vm1511 = vweird.f32 %v1505
          %vm1512 = vmor %vm1510, %vm1511
          %v1513 = vsel %vm1512, %v1505, %v1509
          %v1514 = vand.u32 2147483647, %v1393
          %vm1515 = vcmp.eq.f32.partialorder %v1514, 8.507059e+37
          %v1516 = vand.u32 %v1393, 2147483648
          %v1517 = vor.u32 1.1754944e-38, %v1516
          %v1518 = vsel %vm1515, %v1517, %v1513
          %v1519 = vmul.f32 1.0, %v1518
          %v1520 = vrcp.pop %v1394
          %v1521 = vmul.f32 %v1394, %v1520
          %v1522 = vsub.f32 1.0, %v1521
          %v1523 = vmul.f32 %v1520, %v1522
          %v1524 = vadd.f32 %v1520, %v1523
          %vm1525 = vweird.f32 %v1394
          %vm1526 = vweird.f32 %v1520
          %vm1527 = vmor %vm1525, %vm1526
          %v1528 = vsel %vm1527, %v1520, %v1524
          %v1529 = vand.u32 2147483647, %v1394
          %vm1530 = vcmp.eq.f32.partialorder %v1529, 8.507059e+37
          %v1531 = vand.u32 %v1394, 2147483648
          %v1532 = vor.u32 1.1754944e-38, %v1531
          %v1533 = vsel %vm1530, %v1532, %v1528
          %v1534 = vmul.f32 1.0, %v1533
          %v1535 = vrcp.pop %v1395
          %v1536 = vmul.f32 %v1395, %v1535
          %v1537 = vsub.f32 1.0, %v1536
          %v1538 = vmul.f32 %v1535, %v1537
          %v1539 = vadd.f32 %v1535, %v1538
          %vm1540 = vweird.f32 %v1395
          %vm1541 = vweird.f32 %v1535
          %vm1542 = vmor %vm1540, %vm1541
          %v1543 = vsel %vm1542, %v1535, %v1539
          %v1544 = vand.u32 2147483647, %v1395
          %vm1545 = vcmp.eq.f32.partialorder %v1544, 8.507059e+37
          %v1546 = vand.u32 %v1395, 2147483648
          %v1547 = vor.u32 1.1754944e-38, %v1546
          %v1548 = vsel %vm1545, %v1547, %v1543
          %v1549 = vmul.f32 1.0, %v1548
          %v1550 = vrcp.pop %v1396
          %v1551 = vmul.f32 %v1396, %v1550
          %v1552 = vsub.f32 1.0, %v1551
          %v1553 = vmul.f32 %v1550, %v1552
          %v1554 = vadd.f32 %v1550, %v1553
          %vm1555 = vweird.f32 %v1396
          %vm1556 = vweird.f32 %v1550
          %vm1557 = vmor %vm1555, %vm1556
          %v1558 = vsel %vm1557, %v1550, %v1554
          %v1559 = vand.u32 2147483647, %v1396
          %vm1560 = vcmp.eq.f32.partialorder %v1559, 8.507059e+37
          %v1561 = vand.u32 %v1396, 2147483648
          %v1562 = vor.u32 1.1754944e-38, %v1561
          %v1563 = vsel %vm1560, %v1562, %v1558
          %v1564 = vmul.f32 1.0, %v1563
          %v1565 = vrcp.pop %v1397
          %v1566 = vmul.f32 %v1397, %v1565
          %v1567 = vsub.f32 1.0, %v1566
          %v1568 = vmul.f32 %v1565, %v1567
          %v1569 = vadd.f32 %v1565, %v1568
          %vm1570 = vweird.f32 %v1397
          %vm1571 = vweird.f32 %v1565
          %vm1572 = vmor %vm1570, %vm1571
          %v1573 = vsel %vm1572, %v1565, %v1569
          %v1574 = vand.u32 2147483647, %v1397
          %vm1575 = vcmp.eq.f32.partialorder %v1574, 8.507059e+37
          %v1576 = vand.u32 %v1397, 2147483648
          %v1577 = vor.u32 1.1754944e-38, %v1576
          %v1578 = vsel %vm1575, %v1577, %v1573
          %v1579 = vmul.f32 1.0, %v1578
          %v1580 = vrcp.pop %v1398
          %v1581 = vmul.f32 %v1398, %v1580
          %v1582 = vsub.f32 1.0, %v1581
          %v1583 = vmul.f32 %v1580, %v1582
          %v1584 = vadd.f32 %v1580, %v1583
          %vm1585 = vweird.f32 %v1398
          %vm1586 = vweird.f32 %v1580
          %vm1587 = vmor %vm1585, %vm1586
          %v1588 = vsel %vm1587, %v1580, %v1584
          %v1589 = vand.u32 2147483647, %v1398
          %vm1590 = vcmp.eq.f32.partialorder %v1589, 8.507059e+37
          %v1591 = vand.u32 %v1398, 2147483648
          %v1592 = vor.u32 1.1754944e-38, %v1591
          %v1593 = vsel %vm1590, %v1592, %v1588
          %v1594 = vmul.f32 1.0, %v1593
          %v1595 = vrcp.pop %v1399
          %v1596 = vmul.f32 %v1399, %v1595
          %v1597 = vsub.f32 1.0, %v1596
          %v1598 = vmul.f32 %v1595, %v1597
          %v1599 = vadd.f32 %v1595, %v1598
          %vm1600 = vweird.f32 %v1399
          %vm1601 = vweird.f32 %v1595
          %vm1602 = vmor %vm1600, %vm1601
          %v1603 = vsel %vm1602, %v1595, %v1599
          %v1604 = vand.u32 2147483647, %v1399
          %vm1605 = vcmp.eq.f32.partialorder %v1604, 8.507059e+37
          %v1606 = vand.u32 %v1399, 2147483648
          %v1607 = vor.u32 1.1754944e-38, %v1606
          %v1608 = vsel %vm1605, %v1607, %v1603
          %v1609 = vmul.f32 1.0, %v1608
          %v1610 = vmul.f32 %v1414, %v1105
          %v1611 = vmul.f32 %v1429, %v1106
          %v1612 = vmul.f32 %v1444, %v1107
          %v1613 = vmul.f32 %v1459, %v1108
          %v1614 = vmul.f32 %v1474, %v1109
          %v1615 = vmul.f32 %v1489, %v1110
          %v1616 = vmul.f32 %v1504, %v1111
          %v1617 = vmul.f32 %v1519, %v1112
          %v1618 = vmul.f32 %v1534, %v1113
          %v1619 = vmul.f32 %v1549, %v1114
          %v1620 = vmul.f32 %v1564, %v1115
          %v1621 = vmul.f32 %v1579, %v1116
          %v1622 = vmul.f32 %v1594, %v1117
          %v1623 = vmul.f32 %v1609, %v1118
          %1652 = vrot.lane.b32.xlu0 %v1610, 64
          %v1653 = vpop.permute.xlu0 %1652
          %1654 = vrot.lane.b32.xlu0 %v1611, 64
          %v1655 = vpop.permute.xlu0 %1654
          %1656 = vrot.lane.b32.xlu0 %v1612, 64
          %v1657 = vpop.permute.xlu0 %1656
          %1658 = vrot.lane.b32.xlu0 %v1613, 64
          %v1659 = vpop.permute.xlu0 %1658
          %1660 = vrot.lane.b32.xlu0 %v1614, 64
          %v1661 = vpop.permute.xlu0 %1660
          %1662 = vrot.lane.b32.xlu0 %v1615, 64
          %v1663 = vpop.permute.xlu0 %1662
          %1664 = vrot.lane.b32.xlu0 %v1616, 64
          %v1665 = vpop.permute.xlu0 %1664
          %1666 = vrot.lane.b32.xlu0 %v1617, 64
          %v1667 = vpop.permute.xlu0 %1666
          %1668 = vrot.lane.b32.xlu0 %v1618, 64
          %v1669 = vpop.permute.xlu0 %1668
          %1670 = vrot.lane.b32.xlu0 %v1619, 64
          %v1671 = vpop.permute.xlu0 %1670
          %1672 = vrot.lane.b32.xlu0 %v1620, 64
          %v1673 = vpop.permute.xlu0 %1672
          %1674 = vrot.lane.b32.xlu0 %v1621, 64
          %v1675 = vpop.permute.xlu0 %1674
          %1676 = vrot.lane.b32.xlu0 %v1622, 64
          %v1677 = vpop.permute.xlu0 %1676
          %1678 = vrot.lane.b32.xlu0 %v1623, 64
          %v1679 = vpop.permute.xlu0 %1678
          %v1694 = vsel %vm501, %v1230, %v1653
          %v1695 = vsel %vm501, %v1232, %v1655
          %v1696 = vsel %vm501, %v1234, %v1657
          %v1697 = vsel %vm501, %v1236, %v1659
          %v1698 = vsel %vm501, %v1238, %v1661
          %v1699 = vsel %vm501, %v1240, %v1663
          %v1700 = vsel %vm501, %v1242, %v1665
          %v1701 = vsel %vm501, %v1244, %v1667
          %v1702 = vsel %vm501, %v1246, %v1669
          %v1703 = vsel %vm501, %v1248, %v1671
          %v1704 = vsel %vm501, %v1250, %v1673
          %v1705 = vsel %vm501, %v1252, %v1675
          %v1706 = vsel %vm501, %v1254, %v1677
          %v1707 = vsel %vm501, %v1256, %v1679
          %v1708 = vpack.c.bf16 %v1694, %v1694
          %v1709 = vpack.c.bf16 %v1695, %v1695
          %v1710 = vpack.c.bf16 %v1696, %v1696
          %v1711 = vpack.c.bf16 %v1697, %v1697
          %v1712 = vpack.c.bf16 %v1698, %v1698
          %v1713 = vpack.c.bf16 %v1699, %v1699
          %v1714 = vpack.c.bf16 %v1700, %v1700
          %v1715 = vpack.c.bf16 %v1701, %v1701
          %v1716 = vpack.c.bf16 %v1702, %v1702
          %v1717 = vpack.c.bf16 %v1703, %v1703
          %v1718 = vpack.c.bf16 %v1704, %v1704
          %v1719 = vpack.c.bf16 %v1705, %v1705
          %v1720 = vpack.c.bf16 %v1706, %v1706
          %v1721 = vpack.c.bf16 %v1707, %v1707
          %s1722 = sshra.s32 %s386, 3
          %s1723 = sand.u32 %s386, 7
          %s1724 = smul.addr %s1722, 4
          %s1725 = scalar_lea.vmem [#allocation2], %s1724
          %1726 = vst [vmem:[%s1725] sm:$0xf] %v1708
          %1727 = vst [vmem:[%s1725 + $0x4] sm:$0xf] %v1709
          %1728 = vst [vmem:[%s1725 + $0x8] sm:$0xf] %v1710
          %1729 = vst [vmem:[%s1725 + $0xc] sm:$0xf] %v1711
          %1730 = vst [vmem:[%s1725 + $0x10] sm:$0xf] %v1712
          %1731 = vst [vmem:[%s1725 + $0x14] sm:$0xf] %v1713
          %1732 = vst [vmem:[%s1725 + $0x18] sm:$0xf] %v1714
          %1733 = vst [vmem:[%s1725 + $0x1c] sm:$0xf] %v1715
          %1734 = vst [vmem:[%s1725 + $0x20] sm:$0xf] %v1716
          %1735 = vst [vmem:[%s1725 + $0x24] sm:$0xf] %v1717
          %1736 = vst [vmem:[%s1725 + $0x28] sm:$0xf] %v1718
          %1737 = vst [vmem:[%s1725 + $0x2c] sm:$0xf] %v1719
          %1738 = vst [vmem:[%s1725 + $0x30] sm:$0xf] %v1720
          %1739 = vst [vmem:[%s1725 + $0x34] sm:$0xf] %v1721
          %s1740 = scalar_lea.vmem %s9, %s386
          %1741 = vst.msk [vmem:[%s1740] sm:$0xff] %vm501, %v1230
          %1742 = vst.msk [vmem:[%s1740 + $0x8] sm:$0xff] %vm501, %v1232
          %1743 = vst.msk [vmem:[%s1740 + $0x10] sm:$0xff] %vm501, %v1234
          %1744 = vst.msk [vmem:[%s1740 + $0x18] sm:$0xff] %vm501, %v1236
          %1745 = vst.msk [vmem:[%s1740 + $0x20] sm:$0xff] %vm501, %v1238
          %1746 = vst.msk [vmem:[%s1740 + $0x28] sm:$0xff] %vm501, %v1240
          %1747 = vst.msk [vmem:[%s1740 + $0x30] sm:$0xff] %vm501, %v1242
          %1748 = vst.msk [vmem:[%s1740 + $0x38] sm:$0xff] %vm501, %v1244
          %1749 = vst.msk [vmem:[%s1740 + $0x40] sm:$0xff] %vm501, %v1246
          %1750 = vst.msk [vmem:[%s1740 + $0x48] sm:$0xff] %vm501, %v1248
          %1751 = vst.msk [vmem:[%s1740 + $0x50] sm:$0xff] %vm501, %v1250
          %1752 = vst.msk [vmem:[%s1740 + $0x58] sm:$0xff] %vm501, %v1252
          %1753 = vst.msk [vmem:[%s1740 + $0x60] sm:$0xff] %vm501, %v1254
          %1754 = vst.msk [vmem:[%s1740 + $0x68] sm:$0xff] %vm501, %v1256
          %s1755 = scalar_lea.vmem %s10, %s386
          %1756 = vst.msk [vmem:[%s1755] sm:$0xff] %vm501, %v1105
          %1757 = vst.msk [vmem:[%s1755 + $0x8] sm:$0xff] %vm501, %v1106
          %1758 = vst.msk [vmem:[%s1755 + $0x10] sm:$0xff] %vm501, %v1107
          %1759 = vst.msk [vmem:[%s1755 + $0x18] sm:$0xff] %vm501, %v1108
          %1760 = vst.msk [vmem:[%s1755 + $0x20] sm:$0xff] %vm501, %v1109
          %1761 = vst.msk [vmem:[%s1755 + $0x28] sm:$0xff] %vm501, %v1110
          %1762 = vst.msk [vmem:[%s1755 + $0x30] sm:$0xff] %vm501, %v1111
          %1763 = vst.msk [vmem:[%s1755 + $0x38] sm:$0xff] %vm501, %v1112
          %1764 = vst.msk [vmem:[%s1755 + $0x40] sm:$0xff] %vm501, %v1113
          %1765 = vst.msk [vmem:[%s1755 + $0x48] sm:$0xff] %vm501, %v1114
          %1766 = vst.msk [vmem:[%s1755 + $0x50] sm:$0xff] %vm501, %v1115
          %1767 = vst.msk [vmem:[%s1755 + $0x58] sm:$0xff] %vm501, %v1116
          %1768 = vst.msk [vmem:[%s1755 + $0x60] sm:$0xff] %vm501, %v1117
          %1769 = vst.msk [vmem:[%s1755 + $0x68] sm:$0xff] %vm501, %v1118
        $region60: #{tpu_custom_call.1} parent=51 // pred_fallthru
          _
        %p1770 = scmp.gt.s32.totalorder %s37, 0
        // Predicated region
        $region61: #{tpu_custom_call.1} parent=51 // pred_check
          %p1771 = pneg %p1770
        $region62: #{tpu_custom_call.1} parent=51 // pred_check_branch
          %1773 = sbr.rel (%p1771) target = $region64
        $region63: #{tpu_custom_call.1} parent=51 // pred_region
          // Predicated region
          $region65: #{tpu_custom_call.1} parent=63 // pred_check
            %p1774 = pneg %p448
          $region66: #{tpu_custom_call.1} parent=63 // pred_check_branch
            %1776 = sbr.rel (%p1774) target = $region68
          $region67: #{tpu_custom_call.1} parent=63 // pred_region
            %1777 = vst [vmem:[#allocation3] sm:$0xff] 0.0
            %1778 = vst [vmem:[#allocation3 + $0x8] sm:$0xff] 0.0
            %1779 = vst [vmem:[#allocation3 + $0x10] sm:$0xff] 0.0
            %1780 = vst [vmem:[#allocation3 + $0x18] sm:$0xff] 0.0
            %1781 = vst [vmem:[#allocation3 + $0x20] sm:$0xff] 0.0
            %1782 = vst [vmem:[#allocation3 + $0x28] sm:$0xff] 0.0
            %1783 = vst [vmem:[#allocation3 + $0x30] sm:$0xff] 0.0
            %1784 = vst [vmem:[#allocation3 + $0x38] sm:$0xff] 0.0
            %1785 = vst [vmem:[#allocation3 + $0x40] sm:$0xff] 0.0
            %1786 = vst [vmem:[#allocation3 + $0x48] sm:$0xff] 0.0
            %1787 = vst [vmem:[#allocation3 + $0x50] sm:$0xff] 0.0
            %1788 = vst [vmem:[#allocation3 + $0x58] sm:$0xff] 0.0
            %1789 = vst [vmem:[#allocation3 + $0x60] sm:$0xff] 0.0
            %1790 = vst [vmem:[#allocation3 + $0x68] sm:$0xff] 0.0
          $region68: #{tpu_custom_call.1} parent=63 // pred_fallthru
            _
          %s1791 = smul.u32 %s38, 128
          %p1792 = scmp.lt.s32.totalorder %s1791, %s386
          // Predicated region
          $region69: #{tpu_custom_call.1} parent=63 // pred_check
            %p1793 = pneg %p1792
          $region70: #{tpu_custom_call.1} parent=63 // pred_check_branch
            %1795 = sbr.rel (%p1793) target = $region72
          $region71: #{tpu_custom_call.1} parent=63 // pred_region
            %v1796 = vld [vmem:[#allocation3] sm:$0xff]
            %v1797 = vld [vmem:[#allocation3 + $0x8] sm:$0xff]
            %v1798 = vld [vmem:[#allocation3 + $0x10] sm:$0xff]
            %v1799 = vld [vmem:[#allocation3 + $0x18] sm:$0xff]
            %v1800 = vld [vmem:[#allocation3 + $0x20] sm:$0xff]
            %v1801 = vld [vmem:[#allocation3 + $0x28] sm:$0xff]
            %v1802 = vld [vmem:[#allocation3 + $0x30] sm:$0xff]
            %v1803 = vld [vmem:[#allocation3 + $0x38] sm:$0xff]
            %v1804 = vld [vmem:[#allocation3 + $0x40] sm:$0xff]
            %v1805 = vld [vmem:[#allocation3 + $0x48] sm:$0xff]
            %v1806 = vld [vmem:[#allocation3 + $0x50] sm:$0xff]
            %v1807 = vld [vmem:[#allocation3 + $0x58] sm:$0xff]
            %v1808 = vld [vmem:[#allocation3 + $0x60] sm:$0xff]
            %v1809 = vld [vmem:[#allocation3 + $0x68] sm:$0xff]
            %v1810 = vld [vmem:[%s347] sm:$0xf]
            %v1811 = vld [vmem:[%s347 + $0x4] sm:$0xf]
            %v1812 = vld [vmem:[%s347 + $0x8] sm:$0xf]
            %v1813 = vld [vmem:[%s347 + $0xc] sm:$0xf]
            %v1814 = vld [vmem:[%s347 + $0x10] sm:$0xf]
            %v1815 = vld [vmem:[%s347 + $0x14] sm:$0xf]
            %v1816 = vld [vmem:[%s347 + $0x18] sm:$0xf]
            %v1817 = vld [vmem:[%s347 + $0x1c] sm:$0xf]
            %v1818 = vld [vmem:[%s347 + $0x20] sm:$0xf]
            %v1819 = vld [vmem:[%s347 + $0x24] sm:$0xf]
            %v1820 = vld [vmem:[%s347 + $0x28] sm:$0xf]
            %v1821 = vld [vmem:[%s347 + $0x2c] sm:$0xf]
            %v1822 = vld [vmem:[%s347 + $0x30] sm:$0xf]
            %v1823 = vld [vmem:[%s347 + $0x34] sm:$0xf]
            %s1824 = sshra.s32 %s1791, 3
            %s1825 = sand.u32 %s1791, 7
            %s1826 = smul.addr %s1824, 4
            %s1827 = scalar_lea.vmem [#allocation2], %s1826
            %v1828 = vld [vmem:[%s1827] sm:$0xf]
            %v1829 = vld [vmem:[%s1827 + $0x4] sm:$0xf]
            %v1830 = vld [vmem:[%s1827 + $0x8] sm:$0xf]
            %v1831 = vld [vmem:[%s1827 + $0xc] sm:$0xf]
            %v1832 = vld [vmem:[%s1827 + $0x10] sm:$0xf]
            %v1833 = vld [vmem:[%s1827 + $0x14] sm:$0xf]
            %v1834 = vld [vmem:[%s1827 + $0x18] sm:$0xf]
            %v1835 = vld [vmem:[%s1827 + $0x1c] sm:$0xf]
            %v1836 = vld [vmem:[%s1827 + $0x20] sm:$0xf]
            %v1837 = vld [vmem:[%s1827 + $0x24] sm:$0xf]
            %v1838 = vld [vmem:[%s1827 + $0x28] sm:$0xf]
            %v1839 = vld [vmem:[%s1827 + $0x2c] sm:$0xf]
            %v1840 = vld [vmem:[%s1827 + $0x30] sm:$0xf]
            %v1841 = vld [vmem:[%s1827 + $0x34] sm:$0xf]
            %v1842 = vld [vmem:[%s1827 + $0x38] sm:$0xf]
            %v1843 = vld [vmem:[%s1827 + $0x3c] sm:$0xf]
            %v1858 = vunpack.c.l.b16 %v1810
            %v1859 = vunpack.c.l.b16 %v1811
            %v1860 = vunpack.c.l.b16 %v1812
            %v1861 = vunpack.c.l.b16 %v1813
            %v1862 = vunpack.c.l.b16 %v1814
            %v1863 = vunpack.c.l.b16 %v1815
            %v1864 = vunpack.c.l.b16 %v1816
            %v1865 = vunpack.c.l.b16 %v1817
            %v1866 = vunpack.c.l.b16 %v1818
            %v1867 = vunpack.c.l.b16 %v1819
            %v1868 = vunpack.c.l.b16 %v1820
            %v1869 = vunpack.c.l.b16 %v1821
            %v1870 = vunpack.c.l.b16 %v1822
            %v1871 = vunpack.c.l.b16 %v1823
            %v1872 = vpack.c.b16 %v1859, %v1858
            %v1873 = vpack.c.b16 %v1861, %v1860
            %v1874 = vpack.c.b16 %v1863, %v1862
            %v1875 = vpack.c.b16 %v1865, %v1864
            %v1876 = vpack.c.b16 %v1867, %v1866
            %v1877 = vpack.c.b16 %v1869, %v1868
            %v1878 = vpack.c.b16 %v1871, %v1870
            %v1902 = vunpack.c.l.b16 %v1828
            %v1903 = vunpack.c.l.b16 %v1829
            %v1904 = vunpack.c.l.b16 %v1830
            %v1905 = vunpack.c.l.b16 %v1831
            %v1906 = vunpack.c.l.b16 %v1832
            %v1907 = vunpack.c.l.b16 %v1833
            %v1908 = vunpack.c.l.b16 %v1834
            %v1909 = vunpack.c.l.b16 %v1835
            %v1910 = vunpack.c.l.b16 %v1836
            %v1911 = vunpack.c.l.b16 %v1837
            %v1912 = vunpack.c.l.b16 %v1838
            %v1913 = vunpack.c.l.b16 %v1839
            %v1914 = vunpack.c.l.b16 %v1840
            %v1915 = vunpack.c.l.b16 %v1841
            %v1916 = vunpack.c.l.b16 %v1842
            %v1917 = vunpack.c.l.b16 %v1843
            %v1918 = vpack.c.b16 %v1903, %v1902
            %v1919 = vpack.c.b16 %v1905, %v1904
            %v1920 = vpack.c.b16 %v1907, %v1906
            %v1921 = vpack.c.b16 %v1909, %v1908
            %v1922 = vpack.c.b16 %v1911, %v1910
            %v1923 = vpack.c.b16 %v1913, %v1912
            %v1924 = vpack.c.b16 %v1915, %v1914
            %v1925 = vpack.c.b16 %v1917, %v1916
            %1934 = vmatpush.bf16.msra.mxu0 %v1925
            %1935 = vmatpush.bf16.msra.mxu0 %v1924
            %1936 = vmatpush.bf16.msra.mxu0 %v1923
            %1937 = vmatpush.bf16.msra.mxu0 %v1922
            %1938 = vmatpush.bf16.msra.mxu0 %v1921
            %1939 = vmatpush.bf16.msra.mxu0 %v1920
            %1940 = vmatpush.bf16.msra.mxu0 %v1919
            %1941 = vmatpush.bf16.msra.mxu0 %v1918
            %1942 = vmatmul.bf16.gmra.mxu0 %v1872
            %v1943 = vpop.f32.mrf.mxu0
            %v1944 = vadd.f32 0.0, %v1943
            %v1945 = vpop.f32.mrf.mxu0
            %v1946 = vadd.f32 0.0, %v1945
            %1947 = vmatmul.bf16.gmra.mxu0 %v1873
            %v1948 = vpop.f32.mrf.mxu0
            %v1949 = vadd.f32 0.0, %v1948
            %v1950 = vpop.f32.mrf.mxu0
            %v1951 = vadd.f32 0.0, %v1950
            %1952 = vmatmul.bf16.gmra.mxu0 %v1874
            %v1953 = vpop.f32.mrf.mxu0
            %v1954 = vadd.f32 0.0, %v1953
            %v1955 = vpop.f32.mrf.mxu0
            %v1956 = vadd.f32 0.0, %v1955
            %1957 = vmatmul.bf16.gmra.mxu0 %v1875
            %v1958 = vpop.f32.mrf.mxu0
            %v1959 = vadd.f32 0.0, %v1958
            %v1960 = vpop.f32.mrf.mxu0
            %v1961 = vadd.f32 0.0, %v1960
            %1962 = vmatmul.bf16.gmra.mxu0 %v1876
            %v1963 = vpop.f32.mrf.mxu0
            %v1964 = vadd.f32 0.0, %v1963
            %v1965 = vpop.f32.mrf.mxu0
            %v1966 = vadd.f32 0.0, %v1965
            %1967 = vmatmul.bf16.gmra.mxu0 %v1877
            %v1968 = vpop.f32.mrf.mxu0
            %v1969 = vadd.f32 0.0, %v1968
            %v1970 = vpop.f32.mrf.mxu0
            %v1971 = vadd.f32 0.0, %v1970
            %1972 = vmatmul.bf16.gmra.mxu0 %v1878
            %v1973 = vpop.f32.mrf.mxu0
            %v1974 = vadd.f32 0.0, %v1973
            %v1975 = vpop.f32.mrf.mxu0
            %v1976 = vadd.f32 0.0, %v1975
            %1977 = vdwg.mxu0
            %v1978 = vadd.f32 %v1796, %v1944
            %v1979 = vadd.f32 %v1797, %v1946
            %v1980 = vadd.f32 %v1798, %v1949
            %v1981 = vadd.f32 %v1799, %v1951
            %v1982 = vadd.f32 %v1800, %v1954
            %v1983 = vadd.f32 %v1801, %v1956
            %v1984 = vadd.f32 %v1802, %v1959
            %v1985 = vadd.f32 %v1803, %v1961
            %v1986 = vadd.f32 %v1804, %v1964
            %v1987 = vadd.f32 %v1805, %v1966
            %v1988 = vadd.f32 %v1806, %v1969
            %v1989 = vadd.f32 %v1807, %v1971
            %v1990 = vadd.f32 %v1808, %v1974
            %v1991 = vadd.f32 %v1809, %v1976
            %1992 = vst [vmem:[#allocation3] sm:$0xff] %v1978
            %1993 = vst [vmem:[#allocation3 + $0x8] sm:$0xff] %v1979
            %1994 = vst [vmem:[#allocation3 + $0x10] sm:$0xff] %v1980
            %1995 = vst [vmem:[#allocation3 + $0x18] sm:$0xff] %v1981
            %1996 = vst [vmem:[#allocation3 + $0x20] sm:$0xff] %v1982
            %1997 = vst [vmem:[#allocation3 + $0x28] sm:$0xff] %v1983
            %1998 = vst [vmem:[#allocation3 + $0x30] sm:$0xff] %v1984
            %1999 = vst [vmem:[#allocation3 + $0x38] sm:$0xff] %v1985
            %2000 = vst [vmem:[#allocation3 + $0x40] sm:$0xff] %v1986
            %2001 = vst [vmem:[#allocation3 + $0x48] sm:$0xff] %v1987
            %2002 = vst [vmem:[#allocation3 + $0x50] sm:$0xff] %v1988
            %2003 = vst [vmem:[#allocation3 + $0x58] sm:$0xff] %v1989
            %2004 = vst [vmem:[#allocation3 + $0x60] sm:$0xff] %v1990
            %2005 = vst [vmem:[#allocation3 + $0x68] sm:$0xff] %v1991
          $region72: #{tpu_custom_call.1} parent=63 // pred_fallthru
            _
          %p2006 = scmp.eq.s32.totalorder %s38, 2
          // Predicated region
          $region73: #{tpu_custom_call.1} parent=63 // pred_check
            %p2007 = pneg %p2006
          $region74: #{tpu_custom_call.1} parent=63 // pred_check_branch
            %2009 = sbr.rel (%p2007) target = $region76
          $region75: #{tpu_custom_call.1} parent=63 // pred_region
            %v2010 = vld [vmem:[#allocation3] sm:$0xff]
            %v2011 = vld [vmem:[#allocation3 + $0x8] sm:$0xff]
            %v2012 = vld [vmem:[#allocation3 + $0x10] sm:$0xff]
            %v2013 = vld [vmem:[#allocation3 + $0x18] sm:$0xff]
            %v2014 = vld [vmem:[#allocation3 + $0x20] sm:$0xff]
            %v2015 = vld [vmem:[#allocation3 + $0x28] sm:$0xff]
            %v2016 = vld [vmem:[#allocation3 + $0x30] sm:$0xff]
            %v2017 = vld [vmem:[#allocation3 + $0x38] sm:$0xff]
            %v2018 = vld [vmem:[#allocation3 + $0x40] sm:$0xff]
            %v2019 = vld [vmem:[#allocation3 + $0x48] sm:$0xff]
            %v2020 = vld [vmem:[#allocation3 + $0x50] sm:$0xff]
            %v2021 = vld [vmem:[#allocation3 + $0x58] sm:$0xff]
            %v2022 = vld [vmem:[#allocation3 + $0x60] sm:$0xff]
            %v2023 = vld [vmem:[#allocation3 + $0x68] sm:$0xff]
            %v2024 = vld [vmem:[%s5] sm:$0xff]
            %v2025 = vld [vmem:[%s5 + $0x8] sm:$0xff]
            %v2026 = vld [vmem:[%s5 + $0x10] sm:$0xff]
            %v2027 = vld [vmem:[%s5 + $0x18] sm:$0xff]
            %v2028 = vld [vmem:[%s5 + $0x20] sm:$0xff]
            %v2029 = vld [vmem:[%s5 + $0x28] sm:$0xff]
            %v2030 = vld [vmem:[%s5 + $0x30] sm:$0xff]
            %v2031 = vld [vmem:[%s5 + $0x38] sm:$0xff]
            %v2032 = vld [vmem:[%s5 + $0x40] sm:$0xff]
            %v2033 = vld [vmem:[%s5 + $0x48] sm:$0xff]
            %v2034 = vld [vmem:[%s5 + $0x50] sm:$0xff]
            %v2035 = vld [vmem:[%s5 + $0x58] sm:$0xff]
            %v2036 = vld [vmem:[%s5 + $0x60] sm:$0xff]
            %v2037 = vld [vmem:[%s5 + $0x68] sm:$0xff]
            %v2038 = vld [vmem:[%s5 + $0x70] sm:$0xff]
            %v2039 = vld [vmem:[%s5 + $0x78] sm:$0xff]
            %v2040 = vld [vmem:[%s8] sm:$0x3]
            %v2042 = vperm.slane %v2040, 0
            %v2043 = vperm.slane %v2040, 1
            %vm2046 = vcmask 523264
            %v2048 = vsel %vm2046, %v2010, 0
            %v2051 = vsel %vm2046, %v2011, 0
            %v2054 = vsel %vm2046, %v2012, 0
            %v2057 = vsel %vm2046, %v2013, 0
            %v2060 = vsel %vm2046, %v2014, 0
            %v2063 = vsel %vm2046, %v2015, 0
            %v2066 = vsel %vm2046, %v2016, 0
            %v2069 = vsel %vm2046, %v2017, 0
            %v2072 = vsel %vm2046, %v2018, 0
            %v2075 = vsel %vm2046, %v2019, 0
            %v2078 = vsel %vm2046, %v2020, 0
            %v2081 = vsel %vm2046, %v2021, 0
            %v2084 = vsel %vm2046, %v2022, 0
            %v2087 = vsel %vm2046, %v2023, 0
            %2089 = vmatpush.msra.mxu0 0.0
            %2090 = vmatpush.msra.mxu0 0.0
            %2091 = vmatpush.msra.mxu0 0.0
            %2092 = vmatpush.msra.mxu0 0.0
            %2093 = vmatpush.msra.mxu0 0.0
            %2094 = vmatpush.msra.mxu0 0.0
            %2095 = vmatpush.msra.mxu0 0.0
            %2096 = vmatpush.msra.mxu0 0.0
            %2097 = vmatpush.msra.mxu0 %v2038
            %2098 = vmatpush.msra.mxu0 %v2036
            %2099 = vmatpush.msra.mxu0 %v2034
            %2100 = vmatpush.msra.mxu0 %v2032
            %2101 = vmatpush.msra.mxu0 %v2030
            %2102 = vmatpush.msra.mxu0 %v2028
            %2103 = vmatpush.msra.mxu0 %v2026
            %2104 = vmatpush.msra.mxu0 %v2024
            %2105 = vmatmul.f32.gmra.mxu0 %v2048
            %v2106 = vpop.f32.mrf.mxu0
            %v2107 = vadd.f32 %v2042, %v2106
            %2108 = vmatmul.f32.gmra.mxu0 %v2051
            %v2109 = vpop.f32.mrf.mxu0
            %v2110 = vadd.f32 %v2042, %v2109
            %2111 = vmatmul.f32.gmra.mxu0 %v2054
            %v2112 = vpop.f32.mrf.mxu0
            %v2113 = vadd.f32 %v2042, %v2112
            %2114 = vmatmul.f32.gmra.mxu0 %v2057
            %v2115 = vpop.f32.mrf.mxu0
            %v2116 = vadd.f32 %v2042, %v2115
            %2117 = vmatmul.f32.gmra.mxu0 %v2060
            %v2118 = vpop.f32.mrf.mxu0
            %v2119 = vadd.f32 %v2042, %v2118
            %2120 = vmatmul.f32.gmra.mxu0 %v2063
            %v2121 = vpop.f32.mrf.mxu0
            %v2122 = vadd.f32 %v2042, %v2121
            %2123 = vmatmul.f32.gmra.mxu0 %v2066
            %v2124 = vpop.f32.mrf.mxu0
            %v2125 = vadd.f32 %v2042, %v2124
            %2126 = vmatmul.f32.gmra.mxu0 %v2069
            %v2127 = vpop.f32.mrf.mxu0
            %v2128 = vadd.f32 %v2042, %v2127
            %2129 = vmatmul.f32.gmra.mxu0 %v2072
            %v2130 = vpop.f32.mrf.mxu0
            %v2131 = vadd.f32 %v2042, %v2130
            %2132 = vmatmul.f32.gmra.mxu0 %v2075
            %v2133 = vpop.f32.mrf.mxu0
            %v2134 = vadd.f32 %v2042, %v2133
            %2135 = vmatmul.f32.gmra.mxu0 %v2078
            %v2136 = vpop.f32.mrf.mxu0
            %v2137 = vadd.f32 %v2042, %v2136
            %2138 = vmatmul.f32.gmra.mxu0 %v2081
            %v2139 = vpop.f32.mrf.mxu0
            %v2140 = vadd.f32 %v2042, %v2139
            %2141 = vmatmul.f32.gmra.mxu0 %v2084
            %v2142 = vpop.f32.mrf.mxu0
            %v2143 = vadd.f32 %v2042, %v2142
            %2144 = vmatmul.f32.gmra.mxu0 %v2087
            %v2145 = vpop.f32.mrf.mxu0
            %v2146 = vadd.f32 %v2042, %v2145
            %2147 = vdwg.mxu0
            %2148 = vmatpush.msra.mxu0 0.0
            %2149 = vmatpush.msra.mxu0 0.0
            %2150 = vmatpush.msra.mxu0 0.0
            %2151 = vmatpush.msra.mxu0 0.0
            %2152 = vmatpush.msra.mxu0 0.0
            %2153 = vmatpush.msra.mxu0 0.0
            %2154 = vmatpush.msra.mxu0 0.0
            %2155 = vmatpush.msra.mxu0 0.0
            %2156 = vmatpush.msra.mxu0 %v2039
            %2157 = vmatpush.msra.mxu0 %v2037
            %2158 = vmatpush.msra.mxu0 %v2035
            %2159 = vmatpush.msra.mxu0 %v2033
            %2160 = vmatpush.msra.mxu0 %v2031
            %2161 = vmatpush.msra.mxu0 %v2029
            %2162 = vmatpush.msra.mxu0 %v2027
            %2163 = vmatpush.msra.mxu0 %v2025
            %2164 = vmatmul.f32.gmra.mxu0 %v2048
            %v2165 = vpop.f32.mrf.mxu0
            %v2166 = vadd.f32 %v2043, %v2165
            %2167 = vmatmul.f32.gmra.mxu0 %v2051
            %v2168 = vpop.f32.mrf.mxu0
            %v2169 = vadd.f32 %v2043, %v2168
            %2170 = vmatmul.f32.gmra.mxu0 %v2054
            %v2171 = vpop.f32.mrf.mxu0
            %v2172 = vadd.f32 %v2043, %v2171
            %2173 = vmatmul.f32.gmra.mxu0 %v2057
            %v2174 = vpop.f32.mrf.mxu0
            %v2175 = vadd.f32 %v2043, %v2174
            %2176 = vmatmul.f32.gmra.mxu0 %v2060
            %v2177 = vpop.f32.mrf.mxu0
            %v2178 = vadd.f32 %v2043, %v2177
            %2179 = vmatmul.f32.gmra.mxu0 %v2063
            %v2180 = vpop.f32.mrf.mxu0
            %v2181 = vadd.f32 %v2043, %v2180
            %2182 = vmatmul.f32.gmra.mxu0 %v2066
            %v2183 = vpop.f32.mrf.mxu0
            %v2184 = vadd.f32 %v2043, %v2183
            %2185 = vmatmul.f32.gmra.mxu0 %v2069
            %v2186 = vpop.f32.mrf.mxu0
            %v2187 = vadd.f32 %v2043, %v2186
            %2188 = vmatmul.f32.gmra.mxu0 %v2072
            %v2189 = vpop.f32.mrf.mxu0
            %v2190 = vadd.f32 %v2043, %v2189
            %2191 = vmatmul.f32.gmra.mxu0 %v2075
            %v2192 = vpop.f32.mrf.mxu0
            %v2193 = vadd.f32 %v2043, %v2192
            %2194 = vmatmul.f32.gmra.mxu0 %v2078
            %v2195 = vpop.f32.mrf.mxu0
            %v2196 = vadd.f32 %v2043, %v2195
            %2197 = vmatmul.f32.gmra.mxu0 %v2081
            %v2198 = vpop.f32.mrf.mxu0
            %v2199 = vadd.f32 %v2043, %v2198
            %2200 = vmatmul.f32.gmra.mxu0 %v2084
            %v2201 = vpop.f32.mrf.mxu0
            %v2202 = vadd.f32 %v2043, %v2201
            %2203 = vmatmul.f32.gmra.mxu0 %v2087
            %v2204 = vpop.f32.mrf.mxu0
            %v2205 = vadd.f32 %v2043, %v2204
            %2206 = vdwg.mxu0
            %v2207 = vxor.u32 %v2107, 2147483648
            %v2208 = vxor.u32 %v2110, 2147483648
            %v2209 = vxor.u32 %v2113, 2147483648
            %v2210 = vxor.u32 %v2116, 2147483648
            %v2211 = vxor.u32 %v2119, 2147483648
            %v2212 = vxor.u32 %v2122, 2147483648
            %v2213 = vxor.u32 %v2125, 2147483648
            %v2214 = vxor.u32 %v2128, 2147483648
            %v2215 = vxor.u32 %v2131, 2147483648
            %v2216 = vxor.u32 %v2134, 2147483648
            %v2217 = vxor.u32 %v2137, 2147483648
            %v2218 = vxor.u32 %v2140, 2147483648
            %v2219 = vxor.u32 %v2143, 2147483648
            %v2220 = vxor.u32 %v2146, 2147483648
            %v2221 = vmul.f32 %v2207, 1.442695
            %v2222 = vpow.pop %v2221
            %v2223 = vmul.f32 %v2208, 1.442695
            %v2224 = vpow.pop %v2223
            %v2225 = vmul.f32 %v2209, 1.442695
            %v2226 = vpow.pop %v2225
            %v2227 = vmul.f32 %v2210, 1.442695
            %v2228 = vpow.pop %v2227
            %v2229 = vmul.f32 %v2211, 1.442695
            %v2230 = vpow.pop %v2229
            %v2231 = vmul.f32 %v2212, 1.442695
            %v2232 = vpow.pop %v2231
            %v2233 = vmul.f32 %v2213, 1.442695
            %v2234 = vpow.pop %v2233
            %v2235 = vmul.f32 %v2214, 1.442695
            %v2236 = vpow.pop %v2235
            %v2237 = vmul.f32 %v2215, 1.442695
            %v2238 = vpow.pop %v2237
            %v2239 = vmul.f32 %v2216, 1.442695
            %v2240 = vpow.pop %v2239
            %v2241 = vmul.f32 %v2217, 1.442695
            %v2242 = vpow.pop %v2241
            %v2243 = vmul.f32 %v2218, 1.442695
            %v2244 = vpow.pop %v2243
            %v2245 = vmul.f32 %v2219, 1.442695
            %v2246 = vpow.pop %v2245
            %v2247 = vmul.f32 %v2220, 1.442695
            %v2248 = vpow.pop %v2247
            %v2249 = vadd.f32 %v2222, 1.0
            %v2250 = vadd.f32 %v2224, 1.0
            %v2251 = vadd.f32 %v2226, 1.0
            %v2252 = vadd.f32 %v2228, 1.0
            %v2253 = vadd.f32 %v2230, 1.0
            %v2254 = vadd.f32 %v2232, 1.0
            %v2255 = vadd.f32 %v2234, 1.0
            %v2256 = vadd.f32 %v2236, 1.0
            %v2257 = vadd.f32 %v2238, 1.0
            %v2258 = vadd.f32 %v2240, 1.0
            %v2259 = vadd.f32 %v2242, 1.0
            %v2260 = vadd.f32 %v2244, 1.0
            %v2261 = vadd.f32 %v2246, 1.0
            %v2262 = vadd.f32 %v2248, 1.0
            %v2263 = vrcp.pop %v2249
            %v2264 = vmul.f32 %v2249, %v2263
            %v2265 = vsub.f32 1.0, %v2264
            %v2266 = vmul.f32 %v2263, %v2265
            %v2267 = vadd.f32 %v2263, %v2266
            %vm2268 = vweird.f32 %v2249
            %vm2269 = vweird.f32 %v2263
            %vm2270 = vmor %vm2268, %vm2269
            %v2271 = vsel %vm2270, %v2263, %v2267
            %v2272 = vand.u32 2147483647, %v2249
            %vm2273 = vcmp.eq.f32.partialorder %v2272, 8.507059e+37
            %v2274 = vand.u32 %v2249, 2147483648
            %v2275 = vor.u32 1.1754944e-38, %v2274
            %v2276 = vsel %vm2273, %v2275, %v2271
            %v2277 = vmul.f32 1.0, %v2276
            %v2278 = vrcp.pop %v2250
            %v2279 = vmul.f32 %v2250, %v2278
            %v2280 = vsub.f32 1.0, %v2279
            %v2281 = vmul.f32 %v2278, %v2280
            %v2282 = vadd.f32 %v2278, %v2281
            %vm2283 = vweird.f32 %v2250
            %vm2284 = vweird.f32 %v2278
            %vm2285 = vmor %vm2283, %vm2284
            %v2286 = vsel %vm2285, %v2278, %v2282
            %v2287 = vand.u32 2147483647, %v2250
            %vm2288 = vcmp.eq.f32.partialorder %v2287, 8.507059e+37
            %v2289 = vand.u32 %v2250, 2147483648
            %v2290 = vor.u32 1.1754944e-38, %v2289
            %v2291 = vsel %vm2288, %v2290, %v2286
            %v2292 = vmul.f32 1.0, %v2291
            %v2293 = vrcp.pop %v2251
            %v2294 = vmul.f32 %v2251, %v2293
            %v2295 = vsub.f32 1.0, %v2294
            %v2296 = vmul.f32 %v2293, %v2295
            %v2297 = vadd.f32 %v2293, %v2296
            %vm2298 = vweird.f32 %v2251
            %vm2299 = vweird.f32 %v2293
            %vm2300 = vmor %vm2298, %vm2299
            %v2301 = vsel %vm2300, %v2293, %v2297
            %v2302 = vand.u32 2147483647, %v2251
            %vm2303 = vcmp.eq.f32.partialorder %v2302, 8.507059e+37
            %v2304 = vand.u32 %v2251, 2147483648
            %v2305 = vor.u32 1.1754944e-38, %v2304
            %v2306 = vsel %vm2303, %v2305, %v2301
            %v2307 = vmul.f32 1.0, %v2306
            %v2308 = vrcp.pop %v2252
            %v2309 = vmul.f32 %v2252, %v2308
            %v2310 = vsub.f32 1.0, %v2309
            %v2311 = vmul.f32 %v2308, %v2310
            %v2312 = vadd.f32 %v2308, %v2311
            %vm2313 = vweird.f32 %v2252
            %vm2314 = vweird.f32 %v2308
            %vm2315 = vmor %vm2313, %vm2314
            %v2316 = vsel %vm2315, %v2308, %v2312
            %v2317 = vand.u32 2147483647, %v2252
            %vm2318 = vcmp.eq.f32.partialorder %v2317, 8.507059e+37
            %v2319 = vand.u32 %v2252, 2147483648
            %v2320 = vor.u32 1.1754944e-38, %v2319
            %v2321 = vsel %vm2318, %v2320, %v2316
            %v2322 = vmul.f32 1.0, %v2321
            %v2323 = vrcp.pop %v2253
            %v2324 = vmul.f32 %v2253, %v2323
            %v2325 = vsub.f32 1.0, %v2324
            %v2326 = vmul.f32 %v2323, %v2325
            %v2327 = vadd.f32 %v2323, %v2326
            %vm2328 = vweird.f32 %v2253
            %vm2329 = vweird.f32 %v2323
            %vm2330 = vmor %vm2328, %vm2329
            %v2331 = vsel %vm2330, %v2323, %v2327
            %v2332 = vand.u32 2147483647, %v2253
            %vm2333 = vcmp.eq.f32.partialorder %v2332, 8.507059e+37
            %v2334 = vand.u32 %v2253, 2147483648
            %v2335 = vor.u32 1.1754944e-38, %v2334
            %v2336 = vsel %vm2333, %v2335, %v2331
            %v2337 = vmul.f32 1.0, %v2336
            %v2338 = vrcp.pop %v2254
            %v2339 = vmul.f32 %v2254, %v2338
            %v2340 = vsub.f32 1.0, %v2339
            %v2341 = vmul.f32 %v2338, %v2340
            %v2342 = vadd.f32 %v2338, %v2341
            %vm2343 = vweird.f32 %v2254
            %vm2344 = vweird.f32 %v2338
            %vm2345 = vmor %vm2343, %vm2344
            %v2346 = vsel %vm2345, %v2338, %v2342
            %v2347 = vand.u32 2147483647, %v2254
            %vm2348 = vcmp.eq.f32.partialorder %v2347, 8.507059e+37
            %v2349 = vand.u32 %v2254, 2147483648
            %v2350 = vor.u32 1.1754944e-38, %v2349
            %v2351 = vsel %vm2348, %v2350, %v2346
            %v2352 = vmul.f32 1.0, %v2351
            %v2353 = vrcp.pop %v2255
            %v2354 = vmul.f32 %v2255, %v2353
            %v2355 = vsub.f32 1.0, %v2354
            %v2356 = vmul.f32 %v2353, %v2355
            %v2357 = vadd.f32 %v2353, %v2356
            %vm2358 = vweird.f32 %v2255
            %vm2359 = vweird.f32 %v2353
            %vm2360 = vmor %vm2358, %vm2359
            %v2361 = vsel %vm2360, %v2353, %v2357
            %v2362 = vand.u32 2147483647, %v2255
            %vm2363 = vcmp.eq.f32.partialorder %v2362, 8.507059e+37
            %v2364 = vand.u32 %v2255, 2147483648
            %v2365 = vor.u32 1.1754944e-38, %v2364
            %v2366 = vsel %vm2363, %v2365, %v2361
            %v2367 = vmul.f32 1.0, %v2366
            %v2368 = vrcp.pop %v2256
            %v2369 = vmul.f32 %v2256, %v2368
            %v2370 = vsub.f32 1.0, %v2369
            %v2371 = vmul.f32 %v2368, %v2370
            %v2372 = vadd.f32 %v2368, %v2371
            %vm2373 = vweird.f32 %v2256
            %vm2374 = vweird.f32 %v2368
            %vm2375 = vmor %vm2373, %vm2374
            %v2376 = vsel %vm2375, %v2368, %v2372
            %v2377 = vand.u32 2147483647, %v2256
            %vm2378 = vcmp.eq.f32.partialorder %v2377, 8.507059e+37
            %v2379 = vand.u32 %v2256, 2147483648
            %v2380 = vor.u32 1.1754944e-38, %v2379
            %v2381 = vsel %vm2378, %v2380, %v2376
            %v2382 = vmul.f32 1.0, %v2381
            %v2383 = vrcp.pop %v2257
            %v2384 = vmul.f32 %v2257, %v2383
            %v2385 = vsub.f32 1.0, %v2384
            %v2386 = vmul.f32 %v2383, %v2385
            %v2387 = vadd.f32 %v2383, %v2386
            %vm2388 = vweird.f32 %v2257
            %vm2389 = vweird.f32 %v2383
            %vm2390 = vmor %vm2388, %vm2389
            %v2391 = vsel %vm2390, %v2383, %v2387
            %v2392 = vand.u32 2147483647, %v2257
            %vm2393 = vcmp.eq.f32.partialorder %v2392, 8.507059e+37
            %v2394 = vand.u32 %v2257, 2147483648
            %v2395 = vor.u32 1.1754944e-38, %v2394
            %v2396 = vsel %vm2393, %v2395, %v2391
            %v2397 = vmul.f32 1.0, %v2396
            %v2398 = vrcp.pop %v2258
            %v2399 = vmul.f32 %v2258, %v2398
            %v2400 = vsub.f32 1.0, %v2399
            %v2401 = vmul.f32 %v2398, %v2400
            %v2402 = vadd.f32 %v2398, %v2401
            %vm2403 = vweird.f32 %v2258
            %vm2404 = vweird.f32 %v2398
            %vm2405 = vmor %vm2403, %vm2404
            %v2406 = vsel %vm2405, %v2398, %v2402
            %v2407 = vand.u32 2147483647, %v2258
            %vm2408 = vcmp.eq.f32.partialorder %v2407, 8.507059e+37
            %v2409 = vand.u32 %v2258, 2147483648
            %v2410 = vor.u32 1.1754944e-38, %v2409
            %v2411 = vsel %vm2408, %v2410, %v2406
            %v2412 = vmul.f32 1.0, %v2411
            %v2413 = vrcp.pop %v2259
            %v2414 = vmul.f32 %v2259, %v2413
            %v2415 = vsub.f32 1.0, %v2414
            %v2416 = vmul.f32 %v2413, %v2415
            %v2417 = vadd.f32 %v2413, %v2416
            %vm2418 = vweird.f32 %v2259
            %vm2419 = vweird.f32 %v2413
            %vm2420 = vmor %vm2418, %vm2419
            %v2421 = vsel %vm2420, %v2413, %v2417
            %v2422 = vand.u32 2147483647, %v2259
            %vm2423 = vcmp.eq.f32.partialorder %v2422, 8.507059e+37
            %v2424 = vand.u32 %v2259, 2147483648
            %v2425 = vor.u32 1.1754944e-38, %v2424
            %v2426 = vsel %vm2423, %v2425, %v2421
            %v2427 = vmul.f32 1.0, %v2426
            %v2428 = vrcp.pop %v2260
            %v2429 = vmul.f32 %v2260, %v2428
            %v2430 = vsub.f32 1.0, %v2429
            %v2431 = vmul.f32 %v2428, %v2430
            %v2432 = vadd.f32 %v2428, %v2431
            %vm2433 = vweird.f32 %v2260
            %vm2434 = vweird.f32 %v2428
            %vm2435 = vmor %vm2433, %vm2434
            %v2436 = vsel %vm2435, %v2428, %v2432
            %v2437 = vand.u32 2147483647, %v2260
            %vm2438 = vcmp.eq.f32.partialorder %v2437, 8.507059e+37
            %v2439 = vand.u32 %v2260, 2147483648
            %v2440 = vor.u32 1.1754944e-38, %v2439
            %v2441 = vsel %vm2438, %v2440, %v2436
            %v2442 = vmul.f32 1.0, %v2441
            %v2443 = vrcp.pop %v2261
            %v2444 = vmul.f32 %v2261, %v2443
            %v2445 = vsub.f32 1.0, %v2444
            %v2446 = vmul.f32 %v2443, %v2445
            %v2447 = vadd.f32 %v2443, %v2446
            %vm2448 = vweird.f32 %v2261
            %vm2449 = vweird.f32 %v2443
            %vm2450 = vmor %vm2448, %vm2449
            %v2451 = vsel %vm2450, %v2443, %v2447
            %v2452 = vand.u32 2147483647, %v2261
            %vm2453 = vcmp.eq.f32.partialorder %v2452, 8.507059e+37
            %v2454 = vand.u32 %v2261, 2147483648
            %v2455 = vor.u32 1.1754944e-38, %v2454
            %v2456 = vsel %vm2453, %v2455, %v2451
            %v2457 = vmul.f32 1.0, %v2456
            %v2458 = vrcp.pop %v2262
            %v2459 = vmul.f32 %v2262, %v2458
            %v2460 = vsub.f32 1.0, %v2459
            %v2461 = vmul.f32 %v2458, %v2460
            %v2462 = vadd.f32 %v2458, %v2461
            %vm2463 = vweird.f32 %v2262
            %vm2464 = vweird.f32 %v2458
            %vm2465 = vmor %vm2463, %vm2464
            %v2466 = vsel %vm2465, %v2458, %v2462
            %v2467 = vand.u32 2147483647, %v2262
            %vm2468 = vcmp.eq.f32.partialorder %v2467, 8.507059e+37
            %v2469 = vand.u32 %v2262, 2147483648
            %v2470 = vor.u32 1.1754944e-38, %v2469
            %v2471 = vsel %vm2468, %v2470, %v2466
            %v2472 = vmul.f32 1.0, %v2471
            %v2473 = vtanh.pop %v2166
            %v2474 = vtanh.pop %v2169
            %v2475 = vtanh.pop %v2172
            %v2476 = vtanh.pop %v2175
            %v2477 = vtanh.pop %v2178
            %v2478 = vtanh.pop %v2181
            %v2479 = vtanh.pop %v2184
            %v2480 = vtanh.pop %v2187
            %v2481 = vtanh.pop %v2190
            %v2482 = vtanh.pop %v2193
            %v2483 = vtanh.pop %v2196
            %v2484 = vtanh.pop %v2199
            %v2485 = vtanh.pop %v2202
            %v2486 = vtanh.pop %v2205
            %v2487 = vmul.f32 %v2277, %v2473
            %v2488 = vmul.f32 %v2292, %v2474
            %v2489 = vmul.f32 %v2307, %v2475
            %v2490 = vmul.f32 %v2322, %v2476
            %v2491 = vmul.f32 %v2337, %v2477
            %v2492 = vmul.f32 %v2352, %v2478
            %v2493 = vmul.f32 %v2367, %v2479
            %v2494 = vmul.f32 %v2382, %v2480
            %v2495 = vmul.f32 %v2397, %v2481
            %v2496 = vmul.f32 %v2412, %v2482
            %v2497 = vmul.f32 %v2427, %v2483
            %v2498 = vmul.f32 %v2442, %v2484
            %v2499 = vmul.f32 %v2457, %v2485
            %v2500 = vmul.f32 %v2472, %v2486
            %2501 = vrot.lane.b32.xlu0 %v2010, 64
            %v2502 = vpop.permute.xlu0 %2501
            %2503 = vrot.lane.b32.xlu0 %v2011, 64
            %v2504 = vpop.permute.xlu0 %2503
            %2505 = vrot.lane.b32.xlu0 %v2012, 64
            %v2506 = vpop.permute.xlu0 %2505
            %2507 = vrot.lane.b32.xlu0 %v2013, 64
            %v2508 = vpop.permute.xlu0 %2507
            %2509 = vrot.lane.b32.xlu0 %v2014, 64
            %v2510 = vpop.permute.xlu0 %2509
            %2511 = vrot.lane.b32.xlu0 %v2015, 64
            %v2512 = vpop.permute.xlu0 %2511
            %2513 = vrot.lane.b32.xlu0 %v2016, 64
            %v2514 = vpop.permute.xlu0 %2513
            %2515 = vrot.lane.b32.xlu0 %v2017, 64
            %v2516 = vpop.permute.xlu0 %2515
            %2517 = vrot.lane.b32.xlu0 %v2018, 64
            %v2518 = vpop.permute.xlu0 %2517
            %2519 = vrot.lane.b32.xlu0 %v2019, 64
            %v2520 = vpop.permute.xlu0 %2519
            %2521 = vrot.lane.b32.xlu0 %v2020, 64
            %v2522 = vpop.permute.xlu0 %2521
            %2523 = vrot.lane.b32.xlu0 %v2021, 64
            %v2524 = vpop.permute.xlu0 %2523
            %2525 = vrot.lane.b32.xlu0 %v2022, 64
            %v2526 = vpop.permute.xlu0 %2525
            %2527 = vrot.lane.b32.xlu0 %v2023, 64
            %v2528 = vpop.permute.xlu0 %2527
            %v2543 = vadd.f32 %v2487, %v2502
            %v2544 = vadd.f32 %v2488, %v2504
            %v2545 = vadd.f32 %v2489, %v2506
            %v2546 = vadd.f32 %v2490, %v2508
            %v2547 = vadd.f32 %v2491, %v2510
            %v2548 = vadd.f32 %v2492, %v2512
            %v2549 = vadd.f32 %v2493, %v2514
            %v2550 = vadd.f32 %v2494, %v2516
            %v2551 = vadd.f32 %v2495, %v2518
            %v2552 = vadd.f32 %v2496, %v2520
            %v2553 = vadd.f32 %v2497, %v2522
            %v2554 = vadd.f32 %v2498, %v2524
            %v2555 = vadd.f32 %v2499, %v2526
            %v2556 = vadd.f32 %v2500, %v2528
            %v2557 = vmul.f32 %v2543, %v433
            %v2558 = vmul.f32 %v2544, %v434
            %v2559 = vmul.f32 %v2545, %v435
            %v2560 = vmul.f32 %v2546, %v436
            %v2561 = vmul.f32 %v2547, %v437
            %v2562 = vmul.f32 %v2548, %v438
            %v2563 = vmul.f32 %v2549, %v439
            %v2564 = vmul.f32 %v2550, %v440
            %v2565 = vmul.f32 %v2551, %v441
            %v2566 = vmul.f32 %v2552, %v442
            %v2567 = vmul.f32 %v2553, %v443
            %v2568 = vmul.f32 %v2554, %v444
            %v2569 = vmul.f32 %v2555, %v445
            %v2570 = vmul.f32 %v2556, %v446
            %v2571 = vtanh.pop %v2557
            %v2572 = vtanh.pop %v2558
            %v2573 = vtanh.pop %v2559
            %v2574 = vtanh.pop %v2560
            %v2575 = vtanh.pop %v2561
            %v2576 = vtanh.pop %v2562
            %v2577 = vtanh.pop %v2563
            %v2578 = vtanh.pop %v2564
            %v2579 = vtanh.pop %v2565
            %v2580 = vtanh.pop %v2566
            %v2581 = vtanh.pop %v2567
            %v2582 = vtanh.pop %v2568
            %v2583 = vtanh.pop %v2569
            %v2584 = vtanh.pop %v2570
            %2599 = vrot.lane.b32.xlu0 %v2571, 64
            %v2600 = vpop.permute.xlu0 %2599
            %2601 = vrot.lane.b32.xlu0 %v2572, 64
            %v2602 = vpop.permute.xlu0 %2601
            %2603 = vrot.lane.b32.xlu0 %v2573, 64
            %v2604 = vpop.permute.xlu0 %2603
            %2605 = vrot.lane.b32.xlu0 %v2574, 64
            %v2606 = vpop.permute.xlu0 %2605
            %2607 = vrot.lane.b32.xlu0 %v2575, 64
            %v2608 = vpop.permute.xlu0 %2607
            %2609 = vrot.lane.b32.xlu0 %v2576, 64
            %v2610 = vpop.permute.xlu0 %2609
            %2611 = vrot.lane.b32.xlu0 %v2577, 64
            %v2612 = vpop.permute.xlu0 %2611
            %2613 = vrot.lane.b32.xlu0 %v2578, 64
            %v2614 = vpop.permute.xlu0 %2613
            %2615 = vrot.lane.b32.xlu0 %v2579, 64
            %v2616 = vpop.permute.xlu0 %2615
            %2617 = vrot.lane.b32.xlu0 %v2580, 64
            %v2618 = vpop.permute.xlu0 %2617
            %2619 = vrot.lane.b32.xlu0 %v2581, 64
            %v2620 = vpop.permute.xlu0 %2619
            %2621 = vrot.lane.b32.xlu0 %v2582, 64
            %v2622 = vpop.permute.xlu0 %2621
            %2623 = vrot.lane.b32.xlu0 %v2583, 64
            %v2624 = vpop.permute.xlu0 %2623
            %2625 = vrot.lane.b32.xlu0 %v2584, 64
            %v2626 = vpop.permute.xlu0 %2625
            %v2641 = vmul.f32 %v2277, %v2600
            %v2642 = vmul.f32 %v2292, %v2602
            %v2643 = vmul.f32 %v2307, %v2604
            %v2644 = vmul.f32 %v2322, %v2606
            %v2645 = vmul.f32 %v2337, %v2608
            %v2646 = vmul.f32 %v2352, %v2610
            %v2647 = vmul.f32 %v2367, %v2612
            %v2648 = vmul.f32 %v2382, %v2614
            %v2649 = vmul.f32 %v2397, %v2616
            %v2650 = vmul.f32 %v2412, %v2618
            %v2651 = vmul.f32 %v2427, %v2620
            %v2652 = vmul.f32 %v2442, %v2622
            %v2653 = vmul.f32 %v2457, %v2624
            %v2654 = vmul.f32 %v2472, %v2626
            %v2655 = vld [vmem:[%s6] sm:$0xff]
            %v2656 = vld [vmem:[%s6 + $0x8] sm:$0xff]
            %v2657 = vld [vmem:[%s6 + $0x10] sm:$0xff]
            %v2658 = vld [vmem:[%s6 + $0x18] sm:$0xff]
            %v2659 = vld [vmem:[%s6 + $0x20] sm:$0xff]
            %v2660 = vld [vmem:[%s6 + $0x28] sm:$0xff]
            %v2661 = vld [vmem:[%s6 + $0x30] sm:$0xff]
            %v2662 = vld [vmem:[%s6 + $0x38] sm:$0xff]
            %v2663 = vld [vmem:[%s7] sm:$0x1]
            %v2665 = vperm.slane %v2663, 0
            %2681 = vrot.lane.b32.xlu0 %v2641, 64
            %v2682 = vpop.permute.xlu0 %2681
            %2683 = vrot.lane.b32.xlu0 %v2642, 64
            %v2684 = vpop.permute.xlu0 %2683
            %2685 = vrot.lane.b32.xlu0 %v2643, 64
            %v2686 = vpop.permute.xlu0 %2685
            %2687 = vrot.lane.b32.xlu0 %v2644, 64
            %v2688 = vpop.permute.xlu0 %2687
            %2689 = vrot.lane.b32.xlu0 %v2645, 64
            %v2690 = vpop.permute.xlu0 %2689
            %2691 = vrot.lane.b32.xlu0 %v2646, 64
            %v2692 = vpop.permute.xlu0 %2691
            %2693 = vrot.lane.b32.xlu0 %v2647, 64
            %v2694 = vpop.permute.xlu0 %2693
            %2695 = vrot.lane.b32.xlu0 %v2648, 64
            %v2696 = vpop.permute.xlu0 %2695
            %2697 = vrot.lane.b32.xlu0 %v2649, 64
            %v2698 = vpop.permute.xlu0 %2697
            %2699 = vrot.lane.b32.xlu0 %v2650, 64
            %v2700 = vpop.permute.xlu0 %2699
            %2701 = vrot.lane.b32.xlu0 %v2651, 64
            %v2702 = vpop.permute.xlu0 %2701
            %2703 = vrot.lane.b32.xlu0 %v2652, 64
            %v2704 = vpop.permute.xlu0 %2703
            %2705 = vrot.lane.b32.xlu0 %v2653, 64
            %v2706 = vpop.permute.xlu0 %2705
            %2707 = vrot.lane.b32.xlu0 %v2654, 64
            %v2708 = vpop.permute.xlu0 %2707
            %v2709 = vsel %vm2046, %v2682, 0
            %v2711 = vsel %vm2046, %v2684, 0
            %v2713 = vsel %vm2046, %v2686, 0
            %v2715 = vsel %vm2046, %v2688, 0
            %v2717 = vsel %vm2046, %v2690, 0
            %v2719 = vsel %vm2046, %v2692, 0
            %v2721 = vsel %vm2046, %v2694, 0
            %v2723 = vsel %vm2046, %v2696, 0
            %v2725 = vsel %vm2046, %v2698, 0
            %v2727 = vsel %vm2046, %v2700, 0
            %v2729 = vsel %vm2046, %v2702, 0
            %v2731 = vsel %vm2046, %v2704, 0
            %v2733 = vsel %vm2046, %v2706, 0
            %v2735 = vsel %vm2046, %v2708, 0
            %2737 = vmatpush.msra.mxu0 0.0
            %2738 = vmatpush.msra.mxu0 0.0
            %2739 = vmatpush.msra.mxu0 0.0
            %2740 = vmatpush.msra.mxu0 0.0
            %2741 = vmatpush.msra.mxu0 0.0
            %2742 = vmatpush.msra.mxu0 0.0
            %2743 = vmatpush.msra.mxu0 0.0
            %2744 = vmatpush.msra.mxu0 0.0
            %2745 = vmatpush.msra.mxu0 %v2662
            %2746 = vmatpush.msra.mxu0 %v2661
            %2747 = vmatpush.msra.mxu0 %v2660
            %2748 = vmatpush.msra.mxu0 %v2659
            %2749 = vmatpush.msra.mxu0 %v2658
            %2750 = vmatpush.msra.mxu0 %v2657
            %2751 = vmatpush.msra.mxu0 %v2656
            %2752 = vmatpush.msra.mxu0 %v2655
            %2753 = vmatmul.f32.gmra.mxu0 %v2709
            %v2754 = vpop.f32.mrf.mxu0
            %v2755 = vadd.f32 %v2665, %v2754
            %2756 = vmatmul.f32.gmra.mxu0 %v2711
            %v2757 = vpop.f32.mrf.mxu0
            %v2758 = vadd.f32 %v2665, %v2757
            %2759 = vmatmul.f32.gmra.mxu0 %v2713
            %v2760 = vpop.f32.mrf.mxu0
            %v2761 = vadd.f32 %v2665, %v2760
            %2762 = vmatmul.f32.gmra.mxu0 %v2715
            %v2763 = vpop.f32.mrf.mxu0
            %v2764 = vadd.f32 %v2665, %v2763
            %2765 = vmatmul.f32.gmra.mxu0 %v2717
            %v2766 = vpop.f32.mrf.mxu0
            %v2767 = vadd.f32 %v2665, %v2766
            %2768 = vmatmul.f32.gmra.mxu0 %v2719
            %v2769 = vpop.f32.mrf.mxu0
            %v2770 = vadd.f32 %v2665, %v2769
            %2771 = vmatmul.f32.gmra.mxu0 %v2721
            %v2772 = vpop.f32.mrf.mxu0
            %v2773 = vadd.f32 %v2665, %v2772
            %2774 = vmatmul.f32.gmra.mxu0 %v2723
            %v2775 = vpop.f32.mrf.mxu0
            %v2776 = vadd.f32 %v2665, %v2775
            %2777 = vmatmul.f32.gmra.mxu0 %v2725
            %v2778 = vpop.f32.mrf.mxu0
            %v2779 = vadd.f32 %v2665, %v2778
            %2780 = vmatmul.f32.gmra.mxu0 %v2727
            %v2781 = vpop.f32.mrf.mxu0
            %v2782 = vadd.f32 %v2665, %v2781
            %2783 = vmatmul.f32.gmra.mxu0 %v2729
            %v2784 = vpop.f32.mrf.mxu0
            %v2785 = vadd.f32 %v2665, %v2784
            %2786 = vmatmul.f32.gmra.mxu0 %v2731
            %v2787 = vpop.f32.mrf.mxu0
            %v2788 = vadd.f32 %v2665, %v2787
            %2789 = vmatmul.f32.gmra.mxu0 %v2733
            %v2790 = vpop.f32.mrf.mxu0
            %v2791 = vadd.f32 %v2665, %v2790
            %2792 = vmatmul.f32.gmra.mxu0 %v2735
            %v2793 = vpop.f32.mrf.mxu0
            %v2794 = vadd.f32 %v2665, %v2793
            %2795 = vdwg.mxu0
            %v2796 = vxor.u32 %v2755, 2147483648
            %v2797 = vxor.u32 %v2758, 2147483648
            %v2798 = vxor.u32 %v2761, 2147483648
            %v2799 = vxor.u32 %v2764, 2147483648
            %v2800 = vxor.u32 %v2767, 2147483648
            %v2801 = vxor.u32 %v2770, 2147483648
            %v2802 = vxor.u32 %v2773, 2147483648
            %v2803 = vxor.u32 %v2776, 2147483648
            %v2804 = vxor.u32 %v2779, 2147483648
            %v2805 = vxor.u32 %v2782, 2147483648
            %v2806 = vxor.u32 %v2785, 2147483648
            %v2807 = vxor.u32 %v2788, 2147483648
            %v2808 = vxor.u32 %v2791, 2147483648
            %v2809 = vxor.u32 %v2794, 2147483648
            %v2810 = vmul.f32 %v2796, 1.442695
            %v2811 = vpow.pop %v2810
            %v2812 = vmul.f32 %v2797, 1.442695
            %v2813 = vpow.pop %v2812
            %v2814 = vmul.f32 %v2798, 1.442695
            %v2815 = vpow.pop %v2814
            %v2816 = vmul.f32 %v2799, 1.442695
            %v2817 = vpow.pop %v2816
            %v2818 = vmul.f32 %v2800, 1.442695
            %v2819 = vpow.pop %v2818
            %v2820 = vmul.f32 %v2801, 1.442695
            %v2821 = vpow.pop %v2820
            %v2822 = vmul.f32 %v2802, 1.442695
            %v2823 = vpow.pop %v2822
            %v2824 = vmul.f32 %v2803, 1.442695
            %v2825 = vpow.pop %v2824
            %v2826 = vmul.f32 %v2804, 1.442695
            %v2827 = vpow.pop %v2826
            %v2828 = vmul.f32 %v2805, 1.442695
            %v2829 = vpow.pop %v2828
            %v2830 = vmul.f32 %v2806, 1.442695
            %v2831 = vpow.pop %v2830
            %v2832 = vmul.f32 %v2807, 1.442695
            %v2833 = vpow.pop %v2832
            %v2834 = vmul.f32 %v2808, 1.442695
            %v2835 = vpow.pop %v2834
            %v2836 = vmul.f32 %v2809, 1.442695
            %v2837 = vpow.pop %v2836
            %v2838 = vadd.f32 %v2811, 1.0
            %v2839 = vadd.f32 %v2813, 1.0
            %v2840 = vadd.f32 %v2815, 1.0
            %v2841 = vadd.f32 %v2817, 1.0
            %v2842 = vadd.f32 %v2819, 1.0
            %v2843 = vadd.f32 %v2821, 1.0
            %v2844 = vadd.f32 %v2823, 1.0
            %v2845 = vadd.f32 %v2825, 1.0
            %v2846 = vadd.f32 %v2827, 1.0
            %v2847 = vadd.f32 %v2829, 1.0
            %v2848 = vadd.f32 %v2831, 1.0
            %v2849 = vadd.f32 %v2833, 1.0
            %v2850 = vadd.f32 %v2835, 1.0
            %v2851 = vadd.f32 %v2837, 1.0
            %v2852 = vrcp.pop %v2838
            %v2853 = vmul.f32 %v2838, %v2852
            %v2854 = vsub.f32 1.0, %v2853
            %v2855 = vmul.f32 %v2852, %v2854
            %v2856 = vadd.f32 %v2852, %v2855
            %vm2857 = vweird.f32 %v2838
            %vm2858 = vweird.f32 %v2852
            %vm2859 = vmor %vm2857, %vm2858
            %v2860 = vsel %vm2859, %v2852, %v2856
            %v2861 = vand.u32 2147483647, %v2838
            %vm2862 = vcmp.eq.f32.partialorder %v2861, 8.507059e+37
            %v2863 = vand.u32 %v2838, 2147483648
            %v2864 = vor.u32 1.1754944e-38, %v2863
            %v2865 = vsel %vm2862, %v2864, %v2860
            %v2866 = vmul.f32 1.0, %v2865
            %v2867 = vrcp.pop %v2839
            %v2868 = vmul.f32 %v2839, %v2867
            %v2869 = vsub.f32 1.0, %v2868
            %v2870 = vmul.f32 %v2867, %v2869
            %v2871 = vadd.f32 %v2867, %v2870
            %vm2872 = vweird.f32 %v2839
            %vm2873 = vweird.f32 %v2867
            %vm2874 = vmor %vm2872, %vm2873
            %v2875 = vsel %vm2874, %v2867, %v2871
            %v2876 = vand.u32 2147483647, %v2839
            %vm2877 = vcmp.eq.f32.partialorder %v2876, 8.507059e+37
            %v2878 = vand.u32 %v2839, 2147483648
            %v2879 = vor.u32 1.1754944e-38, %v2878
            %v2880 = vsel %vm2877, %v2879, %v2875
            %v2881 = vmul.f32 1.0, %v2880
            %v2882 = vrcp.pop %v2840
            %v2883 = vmul.f32 %v2840, %v2882
            %v2884 = vsub.f32 1.0, %v2883
            %v2885 = vmul.f32 %v2882, %v2884
            %v2886 = vadd.f32 %v2882, %v2885
            %vm2887 = vweird.f32 %v2840
            %vm2888 = vweird.f32 %v2882
            %vm2889 = vmor %vm2887, %vm2888
            %v2890 = vsel %vm2889, %v2882, %v2886
            %v2891 = vand.u32 2147483647, %v2840
            %vm2892 = vcmp.eq.f32.partialorder %v2891, 8.507059e+37
            %v2893 = vand.u32 %v2840, 2147483648
            %v2894 = vor.u32 1.1754944e-38, %v2893
            %v2895 = vsel %vm2892, %v2894, %v2890
            %v2896 = vmul.f32 1.0, %v2895
            %v2897 = vrcp.pop %v2841
            %v2898 = vmul.f32 %v2841, %v2897
            %v2899 = vsub.f32 1.0, %v2898
            %v2900 = vmul.f32 %v2897, %v2899
            %v2901 = vadd.f32 %v2897, %v2900
            %vm2902 = vweird.f32 %v2841
            %vm2903 = vweird.f32 %v2897
            %vm2904 = vmor %vm2902, %vm2903
            %v2905 = vsel %vm2904, %v2897, %v2901
            %v2906 = vand.u32 2147483647, %v2841
            %vm2907 = vcmp.eq.f32.partialorder %v2906, 8.507059e+37
            %v2908 = vand.u32 %v2841, 2147483648
            %v2909 = vor.u32 1.1754944e-38, %v2908
            %v2910 = vsel %vm2907, %v2909, %v2905
            %v2911 = vmul.f32 1.0, %v2910
            %v2912 = vrcp.pop %v2842
            %v2913 = vmul.f32 %v2842, %v2912
            %v2914 = vsub.f32 1.0, %v2913
            %v2915 = vmul.f32 %v2912, %v2914
            %v2916 = vadd.f32 %v2912, %v2915
            %vm2917 = vweird.f32 %v2842
            %vm2918 = vweird.f32 %v2912
            %vm2919 = vmor %vm2917, %vm2918
            %v2920 = vsel %vm2919, %v2912, %v2916
            %v2921 = vand.u32 2147483647, %v2842
            %vm2922 = vcmp.eq.f32.partialorder %v2921, 8.507059e+37
            %v2923 = vand.u32 %v2842, 2147483648
            %v2924 = vor.u32 1.1754944e-38, %v2923
            %v2925 = vsel %vm2922, %v2924, %v2920
            %v2926 = vmul.f32 1.0, %v2925
            %v2927 = vrcp.pop %v2843
            %v2928 = vmul.f32 %v2843, %v2927
            %v2929 = vsub.f32 1.0, %v2928
            %v2930 = vmul.f32 %v2927, %v2929
            %v2931 = vadd.f32 %v2927, %v2930
            %vm2932 = vweird.f32 %v2843
            %vm2933 = vweird.f32 %v2927
            %vm2934 = vmor %vm2932, %vm2933
            %v2935 = vsel %vm2934, %v2927, %v2931
            %v2936 = vand.u32 2147483647, %v2843
            %vm2937 = vcmp.eq.f32.partialorder %v2936, 8.507059e+37
            %v2938 = vand.u32 %v2843, 2147483648
            %v2939 = vor.u32 1.1754944e-38, %v2938
            %v2940 = vsel %vm2937, %v2939, %v2935
            %v2941 = vmul.f32 1.0, %v2940
            %v2942 = vrcp.pop %v2844
            %v2943 = vmul.f32 %v2844, %v2942
            %v2944 = vsub.f32 1.0, %v2943
            %v2945 = vmul.f32 %v2942, %v2944
            %v2946 = vadd.f32 %v2942, %v2945
            %vm2947 = vweird.f32 %v2844
            %vm2948 = vweird.f32 %v2942
            %vm2949 = vmor %vm2947, %vm2948
            %v2950 = vsel %vm2949, %v2942, %v2946
            %v2951 = vand.u32 2147483647, %v2844
            %vm2952 = vcmp.eq.f32.partialorder %v2951, 8.507059e+37
            %v2953 = vand.u32 %v2844, 2147483648
            %v2954 = vor.u32 1.1754944e-38, %v2953
            %v2955 = vsel %vm2952, %v2954, %v2950
            %v2956 = vmul.f32 1.0, %v2955
            %v2957 = vrcp.pop %v2845
            %v2958 = vmul.f32 %v2845, %v2957
            %v2959 = vsub.f32 1.0, %v2958
            %v2960 = vmul.f32 %v2957, %v2959
            %v2961 = vadd.f32 %v2957, %v2960
            %vm2962 = vweird.f32 %v2845
            %vm2963 = vweird.f32 %v2957
            %vm2964 = vmor %vm2962, %vm2963
            %v2965 = vsel %vm2964, %v2957, %v2961
            %v2966 = vand.u32 2147483647, %v2845
            %vm2967 = vcmp.eq.f32.partialorder %v2966, 8.507059e+37
            %v2968 = vand.u32 %v2845, 2147483648
            %v2969 = vor.u32 1.1754944e-38, %v2968
            %v2970 = vsel %vm2967, %v2969, %v2965
            %v2971 = vmul.f32 1.0, %v2970
            %v2972 = vrcp.pop %v2846
            %v2973 = vmul.f32 %v2846, %v2972
            %v2974 = vsub.f32 1.0, %v2973
            %v2975 = vmul.f32 %v2972, %v2974
            %v2976 = vadd.f32 %v2972, %v2975
            %vm2977 = vweird.f32 %v2846
            %vm2978 = vweird.f32 %v2972
            %vm2979 = vmor %vm2977, %vm2978
            %v2980 = vsel %vm2979, %v2972, %v2976
            %v2981 = vand.u32 2147483647, %v2846
            %vm2982 = vcmp.eq.f32.partialorder %v2981, 8.507059e+37
            %v2983 = vand.u32 %v2846, 2147483648
            %v2984 = vor.u32 1.1754944e-38, %v2983
            %v2985 = vsel %vm2982, %v2984, %v2980
            %v2986 = vmul.f32 1.0, %v2985
            %v2987 = vrcp.pop %v2847
            %v2988 = vmul.f32 %v2847, %v2987
            %v2989 = vsub.f32 1.0, %v2988
            %v2990 = vmul.f32 %v2987, %v2989
            %v2991 = vadd.f32 %v2987, %v2990
            %vm2992 = vweird.f32 %v2847
            %vm2993 = vweird.f32 %v2987
            %vm2994 = vmor %vm2992, %vm2993
            %v2995 = vsel %vm2994, %v2987, %v2991
            %v2996 = vand.u32 2147483647, %v2847
            %vm2997 = vcmp.eq.f32.partialorder %v2996, 8.507059e+37
            %v2998 = vand.u32 %v2847, 2147483648
            %v2999 = vor.u32 1.1754944e-38, %v2998
            %v3000 = vsel %vm2997, %v2999, %v2995
            %v3001 = vmul.f32 1.0, %v3000
            %v3002 = vrcp.pop %v2848
            %v3003 = vmul.f32 %v2848, %v3002
            %v3004 = vsub.f32 1.0, %v3003
            %v3005 = vmul.f32 %v3002, %v3004
            %v3006 = vadd.f32 %v3002, %v3005
            %vm3007 = vweird.f32 %v2848
            %vm3008 = vweird.f32 %v3002
            %vm3009 = vmor %vm3007, %vm3008
            %v3010 = vsel %vm3009, %v3002, %v3006
            %v3011 = vand.u32 2147483647, %v2848
            %vm3012 = vcmp.eq.f32.partialorder %v3011, 8.507059e+37
            %v3013 = vand.u32 %v2848, 2147483648
            %v3014 = vor.u32 1.1754944e-38, %v3013
            %v3015 = vsel %vm3012, %v3014, %v3010
            %v3016 = vmul.f32 1.0, %v3015
            %v3017 = vrcp.pop %v2849
            %v3018 = vmul.f32 %v2849, %v3017
            %v3019 = vsub.f32 1.0, %v3018
            %v3020 = vmul.f32 %v3017, %v3019
            %v3021 = vadd.f32 %v3017, %v3020
            %vm3022 = vweird.f32 %v2849
            %vm3023 = vweird.f32 %v3017
            %vm3024 = vmor %vm3022, %vm3023
            %v3025 = vsel %vm3024, %v3017, %v3021
            %v3026 = vand.u32 2147483647, %v2849
            %vm3027 = vcmp.eq.f32.partialorder %v3026, 8.507059e+37
            %v3028 = vand.u32 %v2849, 2147483648
            %v3029 = vor.u32 1.1754944e-38, %v3028
            %v3030 = vsel %vm3027, %v3029, %v3025
            %v3031 = vmul.f32 1.0, %v3030
            %v3032 = vrcp.pop %v2850
            %v3033 = vmul.f32 %v2850, %v3032
            %v3034 = vsub.f32 1.0, %v3033
            %v3035 = vmul.f32 %v3032, %v3034
            %v3036 = vadd.f32 %v3032, %v3035
            %vm3037 = vweird.f32 %v2850
            %vm3038 = vweird.f32 %v3032
            %vm3039 = vmor %vm3037, %vm3038
            %v3040 = vsel %vm3039, %v3032, %v3036
            %v3041 = vand.u32 2147483647, %v2850
            %vm3042 = vcmp.eq.f32.partialorder %v3041, 8.507059e+37
            %v3043 = vand.u32 %v2850, 2147483648
            %v3044 = vor.u32 1.1754944e-38, %v3043
            %v3045 = vsel %vm3042, %v3044, %v3040
            %v3046 = vmul.f32 1.0, %v3045
            %v3047 = vrcp.pop %v2851
            %v3048 = vmul.f32 %v2851, %v3047
            %v3049 = vsub.f32 1.0, %v3048
            %v3050 = vmul.f32 %v3047, %v3049
            %v3051 = vadd.f32 %v3047, %v3050
            %vm3052 = vweird.f32 %v2851
            %vm3053 = vweird.f32 %v3047
            %vm3054 = vmor %vm3052, %vm3053
            %v3055 = vsel %vm3054, %v3047, %v3051
            %v3056 = vand.u32 2147483647, %v2851
            %vm3057 = vcmp.eq.f32.partialorder %v3056, 8.507059e+37
            %v3058 = vand.u32 %v2851, 2147483648
            %v3059 = vor.u32 1.1754944e-38, %v3058
            %v3060 = vsel %vm3057, %v3059, %v3055
            %v3061 = vmul.f32 1.0, %v3060
            %v3062 = vmul.f32 %v2866, %v2557
            %v3063 = vmul.f32 %v2881, %v2558
            %v3064 = vmul.f32 %v2896, %v2559
            %v3065 = vmul.f32 %v2911, %v2560
            %v3066 = vmul.f32 %v2926, %v2561
            %v3067 = vmul.f32 %v2941, %v2562
            %v3068 = vmul.f32 %v2956, %v2563
            %v3069 = vmul.f32 %v2971, %v2564
            %v3070 = vmul.f32 %v2986, %v2565
            %v3071 = vmul.f32 %v3001, %v2566
            %v3072 = vmul.f32 %v3016, %v2567
            %v3073 = vmul.f32 %v3031, %v2568
            %v3074 = vmul.f32 %v3046, %v2569
            %v3075 = vmul.f32 %v3061, %v2570
            %3104 = vrot.lane.b32.xlu0 %v3062, 64
            %v3105 = vpop.permute.xlu0 %3104
            %3106 = vrot.lane.b32.xlu0 %v3063, 64
            %v3107 = vpop.permute.xlu0 %3106
            %3108 = vrot.lane.b32.xlu0 %v3064, 64
            %v3109 = vpop.permute.xlu0 %3108
            %3110 = vrot.lane.b32.xlu0 %v3065, 64
            %v3111 = vpop.permute.xlu0 %3110
            %3112 = vrot.lane.b32.xlu0 %v3066, 64
            %v3113 = vpop.permute.xlu0 %3112
            %3114 = vrot.lane.b32.xlu0 %v3067, 64
            %v3115 = vpop.permute.xlu0 %3114
            %3116 = vrot.lane.b32.xlu0 %v3068, 64
            %v3117 = vpop.permute.xlu0 %3116
            %3118 = vrot.lane.b32.xlu0 %v3069, 64
            %v3119 = vpop.permute.xlu0 %3118
            %3120 = vrot.lane.b32.xlu0 %v3070, 64
            %v3121 = vpop.permute.xlu0 %3120
            %3122 = vrot.lane.b32.xlu0 %v3071, 64
            %v3123 = vpop.permute.xlu0 %3122
            %3124 = vrot.lane.b32.xlu0 %v3072, 64
            %v3125 = vpop.permute.xlu0 %3124
            %3126 = vrot.lane.b32.xlu0 %v3073, 64
            %v3127 = vpop.permute.xlu0 %3126
            %3128 = vrot.lane.b32.xlu0 %v3074, 64
            %v3129 = vpop.permute.xlu0 %3128
            %3130 = vrot.lane.b32.xlu0 %v3075, 64
            %v3131 = vpop.permute.xlu0 %3130
            %v3146 = vsel %vm2046, %v2682, %v3105
            %v3147 = vsel %vm2046, %v2684, %v3107
            %v3148 = vsel %vm2046, %v2686, %v3109
            %v3149 = vsel %vm2046, %v2688, %v3111
            %v3150 = vsel %vm2046, %v2690, %v3113
            %v3151 = vsel %vm2046, %v2692, %v3115
            %v3152 = vsel %vm2046, %v2694, %v3117
            %v3153 = vsel %vm2046, %v2696, %v3119
            %v3154 = vsel %vm2046, %v2698, %v3121
            %v3155 = vsel %vm2046, %v2700, %v3123
            %v3156 = vsel %vm2046, %v2702, %v3125
            %v3157 = vsel %vm2046, %v2704, %v3127
            %v3158 = vsel %vm2046, %v2706, %v3129
            %v3159 = vsel %vm2046, %v2708, %v3131
            %v3160 = vpack.c.bf16 %v3146, %v3146
            %v3161 = vpack.c.bf16 %v3147, %v3147
            %v3162 = vpack.c.bf16 %v3148, %v3148
            %v3163 = vpack.c.bf16 %v3149, %v3149
            %v3164 = vpack.c.bf16 %v3150, %v3150
            %v3165 = vpack.c.bf16 %v3151, %v3151
            %v3166 = vpack.c.bf16 %v3152, %v3152
            %v3167 = vpack.c.bf16 %v3153, %v3153
            %v3168 = vpack.c.bf16 %v3154, %v3154
            %v3169 = vpack.c.bf16 %v3155, %v3155
            %v3170 = vpack.c.bf16 %v3156, %v3156
            %v3171 = vpack.c.bf16 %v3157, %v3157
            %v3172 = vpack.c.bf16 %v3158, %v3158
            %v3173 = vpack.c.bf16 %v3159, %v3159
            %s3174 = sshra.s32 %s386, 3
            %s3175 = sand.u32 %s386, 7
            %s3176 = smul.addr %s3174, 4
            %s3177 = scalar_lea.vmem [#allocation2], %s3176
            %3178 = vst [vmem:[%s3177] sm:$0xf] %v3160
            %3179 = vst [vmem:[%s3177 + $0x4] sm:$0xf] %v3161
            %3180 = vst [vmem:[%s3177 + $0x8] sm:$0xf] %v3162
            %3181 = vst [vmem:[%s3177 + $0xc] sm:$0xf] %v3163
            %3182 = vst [vmem:[%s3177 + $0x10] sm:$0xf] %v3164
            %3183 = vst [vmem:[%s3177 + $0x14] sm:$0xf] %v3165
            %3184 = vst [vmem:[%s3177 + $0x18] sm:$0xf] %v3166
            %3185 = vst [vmem:[%s3177 + $0x1c] sm:$0xf] %v3167
            %3186 = vst [vmem:[%s3177 + $0x20] sm:$0xf] %v3168
            %3187 = vst [vmem:[%s3177 + $0x24] sm:$0xf] %v3169
            %3188 = vst [vmem:[%s3177 + $0x28] sm:$0xf] %v3170
            %3189 = vst [vmem:[%s3177 + $0x2c] sm:$0xf] %v3171
            %3190 = vst [vmem:[%s3177 + $0x30] sm:$0xf] %v3172
            %3191 = vst [vmem:[%s3177 + $0x34] sm:$0xf] %v3173
            %s3192 = scalar_lea.vmem %s9, %s386
            %3193 = vst.msk [vmem:[%s3192] sm:$0xff] %vm2046, %v2682
            %3194 = vst.msk [vmem:[%s3192 + $0x8] sm:$0xff] %vm2046, %v2684
            %3195 = vst.msk [vmem:[%s3192 + $0x10] sm:$0xff] %vm2046, %v2686
            %3196 = vst.msk [vmem:[%s3192 + $0x18] sm:$0xff] %vm2046, %v2688
            %3197 = vst.msk [vmem:[%s3192 + $0x20] sm:$0xff] %vm2046, %v2690
            %3198 = vst.msk [vmem:[%s3192 + $0x28] sm:$0xff] %vm2046, %v2692
            %3199 = vst.msk [vmem:[%s3192 + $0x30] sm:$0xff] %vm2046, %v2694
            %3200 = vst.msk [vmem:[%s3192 + $0x38] sm:$0xff] %vm2046, %v2696
            %3201 = vst.msk [vmem:[%s3192 + $0x40] sm:$0xff] %vm2046, %v2698
            %3202 = vst.msk [vmem:[%s3192 + $0x48] sm:$0xff] %vm2046, %v2700
            %3203 = vst.msk [vmem:[%s3192 + $0x50] sm:$0xff] %vm2046, %v2702
            %3204 = vst.msk [vmem:[%s3192 + $0x58] sm:$0xff] %vm2046, %v2704
            %3205 = vst.msk [vmem:[%s3192 + $0x60] sm:$0xff] %vm2046, %v2706
            %3206 = vst.msk [vmem:[%s3192 + $0x68] sm:$0xff] %vm2046, %v2708
            %s3207 = scalar_lea.vmem %s10, %s386
            %3208 = vst.msk [vmem:[%s3207] sm:$0xff] %vm2046, %v2557
            %3209 = vst.msk [vmem:[%s3207 + $0x8] sm:$0xff] %vm2046, %v2558
            %3210 = vst.msk [vmem:[%s3207 + $0x10] sm:$0xff] %vm2046, %v2559
            %3211 = vst.msk [vmem:[%s3207 + $0x18] sm:$0xff] %vm2046, %v2560
            %3212 = vst.msk [vmem:[%s3207 + $0x20] sm:$0xff] %vm2046, %v2561
            %3213 = vst.msk [vmem:[%s3207 + $0x28] sm:$0xff] %vm2046, %v2562
            %3214 = vst.msk [vmem:[%s3207 + $0x30] sm:$0xff] %vm2046, %v2563
            %3215 = vst.msk [vmem:[%s3207 + $0x38] sm:$0xff] %vm2046, %v2564
            %3216 = vst.msk [vmem:[%s3207 + $0x40] sm:$0xff] %vm2046, %v2565
            %3217 = vst.msk [vmem:[%s3207 + $0x48] sm:$0xff] %vm2046, %v2566
            %3218 = vst.msk [vmem:[%s3207 + $0x50] sm:$0xff] %vm2046, %v2567
            %3219 = vst.msk [vmem:[%s3207 + $0x58] sm:$0xff] %vm2046, %v2568
            %3220 = vst.msk [vmem:[%s3207 + $0x60] sm:$0xff] %vm2046, %v2569
            %3221 = vst.msk [vmem:[%s3207 + $0x68] sm:$0xff] %vm2046, %v2570
          $region76: #{tpu_custom_call.1} parent=63 // pred_fallthru
            _
        $region64: #{tpu_custom_call.1} parent=51 // pred_fallthru
          _
        // Predicated region
        $region77: #{tpu_custom_call.1} parent=51 // pred_check
          %p3222 = pneg %p243
        $region78: #{tpu_custom_call.1} parent=51 // pred_check_branch
          %3224 = sbr.rel (%p3222) target = $region80
        $region79: #{tpu_custom_call.1} parent=51 // pred_region
          _
        $region80: #{tpu_custom_call.1} parent=51 // pred_fallthru
          _
        // Predicated region
        $region81: #{tpu_custom_call.1} parent=51 // pred_check
          %p3225 = pneg %p264
        $region82: #{tpu_custom_call.1} parent=51 // pred_check_branch
          %3227 = sbr.rel (%p3225) target = $region84
        $region83: #{tpu_custom_call.1} parent=51 // pred_region
          _
        $region84: #{tpu_custom_call.1} parent=51 // pred_fallthru
          _
        // Predicated region
        $region85: #{tpu_custom_call.1} parent=51 // pred_check
          %p3228 = pneg %p243
        $region86: #{tpu_custom_call.1} parent=51 // pred_check_branch
          %3230 = sbr.rel (%p3228) target = $region88
        $region87: #{tpu_custom_call.1} parent=51 // pred_region
          _
        $region88: #{tpu_custom_call.1} parent=51 // pred_fallthru
          _
        // Predicated region
        $region89: #{tpu_custom_call.1} parent=51 // pred_check
          %p3231 = pneg %p264
        $region90: #{tpu_custom_call.1} parent=51 // pred_check_branch
          %3233 = sbr.rel (%p3231) target = $region92
        $region91: #{tpu_custom_call.1} parent=51 // pred_region
          _
        $region92: #{tpu_custom_call.1} parent=51 // pred_fallthru
          _
      $region52: #{tpu_custom_call.1} parent=5 // pred_fallthru
        _
      %p3234 = scmp.le.s32.totalorder 2, %s28
      // Predicated region
      $region93: #{tpu_custom_call.1} parent=5 // pred_check
        %p3235 = pneg %p3234
      $region94: #{tpu_custom_call.1} parent=5 // pred_check_branch
        %3237 = sbr.rel (%p3235) target = $region96
      $region95: #{tpu_custom_call.1} parent=5 // pred_region
        %s3238 = ssub.s32 %s28, 2
      $region96: #{tpu_custom_call.1} parent=5 // pred_fallthru
        _
    $region6: #{tpu_custom_call.1} parent=1 // loop_footer
      %s32 = sadd.s32 1, %s28
    $region7: #{tpu_custom_call.1} parent=1 // loop_footer_branch
      %27 = sbr.rel target = $region3
    $region8: #{tpu_custom_call.1} parent=1 // loop_exit
      _
    %3239 = vsyncpa [#allocation7], 1
    %s3240 = scalar_lea.sflag [#allocation7], 1
    %3241 = vsyncpa %s3240, 1

</llo_original>
